<compile_context>
chip_gen: v7x
topology: tpu7x:2x2x1
jax: 0.10.0
libtpu: 0.0.40
codegen_flags: <defaults>
</compile_context>

<pallas_src>
import jax
import jax.numpy as jnp
from jax import lax
from jax.experimental import pallas as pl
from jax.experimental.pallas import tpu as pltpu


# ------------------------------ helpers ---------------------------------------
def _const_spec(shape):
    """Full-array block, resident for the single grid step."""
    zeros = (0,) * len(shape)
    return pl.BlockSpec(shape, lambda i, _z=zeros: _z)


_UNROLL_T_MAX = 16  # static Python unroll for small T, fori_loop beyond


# --------------------------- fused Pallas kernel -------------------------------
def make_fused_kernel(T, Bp, E, H, L, unrolled):
    def kernel(*refs):
        emb_ref, h0_ref, c0_ref, mask_ref = refs[0:4]
        wih0_ref, whh0_ref = refs[4], refs[5]
        wcat_refs = refs[6:6 + (L - 1)]            # fused [w_ih; w_hh], layers >= 1
        bias_refs = refs[6 + (L - 1):5 + 2 * L]    # (1, 4H) per layer
        sw_ref = refs[5 + 2 * L]                   # (H, Vpad) concat scoring weights
        sb_ref = refs[6 + 2 * L]                   # (1, Vpad) concat scoring biases
        logits_ref = refs[7 + 2 * L]               # output (T*Bp, Vpad), lane-dense
        g0_scr = refs[8 + 2 * L] if not unrolled else None

        # --- hoisted constant loads (outside the time recurrence) -------------
        w_hh0 = whh0_ref[...]                                  # (H, 4H)
        w_cat = [wcat_refs[l][...] for l in range(L - 1)]      # (2H, 4H) each
        b = [bias_refs[l][...] for l in range(L)]              # (1, 4H) each
        sw = sw_ref[...]                                       # (H, Vpad)
        sb = sb_ref[...]                                       # (1, Vpad)

        # --- hoisted layer-0 input projection: one big MXU matmul -------------
        g0_all = (jnp.dot(emb_ref[...], wih0_ref[...],
                          preferred_element_type=jnp.float32) + b[0])  # (T*Bp, 4H)

        h = [h0_ref[l] for l in range(L)]
        c = [c0_ref[l] for l in range(L)]

        def lstm_cell(gates, c_prev):
            # PyTorch gate order i, f, g, o. Activations are evaluated on the
            # full (Bp, 4H=128) vreg (lane-dense EUP), then sliced.
            sig = jax.nn.sigmoid(gates)
            th = jnp.tanh(gates)
            i_g = sig[:, 0:H]
            f_g = sig[:, H:2 * H]
            o_g = sig[:, 3 * H:4 * H]
            g_g = th[:, 2 * H:3 * H]
            c_new = f_g * c_prev + i_g * g_g
            h_new = o_g * jnp.tanh(c_new)
            return h_new, c_new

        def step(g0_t, mask_t, h_in, c_in):
            gates0 = g0_t + jnp.dot(h_in[0], w_hh0,
                                    preferred_element_type=jnp.float32)
            h0n, c0n = lstm_cell(gates0, c_in[0])
            h_out, c_out = [h0n], [c0n]
            x = h0n
            for l in range(1, L):
                xh = jnp.concatenate([x, h_in[l]], axis=1)     # (Bp, 2H)
                gates = (jnp.dot(xh, w_cat[l - 1],
                                 preferred_element_type=jnp.float32) + b[l])
                hn, cn = lstm_cell(gates, c_in[l])
                h_out.append(hn)
                c_out.append(cn)
                x = hn
            # pad_packed zeroes hidden past each length; Linear then adds its
            # bias, so masked rows reduce to the bias — reproduced exactly.
            logits_t = (jnp.dot(x * mask_t, sw,
                                preferred_element_type=jnp.float32) + sb)
            return h_out, c_out, logits_t

        if unrolled:
            # Small T: fully unrolled, all slices/stores static & sublane-aligned.
            mask_all = mask_ref[...]
            for t in range(T):
                sl = slice(t * Bp, (t + 1) * Bp)
                h, c, logits_t = step(g0_all[sl, :], mask_all[sl, :], h, c)
                logits_ref[sl, :] = logits_t
        else:
            # Large T: bounded vreg live ranges via fori_loop, dynamic pl.ds
            # indexing into a VMEM copy of the hoisted layer-0 gates.
            g0_scr[...] = g0_all

            def body(t, carry):
                h_in, c_in = list(carry[0]), list(carry[1])
                base = pl.multiple_of(t * Bp, Bp)
                g0_t = g0_scr[pl.ds(base, Bp), :]
                mask_t = mask_ref[pl.ds(base, Bp), :]
                h_out, c_out, logits_t = step(g0_t, mask_t, h_in, c_in)
                logits_ref[pl.ds(base, Bp), :] = logits_t
                return (tuple(h_out), tuple(c_out))

            lax.fori_loop(0, T, body, (tuple(h), tuple(c)), unroll=2)

    return kernel


def fused_lstm_score_pallas(emb_flat, h0, c0, mask_flat,
                            w_ih0, w_hh0, w_cat_list, b_list, score_w, score_b):
    """Run the fused LSTM + scoring kernel.

    emb_flat : (T*Bp, E) f32      h0, c0 : (L, Bp, H) f32
    mask_flat: (T*Bp, 1) f32      score_w: (H, Vpad), score_b: (1, Vpad)
    w_ih0    : (E, 4H)            w_hh0  : (H, 4H)
    w_cat_list[l]: (2H, 4H) fused [w_ih; w_hh] for layers 1..L-1
    returns  : logits (T*Bp, Vpad) f32
    """
    TB, E = emb_flat.shape
    L, Bp, H = h0.shape
    T = TB // Bp
    Vpad = score_w.shape[1]
    unrolled = T <= _UNROLL_T_MAX

    inputs = [emb_flat, h0, c0, mask_flat,
              w_ih0, w_hh0, *w_cat_list, *b_list, score_w, score_b]
    in_specs = [_const_spec(x.shape) for x in inputs]
    scratch = [] if unrolled else [pltpu.VMEM((TB, 4 * H), jnp.float32)]

    return pl.pallas_call(
        make_fused_kernel(T, Bp, E, H, L, unrolled),
        out_shape=jax.ShapeDtypeStruct((TB, Vpad), jnp.float32),
        grid=(1,),
        in_specs=in_specs,
        out_specs=_const_spec((TB, Vpad)),
        scratch_shapes=scratch,
        compiler_params=pltpu.CompilerParams(
            dimension_semantics=("arbitrary",)),  # sequential recurrence inside
    )(*inputs)


# ------------------------------- model wrapper ---------------------------------
@jax.jit
def baseline_forward(tuples, lengths, params):
    """Equivalent of Baseline.forward((tuples, lengths)) -> (logits,)."""
    T, B, tuple_size = tuples.shape
    L, _, H = params["init_c"].shape
    Bp = max(8, ((B + 7) // 8) * 8)        # pad batch to full sublane group

    # Embedding lookups (gather) kept in plain JAX glue.
    emb = jnp.concatenate(
        [jnp.take(params["emb_tables"][i], tuples[:, :, i], axis=0)
         for i in range(tuple_size)], axis=2).astype(jnp.float32)   # (T, B, E)
    E = emb.shape[2]

    emb_p = jnp.pad(emb, ((0, 0), (0, Bp - B), (0, 0)))
    emb_flat = emb_p.reshape(T * Bp, E)

    # Module passes (init_c, init_u) as (h0, c0) to nn.LSTM.
    h0 = jnp.broadcast_to(params["init_c"], (L, Bp, H)).astype(jnp.float32)
    c0 = jnp.broadcast_to(params["init_u"], (L, Bp, H)).astype(jnp.float32)

    # pack/pad_packed semantics: hidden outputs past each length are zeroed
    # (final hidden state is discarded by forward()). Padded batch rows get 0.
    lengths_p = jnp.pad(lengths, (0, Bp - B))
    mask = (jnp.arange(T)[:, None] < lengths_p[None, :]).astype(jnp.float32)
    mask_flat = mask.reshape(T * Bp, 1)

    # Fused [w_ih; w_hh] weights for layers >= 1 (single per-cell matmul).
    w_cat_list = [jnp.concatenate([params["w_ih"][l], params["w_hh"][l]], axis=0)
                  for l in range(1, L)]

    # Fuse the three scoring heads: concat along V and pad lanes to 128.
    head_sizes = [w.shape[1] for w in params["score_w"]]
    Vtot = sum(head_sizes)
    Vpad = max(128, ((Vtot + 127) // 128) * 128)
    sw = jnp.pad(jnp.concatenate(params["score_w"], axis=1),
                 ((0, 0), (0, Vpad - Vtot)))
    sb = jnp.pad(jnp.concatenate(params["score_b"], axis=1),
                 ((0, 0), (0, Vpad - Vtot)))

    logits_full = fused_lstm_score_pallas(
        emb_flat, h0, c0, mask_flat,
        params["w_ih"][0], params["w_hh"][0], w_cat_list, params["b"], sw, sb)

    logits_full = logits_full.reshape(T, Bp, Vpad)[:, :B, :]
    logits, off = [], 0
    for v in head_sizes:
        logits.append(logits_full[:, :, off:off + v])
        off += v
    return (logits,)


# ----------------------------- pure-JAX reference ------------------------------
def lstm_ref(emb, h0, c0, w_ih, w_hh, b):
    T = emb.shape[0]
    L, _, H = h0.shape
    h = [h0[l] for l in range(L)]
    c = [c0[l] for l in range(L)]
    outs = []
    for t in range(T):
        x = emb[t]
        for l in range(L):
            gates = x @ w_ih[l] + h[l] @ w_hh[l] + b[l]
            i = jax.nn.sigmoid(gates[:, :H])
            f = jax.nn.sigmoid(gates[:, H:2 * H])
            g = jnp.tanh(gates[:, 2 * H:3 * H])
            o = jax.nn.sigmoid(gates[:, 3 * H:])
            c[l] = f * c[l] + i * g
            h[l] = o * jnp.tanh(c[l])
            x = h[l]
        outs.append(x)
    return jnp.stack(outs)


# ------------------------------------ main --------------------------------------
if __name__ == "__main__":
    # Small configuration consistent with the module.
    tuple_size = 3
    vocab_sizes = [10, 12, 14]                 # tables have vocab+1 rows (EOS)
    embedding_sizes = [32, 32, 64]             # E = 128
    n_layers = 3
    hidden_size = 32                           # 4H = 128
    T, B = 8, 4
    E = sum(embedding_sizes)
    H = hidden_size
    L = n_layers

    key = jax.random.PRNGKey(0)
    ks = iter(jax.random.split(key, 64))

    params = {}
    params["emb_tables"] = [
        0.1 * jax.random.normal(next(ks), (v + 1, s), jnp.float32)
        for v, s in zip(vocab_sizes, embedding_sizes)]
    params["init_c"] = jax.random.normal(next(ks), (L, 1, H), jnp.float32)
    params["init_u"] = jax.random.normal(next(ks), (L, 1, H), jnp.float32)

    # LSTM weights, stored transposed (in_dim, 4H); bias = b_ih + b_hh -> (1, 4H).
    w_ih, w_hh, bias = [], [], []
    for l in range(L):
        in_dim = E if l == 0 else H
        k_scale = 1.0 / jnp.sqrt(H)
        w_ih.append(k_scale * jax.random.normal(next(ks), (in_dim, 4 * H), jnp.float32))
        w_hh.append(k_scale * jax.random.normal(next(ks), (H, 4 * H), jnp.float32))
        bias.append(k_scale * jax.random.normal(next(ks), (1, 4 * H), jnp.float32))
    params["w_ih"], params["w_hh"], params["b"] = w_ih, w_hh, bias

    # Scoring layers: Linear(H, v+1), stored transposed (H, v+1), bias (1, v+1).
    params["score_w"] = [
        (1.0 / jnp.sqrt(H)) * jax.random.normal(next(ks), (H, v + 1), jnp.float32)
        for v in vocab_sizes]
    params["score_b"] = [
        (1.0 / jnp.sqrt(H)) * jax.random.normal(next(ks), (1, v + 1), jnp.float32)
        for v in vocab_sizes]

    # Inputs: (T, B, tuple_size) int tokens, descending lengths with max == T.
    tuples = jnp.stack(
        [jax.random.randint(next(ks), (T, B), 0, v + 1) for v in vocab_sizes],
        axis=2).astype(jnp.int32)
    lengths = jnp.array([8, 6, 5, 3], dtype=jnp.int32)

    (logits,) = baseline_forward(tuples, lengths, params)
    logits = [jax.block_until_ready(lg) for lg in logits]

    # Correctness check against a pure-JAX reference of the full forward pass.
    emb_ref_x = jnp.concatenate(
        [jnp.take(params["emb_tables"][i], tuples[:, :, i], axis=0)
         for i in range(tuple_size)], axis=2)
    h0_ref_v = jnp.broadcast_to(params["init_c"], (L, B, H))
    c0_ref_v = jnp.broadcast_to(params["init_u"], (L, B, H))
    h_gold = lstm_ref(emb_ref_x, h0_ref_v, c0_ref_v, w_ih, w_hh, bias)
    mask_ref_v = (jnp.arange(T)[:, None] < lengths[None, :]).astype(jnp.float32)
    flat_gold = (h_gold * mask_ref_v[:, :, None]).reshape(T * B, H)
    for i, v in enumerate(vocab_sizes):
        ref_logits = (flat_gold @ params["score_w"][i]
                      + params["score_b"][i]).reshape(T, B, v + 1)
        assert jnp.allclose(logits[i], ref_logits, atol=1e-3, rtol=1e-3), \
            f"logits head {i} mismatch"

    expected_shapes = [(T, B, v + 1) for v in vocab_sizes]
    assert [tuple(lg.shape) for lg in logits] == expected_shapes

    print("KERNEL_OK")
</pallas_src>

<mosaic_0001>
module attributes {stable_mosaic.version = 11 : i64} {
  func.func @kernel(%arg0: i32, %arg1: memref<64x128xf32, #tpu.memory_space<vmem>>, %arg2: memref<3x8x32xf32, #tpu.memory_space<vmem>>, %arg3: memref<3x8x32xf32, #tpu.memory_space<vmem>>, %arg4: memref<64x1xf32, #tpu.memory_space<vmem>>, %arg5: memref<128x128xf32, #tpu.memory_space<vmem>>, %arg6: memref<32x128xf32, #tpu.memory_space<vmem>>, %arg7: memref<64x128xf32, #tpu.memory_space<vmem>>, %arg8: memref<64x128xf32, #tpu.memory_space<vmem>>, %arg9: memref<1x128xf32, #tpu.memory_space<vmem>>, %arg10: memref<1x128xf32, #tpu.memory_space<vmem>>, %arg11: memref<1x128xf32, #tpu.memory_space<vmem>>, %arg12: memref<32x128xf32, #tpu.memory_space<vmem>>, %arg13: memref<1x128xf32, #tpu.memory_space<vmem>>, %arg14: memref<64x128xf32, #tpu.memory_space<vmem>>) attributes {dimension_semantics = [#tpu.dimension_semantics<arbitrary>], iteration_bounds = array<i64: 1>, scalar_prefetch = 0 : i64, scratch_operands = 0 : i64, tpu.core_type = #tpu.core_type<tc>, window_params = [{pipeline_mode = #tpu.pipeline_mode<synchronous>, transform_indices = @transform_0, window_bounds = array<i64: 64, 128>}, {pipeline_mode = #tpu.pipeline_mode<synchronous>, transform_indices = @transform_1, window_bounds = array<i64: 3, 8, 32>}, {pipeline_mode = #tpu.pipeline_mode<synchronous>, transform_indices = @transform_2, window_bounds = array<i64: 3, 8, 32>}, {pipeline_mode = #tpu.pipeline_mode<synchronous>, transform_indices = @transform_3, window_bounds = array<i64: 64, 1>}, {pipeline_mode = #tpu.pipeline_mode<synchronous>, transform_indices = @transform_4, window_bounds = array<i64: 128, 128>}, {pipeline_mode = #tpu.pipeline_mode<synchronous>, transform_indices = @transform_5, window_bounds = array<i64: 32, 128>}, {pipeline_mode = #tpu.pipeline_mode<synchronous>, transform_indices = @transform_6, window_bounds = array<i64: 64, 128>}, {pipeline_mode = #tpu.pipeline_mode<synchronous>, transform_indices = @transform_7, window_bounds = array<i64: 64, 128>}, {pipeline_mode = #tpu.pipeline_mode<synchronous>, transform_indices = @transform_8, window_bounds = array<i64: 1, 128>}, {pipeline_mode = #tpu.pipeline_mode<synchronous>, transform_indices = @transform_9, window_bounds = array<i64: 1, 128>}, {pipeline_mode = #tpu.pipeline_mode<synchronous>, transform_indices = @transform_10, window_bounds = array<i64: 1, 128>}, {pipeline_mode = #tpu.pipeline_mode<synchronous>, transform_indices = @transform_11, window_bounds = array<i64: 32, 128>}, {pipeline_mode = #tpu.pipeline_mode<synchronous>, transform_indices = @transform_12, window_bounds = array<i64: 1, 128>}, {pipeline_mode = #tpu.pipeline_mode<synchronous>, transform_indices = @transform_13, window_bounds = array<i64: 64, 128>}]} {
    %c0 = arith.constant 0 : index
    %c0_0 = arith.constant 0 : index
    %0 = vector.load %arg6[%c0, %c0_0] : memref<32x128xf32, #tpu.memory_space<vmem>>, vector<32x128xf32>
    %c0_1 = arith.constant 0 : index
    %c0_2 = arith.constant 0 : index
    %1 = vector.load %arg7[%c0_1, %c0_2] : memref<64x128xf32, #tpu.memory_space<vmem>>, vector<64x128xf32>
    %c0_3 = arith.constant 0 : index
    %c0_4 = arith.constant 0 : index
    %2 = vector.load %arg8[%c0_3, %c0_4] : memref<64x128xf32, #tpu.memory_space<vmem>>, vector<64x128xf32>
    %c0_5 = arith.constant 0 : index
    %c0_6 = arith.constant 0 : index
    %3 = vector.load %arg9[%c0_5, %c0_6] : memref<1x128xf32, #tpu.memory_space<vmem>>, vector<1x128xf32>
    %c0_7 = arith.constant 0 : index
    %c0_8 = arith.constant 0 : index
    %4 = vector.load %arg10[%c0_7, %c0_8] : memref<1x128xf32, #tpu.memory_space<vmem>>, vector<1x128xf32>
    %c0_9 = arith.constant 0 : index
    %c0_10 = arith.constant 0 : index
    %5 = vector.load %arg11[%c0_9, %c0_10] : memref<1x128xf32, #tpu.memory_space<vmem>>, vector<1x128xf32>
    %c0_11 = arith.constant 0 : index
    %c0_12 = arith.constant 0 : index
    %6 = vector.load %arg12[%c0_11, %c0_12] : memref<32x128xf32, #tpu.memory_space<vmem>>, vector<32x128xf32>
    %c0_13 = arith.constant 0 : index
    %c0_14 = arith.constant 0 : index
    %7 = vector.load %arg13[%c0_13, %c0_14] : memref<1x128xf32, #tpu.memory_space<vmem>>, vector<1x128xf32>
    %c0_15 = arith.constant 0 : index
    %c0_16 = arith.constant 0 : index
    %8 = vector.load %arg1[%c0_15, %c0_16] : memref<64x128xf32, #tpu.memory_space<vmem>>, vector<64x128xf32>
    %c0_17 = arith.constant 0 : index
    %c0_18 = arith.constant 0 : index
    %9 = vector.load %arg5[%c0_17, %c0_18] : memref<128x128xf32, #tpu.memory_space<vmem>>, vector<128x128xf32>
    %cst = arith.constant dense<0.000000e+00> : vector<64x128xf32>
    %10 = tpu.matmul %8, %9, %cst {dimension_numbers = #tpu.dot_dimension_numbers<[1], [0], [0], [1], [0, 0, 1, 1], [], []>} : vector<64x128xf32>, vector<128x128xf32>, vector<64x128xf32> -> vector<64x128xf32>
    %11 = vector.broadcast %3 : vector<1x128xf32> to vector<64x128xf32>
    %12 = arith.addf %10, %11 : vector<64x128xf32>
    %c0_19 = arith.constant 0 : index
    %c0_20 = arith.constant 0 : index
    %c0_21 = arith.constant 0 : index
    %13 = vector.load %arg2[%c0_19, %c0_20, %c0_21] : memref<3x8x32xf32, #tpu.memory_space<vmem>>, vector<1x8x32xf32>
    %14 = vector.shape_cast %13 : vector<1x8x32xf32> to vector<8x32xf32>
    %c1 = arith.constant 1 : index
    %c0_22 = arith.constant 0 : index
    %c0_23 = arith.constant 0 : index
    %15 = vector.load %arg2[%c1, %c0_22, %c0_23] : memref<3x8x32xf32, #tpu.memory_space<vmem>>, vector<1x8x32xf32>
    %16 = vector.shape_cast %15 : vector<1x8x32xf32> to vector<8x32xf32>
    %c2 = arith.constant 2 : index
    %c0_24 = arith.constant 0 : index
    %c0_25 = arith.constant 0 : index
    %17 = vector.load %arg2[%c2, %c0_24, %c0_25] : memref<3x8x32xf32, #tpu.memory_space<vmem>>, vector<1x8x32xf32>
    %18 = vector.shape_cast %17 : vector<1x8x32xf32> to vector<8x32xf32>
    %c0_26 = arith.constant 0 : index
    %c0_27 = arith.constant 0 : index
    %c0_28 = arith.constant 0 : index
    %19 = vector.load %arg3[%c0_26, %c0_27, %c0_28] : memref<3x8x32xf32, #tpu.memory_space<vmem>>, vector<1x8x32xf32>
    %20 = vector.shape_cast %19 : vector<1x8x32xf32> to vector<8x32xf32>
    %c1_29 = arith.constant 1 : index
    %c0_30 = arith.constant 0 : index
    %c0_31 = arith.constant 0 : index
    %21 = vector.load %arg3[%c1_29, %c0_30, %c0_31] : memref<3x8x32xf32, #tpu.memory_space<vmem>>, vector<1x8x32xf32>
    %22 = vector.shape_cast %21 : vector<1x8x32xf32> to vector<8x32xf32>
    %c2_32 = arith.constant 2 : index
    %c0_33 = arith.constant 0 : index
    %c0_34 = arith.constant 0 : index
    %23 = vector.load %arg3[%c2_32, %c0_33, %c0_34] : memref<3x8x32xf32, #tpu.memory_space<vmem>>, vector<1x8x32xf32>
    %24 = vector.shape_cast %23 : vector<1x8x32xf32> to vector<8x32xf32>
    %c0_35 = arith.constant 0 : index
    %c0_36 = arith.constant 0 : index
    %25 = vector.load %arg4[%c0_35, %c0_36] : memref<64x1xf32, #tpu.memory_space<vmem>>, vector<64x1xf32>
    %26 = vector.extract_strided_slice %12 {offsets = [0, 0], sizes = [8, 128], strides = [1, 1]} : vector<64x128xf32> to vector<8x128xf32>
    %27 = vector.extract_strided_slice %25 {offsets = [0, 0], sizes = [8, 1], strides = [1, 1]} : vector<64x1xf32> to vector<8x1xf32>
    %cst_37 = arith.constant dense<0.000000e+00> : vector<8x128xf32>
    %28 = tpu.matmul %14, %0, %cst_37 {dimension_numbers = #tpu.dot_dimension_numbers<[1], [0], [0], [1], [0, 0, 1, 1], [], []>} : vector<8x32xf32>, vector<32x128xf32>, vector<8x128xf32> -> vector<8x128xf32>
    %29 = arith.addf %26, %28 : vector<8x128xf32>
    %30 = arith.negf %29 : vector<8x128xf32>
    %31 = math.exp %30 : vector<8x128xf32>
    %cst_38 = arith.constant 1.000000e+00 : f32
    %32 = vector.broadcast %cst_38 : f32 to vector<8x128xf32>
    %33 = arith.addf %32, %31 : vector<8x128xf32>
    %34 = arith.divf %32, %33 : vector<8x128xf32>
    %35 = math.tanh %29 : vector<8x128xf32>
    %36 = vector.extract_strided_slice %34 {offsets = [0, 0], sizes = [8, 32], strides = [1, 1]} : vector<8x128xf32> to vector<8x32xf32>
    %37 = vector.extract_strided_slice %34 {offsets = [0, 32], sizes = [8, 32], strides = [1, 1]} : vector<8x128xf32> to vector<8x32xf32>
    %38 = vector.extract_strided_slice %34 {offsets = [0, 96], sizes = [8, 32], strides = [1, 1]} : vector<8x128xf32> to vector<8x32xf32>
    %39 = vector.extract_strided_slice %35 {offsets = [0, 64], sizes = [8, 32], strides = [1, 1]} : vector<8x128xf32> to vector<8x32xf32>
    %40 = arith.mulf %37, %20 : vector<8x32xf32>
    %41 = arith.mulf %36, %39 : vector<8x32xf32>
    %42 = arith.addf %40, %41 : vector<8x32xf32>
    %43 = math.tanh %42 : vector<8x32xf32>
    %44 = arith.mulf %38, %43 : vector<8x32xf32>
    %45 = tpu.concatenate %44, %16 in 1 : vector<8x32xf32>, vector<8x32xf32> -> vector<8x64xf32>
    %cst_39 = arith.constant dense<0.000000e+00> : vector<8x128xf32>
    %46 = tpu.matmul %45, %1, %cst_39 {dimension_numbers = #tpu.dot_dimension_numbers<[1], [0], [0], [1], [0, 0, 1, 1], [], []>} : vector<8x64xf32>, vector<64x128xf32>, vector<8x128xf32> -> vector<8x128xf32>
    %47 = vector.broadcast %4 : vector<1x128xf32> to vector<8x128xf32>
    %48 = arith.addf %46, %47 : vector<8x128xf32>
    %49 = arith.negf %48 : vector<8x128xf32>
    %50 = math.exp %49 : vector<8x128xf32>
    %cst_40 = arith.constant 1.000000e+00 : f32
    %51 = vector.broadcast %cst_40 : f32 to vector<8x128xf32>
    %52 = arith.addf %51, %50 : vector<8x128xf32>
    %53 = arith.divf %51, %52 : vector<8x128xf32>
    %54 = math.tanh %48 : vector<8x128xf32>
    %55 = vector.extract_strided_slice %53 {offsets = [0, 0], sizes = [8, 32], strides = [1, 1]} : vector<8x128xf32> to vector<8x32xf32>
    %56 = vector.extract_strided_slice %53 {offsets = [0, 32], sizes = [8, 32], strides = [1, 1]} : vector<8x128xf32> to vector<8x32xf32>
    %57 = vector.extract_strided_slice %53 {offsets = [0, 96], sizes = [8, 32], strides = [1, 1]} : vector<8x128xf32> to vector<8x32xf32>
    %58 = vector.extract_strided_slice %54 {offsets = [0, 64], sizes = [8, 32], strides = [1, 1]} : vector<8x128xf32> to vector<8x32xf32>
    %59 = arith.mulf %56, %22 : vector<8x32xf32>
    %60 = arith.mulf %55, %58 : vector<8x32xf32>
    %61 = arith.addf %59, %60 : vector<8x32xf32>
    %62 = math.tanh %61 : vector<8x32xf32>
    %63 = arith.mulf %57, %62 : vector<8x32xf32>
    %64 = tpu.concatenate %63, %18 in 1 : vector<8x32xf32>, vector<8x32xf32> -> vector<8x64xf32>
    %cst_41 = arith.constant dense<0.000000e+00> : vector<8x128xf32>
    %65 = tpu.matmul %64, %2, %cst_41 {dimension_numbers = #tpu.dot_dimension_numbers<[1], [0], [0], [1], [0, 0, 1, 1], [], []>} : vector<8x64xf32>, vector<64x128xf32>, vector<8x128xf32> -> vector<8x128xf32>
    %66 = vector.broadcast %5 : vector<1x128xf32> to vector<8x128xf32>
    %67 = arith.addf %65, %66 : vector<8x128xf32>
    %68 = arith.negf %67 : vector<8x128xf32>
    %69 = math.exp %68 : vector<8x128xf32>
    %cst_42 = arith.constant 1.000000e+00 : f32
    %70 = vector.broadcast %cst_42 : f32 to vector<8x128xf32>
    %71 = arith.addf %70, %69 : vector<8x128xf32>
    %72 = arith.divf %70, %71 : vector<8x128xf32>
    %73 = math.tanh %67 : vector<8x128xf32>
    %74 = vector.extract_strided_slice %72 {offsets = [0, 0], sizes = [8, 32], strides = [1, 1]} : vector<8x128xf32> to vector<8x32xf32>
    %75 = vector.extract_strided_slice %72 {offsets = [0, 32], sizes = [8, 32], strides = [1, 1]} : vector<8x128xf32> to vector<8x32xf32>
    %76 = vector.extract_strided_slice %72 {offsets = [0, 96], sizes = [8, 32], strides = [1, 1]} : vector<8x128xf32> to vector<8x32xf32>
    %77 = vector.extract_strided_slice %73 {offsets = [0, 64], sizes = [8, 32], strides = [1, 1]} : vector<8x128xf32> to vector<8x32xf32>
    %78 = arith.mulf %75, %24 : vector<8x32xf32>
    %79 = arith.mulf %74, %77 : vector<8x32xf32>
    %80 = arith.addf %78, %79 : vector<8x32xf32>
    %81 = math.tanh %80 : vector<8x32xf32>
    %82 = arith.mulf %76, %81 : vector<8x32xf32>
    %83 = vector.broadcast %27 : vector<8x1xf32> to vector<8x32xf32>
    %84 = arith.mulf %82, %83 : vector<8x32xf32>
    %cst_43 = arith.constant dense<0.000000e+00> : vector<8x128xf32>
    %85 = tpu.matmul %84, %6, %cst_43 {dimension_numbers = #tpu.dot_dimension_numbers<[1], [0], [0], [1], [0, 0, 1, 1], [], []>} : vector<8x32xf32>, vector<32x128xf32>, vector<8x128xf32> -> vector<8x128xf32>
    %86 = vector.broadcast %7 : vector<1x128xf32> to vector<8x128xf32>
    %87 = arith.addf %85, %86 : vector<8x128xf32>
    %c0_44 = arith.constant 0 : index
    %c0_45 = arith.constant 0 : index
    %88 = vector.load %arg14[%c0_44, %c0_45] : memref<64x128xf32, #tpu.memory_space<vmem>>, vector<8x128xf32>
    tpu.vector_store %arg14[%c0_44, %c0_45], %87 {strides = array<i32>} : memref<64x128xf32, #tpu.memory_space<vmem>>, vector<8x128xf32>,
    %89 = vector.extract_strided_slice %12 {offsets = [8, 0], sizes = [8, 128], strides = [1, 1]} : vector<64x128xf32> to vector<8x128xf32>
    %90 = vector.extract_strided_slice %25 {offsets = [8, 0], sizes = [8, 1], strides = [1, 1]} : vector<64x1xf32> to vector<8x1xf32>
    %cst_46 = arith.constant dense<0.000000e+00> : vector<8x128xf32>
    %91 = tpu.matmul %44, %0, %cst_46 {dimension_numbers = #tpu.dot_dimension_numbers<[1], [0], [0], [1], [0, 0, 1, 1], [], []>} : vector<8x32xf32>, vector<32x128xf32>, vector<8x128xf32> -> vector<8x128xf32>
    %92 = arith.addf %89, %91 : vector<8x128xf32>
    %93 = arith.negf %92 : vector<8x128xf32>
    %94 = math.exp %93 : vector<8x128xf32>
    %cst_47 = arith.constant 1.000000e+00 : f32
    %95 = vector.broadcast %cst_47 : f32 to vector<8x128xf32>
    %96 = arith.addf %95, %94 : vector<8x128xf32>
    %97 = arith.divf %95, %96 : vector<8x128xf32>
    %98 = math.tanh %92 : vector<8x128xf32>
    %99 = vector.extract_strided_slice %97 {offsets = [0, 0], sizes = [8, 32], strides = [1, 1]} : vector<8x128xf32> to vector<8x32xf32>
    %100 = vector.extract_strided_slice %97 {offsets = [0, 32], sizes = [8, 32], strides = [1, 1]} : vector<8x128xf32> to vector<8x32xf32>
    %101 = vector.extract_strided_slice %97 {offsets = [0, 96], sizes = [8, 32], strides = [1, 1]} : vector<8x128xf32> to vector<8x32xf32>
    %102 = vector.extract_strided_slice %98 {offsets = [0, 64], sizes = [8, 32], strides = [1, 1]} : vector<8x128xf32> to vector<8x32xf32>
    %103 = arith.mulf %100, %42 : vector<8x32xf32>
    %104 = arith.mulf %99, %102 : vector<8x32xf32>
    %105 = arith.addf %103, %104 : vector<8x32xf32>
    %106 = math.tanh %105 : vector<8x32xf32>
    %107 = arith.mulf %101, %106 : vector<8x32xf32>
    %108 = tpu.concatenate %107, %63 in 1 : vector<8x32xf32>, vector<8x32xf32> -> vector<8x64xf32>
    %cst_48 = arith.constant dense<0.000000e+00> : vector<8x128xf32>
    %109 = tpu.matmul %108, %1, %cst_48 {dimension_numbers = #tpu.dot_dimension_numbers<[1], [0], [0], [1], [0, 0, 1, 1], [], []>} : vector<8x64xf32>, vector<64x128xf32>, vector<8x128xf32> -> vector<8x128xf32>
    %110 = vector.broadcast %4 : vector<1x128xf32> to vector<8x128xf32>
    %111 = arith.addf %109, %110 : vector<8x128xf32>
    %112 = arith.negf %111 : vector<8x128xf32>
    %113 = math.exp %112 : vector<8x128xf32>
    %cst_49 = arith.constant 1.000000e+00 : f32
    %114 = vector.broadcast %cst_49 : f32 to vector<8x128xf32>
    %115 = arith.addf %114, %113 : vector<8x128xf32>
    %116 = arith.divf %114, %115 : vector<8x128xf32>
    %117 = math.tanh %111 : vector<8x128xf32>
    %118 = vector.extract_strided_slice %116 {offsets = [0, 0], sizes = [8, 32], strides = [1, 1]} : vector<8x128xf32> to vector<8x32xf32>
    %119 = vector.extract_strided_slice %116 {offsets = [0, 32], sizes = [8, 32], strides = [1, 1]} : vector<8x128xf32> to vector<8x32xf32>
    %120 = vector.extract_strided_slice %116 {offsets = [0, 96], sizes = [8, 32], strides = [1, 1]} : vector<8x128xf32> to vector<8x32xf32>
    %121 = vector.extract_strided_slice %117 {offsets = [0, 64], sizes = [8, 32], strides = [1, 1]} : vector<8x128xf32> to vector<8x32xf32>
    %122 = arith.mulf %119, %61 : vector<8x32xf32>
    %123 = arith.mulf %118, %121 : vector<8x32xf32>
    %124 = arith.addf %122, %123 : vector<8x32xf32>
    %125 = math.tanh %124 : vector<8x32xf32>
    %126 = arith.mulf %120, %125 : vector<8x32xf32>
    %127 = tpu.concatenate %126, %82 in 1 : vector<8x32xf32>, vector<8x32xf32> -> vector<8x64xf32>
    %cst_50 = arith.constant dense<0.000000e+00> : vector<8x128xf32>
    %128 = tpu.matmul %127, %2, %cst_50 {dimension_numbers = #tpu.dot_dimension_numbers<[1], [0], [0], [1], [0, 0, 1, 1], [], []>} : vector<8x64xf32>, vector<64x128xf32>, vector<8x128xf32> -> vector<8x128xf32>
    %129 = vector.broadcast %5 : vector<1x128xf32> to vector<8x128xf32>
    %130 = arith.addf %128, %129 : vector<8x128xf32>
    %131 = arith.negf %130 : vector<8x128xf32>
    %132 = math.exp %131 : vector<8x128xf32>
    %cst_51 = arith.constant 1.000000e+00 : f32
    %133 = vector.broadcast %cst_51 : f32 to vector<8x128xf32>
    %134 = arith.addf %133, %132 : vector<8x128xf32>
    %135 = arith.divf %133, %134 : vector<8x128xf32>
    %136 = math.tanh %130 : vector<8x128xf32>
    %137 = vector.extract_strided_slice %135 {offsets = [0, 0], sizes = [8, 32], strides = [1, 1]} : vector<8x128xf32> to vector<8x32xf32>
    %138 = vector.extract_strided_slice %135 {offsets = [0, 32], sizes = [8, 32], strides = [1, 1]} : vector<8x128xf32> to vector<8x32xf32>
    %139 = vector.extract_strided_slice %135 {offsets = [0, 96], sizes = [8, 32], strides = [1, 1]} : vector<8x128xf32> to vector<8x32xf32>
    %140 = vector.extract_strided_slice %136 {offsets = [0, 64], sizes = [8, 32], strides = [1, 1]} : vector<8x128xf32> to vector<8x32xf32>
    %141 = arith.mulf %138, %80 : vector<8x32xf32>
    %142 = arith.mulf %137, %140 : vector<8x32xf32>
    %143 = arith.addf %141, %142 : vector<8x32xf32>
    %144 = math.tanh %143 : vector<8x32xf32>
    %145 = arith.mulf %139, %144 : vector<8x32xf32>
    %146 = vector.broadcast %90 : vector<8x1xf32> to vector<8x32xf32>
    %147 = arith.mulf %145, %146 : vector<8x32xf32>
    %cst_52 = arith.constant dense<0.000000e+00> : vector<8x128xf32>
    %148 = tpu.matmul %147, %6, %cst_52 {dimension_numbers = #tpu.dot_dimension_numbers<[1], [0], [0], [1], [0, 0, 1, 1], [], []>} : vector<8x32xf32>, vector<32x128xf32>, vector<8x128xf32> -> vector<8x128xf32>
    %149 = vector.broadcast %7 : vector<1x128xf32> to vector<8x128xf32>
    %150 = arith.addf %148, %149 : vector<8x128xf32>
    %c8 = arith.constant 8 : index
    %c0_53 = arith.constant 0 : index
    %151 = vector.load %arg14[%c8, %c0_53] : memref<64x128xf32, #tpu.memory_space<vmem>>, vector<8x128xf32>
    tpu.vector_store %arg14[%c8, %c0_53], %150 {strides = array<i32>} : memref<64x128xf32, #tpu.memory_space<vmem>>, vector<8x128xf32>,
    %152 = vector.extract_strided_slice %12 {offsets = [16, 0], sizes = [8, 128], strides = [1, 1]} : vector<64x128xf32> to vector<8x128xf32>
    %153 = vector.extract_strided_slice %25 {offsets = [16, 0], sizes = [8, 1], strides = [1, 1]} : vector<64x1xf32> to vector<8x1xf32>
    %cst_54 = arith.constant dense<0.000000e+00> : vector<8x128xf32>
    %154 = tpu.matmul %107, %0, %cst_54 {dimension_numbers = #tpu.dot_dimension_numbers<[1], [0], [0], [1], [0, 0, 1, 1], [], []>} : vector<8x32xf32>, vector<32x128xf32>, vector<8x128xf32> -> vector<8x128xf32>
    %155 = arith.addf %152, %154 : vector<8x128xf32>
    %156 = arith.negf %155 : vector<8x128xf32>
    %157 = math.exp %156 : vector<8x128xf32>
    %cst_55 = arith.constant 1.000000e+00 : f32
    %158 = vector.broadcast %cst_55 : f32 to vector<8x128xf32>
    %159 = arith.addf %158, %157 : vector<8x128xf32>
    %160 = arith.divf %158, %159 : vector<8x128xf32>
    %161 = math.tanh %155 : vector<8x128xf32>
    %162 = vector.extract_strided_slice %160 {offsets = [0, 0], sizes = [8, 32], strides = [1, 1]} : vector<8x128xf32> to vector<8x32xf32>
    %163 = vector.extract_strided_slice %160 {offsets = [0, 32], sizes = [8, 32], strides = [1, 1]} : vector<8x128xf32> to vector<8x32xf32>
    %164 = vector.extract_strided_slice %160 {offsets = [0, 96], sizes = [8, 32], strides = [1, 1]} : vector<8x128xf32> to vector<8x32xf32>
    %165 = vector.extract_strided_slice %161 {offsets = [0, 64], sizes = [8, 32], strides = [1, 1]} : vector<8x128xf32> to vector<8x32xf32>
    %166 = arith.mulf %163, %105 : vector<8x32xf32>
    %167 = arith.mulf %162, %165 : vector<8x32xf32>
    %168 = arith.addf %166, %167 : vector<8x32xf32>
    %169 = math.tanh %168 : vector<8x32xf32>
    %170 = arith.mulf %164, %169 : vector<8x32xf32>
    %171 = tpu.concatenate %170, %126 in 1 : vector<8x32xf32>, vector<8x32xf32> -> vector<8x64xf32>
    %cst_56 = arith.constant dense<0.000000e+00> : vector<8x128xf32>
    %172 = tpu.matmul %171, %1, %cst_56 {dimension_numbers = #tpu.dot_dimension_numbers<[1], [0], [0], [1], [0, 0, 1, 1], [], []>} : vector<8x64xf32>, vector<64x128xf32>, vector<8x128xf32> -> vector<8x128xf32>
    %173 = vector.broadcast %4 : vector<1x128xf32> to vector<8x128xf32>
    %174 = arith.addf %172, %173 : vector<8x128xf32>
    %175 = arith.negf %174 : vector<8x128xf32>
    %176 = math.exp %175 : vector<8x128xf32>
    %cst_57 = arith.constant 1.000000e+00 : f32
    %177 = vector.broadcast %cst_57 : f32 to vector<8x128xf32>
    %178 = arith.addf %177, %176 : vector<8x128xf32>
    %179 = arith.divf %177, %178 : vector<8x128xf32>
    %180 = math.tanh %174 : vector<8x128xf32>
    %181 = vector.extract_strided_slice %179 {offsets = [0, 0], sizes = [8, 32], strides = [1, 1]} : vector<8x128xf32> to vector<8x32xf32>
    %182 = vector.extract_strided_slice %179 {offsets = [0, 32], sizes = [8, 32], strides = [1, 1]} : vector<8x128xf32> to vector<8x32xf32>
    %183 = vector.extract_strided_slice %179 {offsets = [0, 96], sizes = [8, 32], strides = [1, 1]} : vector<8x128xf32> to vector<8x32xf32>
    %184 = vector.extract_strided_slice %180 {offsets = [0, 64], sizes = [8, 32], strides = [1, 1]} : vector<8x128xf32> to vector<8x32xf32>
    %185 = arith.mulf %182, %124 : vector<8x32xf32>
    %186 = arith.mulf %181, %184 : vector<8x32xf32>
    %187 = arith.addf %185, %186 : vector<8x32xf32>
    %188 = math.tanh %187 : vector<8x32xf32>
    %189 = arith.mulf %183, %188 : vector<8x32xf32>
    %190 = tpu.concatenate %189, %145 in 1 : vector<8x32xf32>, vector<8x32xf32> -> vector<8x64xf32>
    %cst_58 = arith.constant dense<0.000000e+00> : vector<8x128xf32>
    %191 = tpu.matmul %190, %2, %cst_58 {dimension_numbers = #tpu.dot_dimension_numbers<[1], [0], [0], [1], [0, 0, 1, 1], [], []>} : vector<8x64xf32>, vector<64x128xf32>, vector<8x128xf32> -> vector<8x128xf32>
    %192 = vector.broadcast %5 : vector<1x128xf32> to vector<8x128xf32>
    %193 = arith.addf %191, %192 : vector<8x128xf32>
    %194 = arith.negf %193 : vector<8x128xf32>
    %195 = math.exp %194 : vector<8x128xf32>
    %cst_59 = arith.constant 1.000000e+00 : f32
    %196 = vector.broadcast %cst_59 : f32 to vector<8x128xf32>
    %197 = arith.addf %196, %195 : vector<8x128xf32>
    %198 = arith.divf %196, %197 : vector<8x128xf32>
    %199 = math.tanh %193 : vector<8x128xf32>
    %200 = vector.extract_strided_slice %198 {offsets = [0, 0], sizes = [8, 32], strides = [1, 1]} : vector<8x128xf32> to vector<8x32xf32>
    %201 = vector.extract_strided_slice %198 {offsets = [0, 32], sizes = [8, 32], strides = [1, 1]} : vector<8x128xf32> to vector<8x32xf32>
    %202 = vector.extract_strided_slice %198 {offsets = [0, 96], sizes = [8, 32], strides = [1, 1]} : vector<8x128xf32> to vector<8x32xf32>
    %203 = vector.extract_strided_slice %199 {offsets = [0, 64], sizes = [8, 32], strides = [1, 1]} : vector<8x128xf32> to vector<8x32xf32>
    %204 = arith.mulf %201, %143 : vector<8x32xf32>
    %205 = arith.mulf %200, %203 : vector<8x32xf32>
    %206 = arith.addf %204, %205 : vector<8x32xf32>
    %207 = math.tanh %206 : vector<8x32xf32>
    %208 = arith.mulf %202, %207 : vector<8x32xf32>
    %209 = vector.broadcast %153 : vector<8x1xf32> to vector<8x32xf32>
    %210 = arith.mulf %208, %209 : vector<8x32xf32>
    %cst_60 = arith.constant dense<0.000000e+00> : vector<8x128xf32>
    %211 = tpu.matmul %210, %6, %cst_60 {dimension_numbers = #tpu.dot_dimension_numbers<[1], [0], [0], [1], [0, 0, 1, 1], [], []>} : vector<8x32xf32>, vector<32x128xf32>, vector<8x128xf32> -> vector<8x128xf32>
    %212 = vector.broadcast %7 : vector<1x128xf32> to vector<8x128xf32>
    %213 = arith.addf %211, %212 : vector<8x128xf32>
    %c16 = arith.constant 16 : index
    %c0_61 = arith.constant 0 : index
    %214 = vector.load %arg14[%c16, %c0_61] : memref<64x128xf32, #tpu.memory_space<vmem>>, vector<8x128xf32>
    tpu.vector_store %arg14[%c16, %c0_61], %213 {strides = array<i32>} : memref<64x128xf32, #tpu.memory_space<vmem>>, vector<8x128xf32>,
    %215 = vector.extract_strided_slice %12 {offsets = [24, 0], sizes = [8, 128], strides = [1, 1]} : vector<64x128xf32> to vector<8x128xf32>
    %216 = vector.extract_strided_slice %25 {offsets = [24, 0], sizes = [8, 1], strides = [1, 1]} : vector<64x1xf32> to vector<8x1xf32>
    %cst_62 = arith.constant dense<0.000000e+00> : vector<8x128xf32>
    %217 = tpu.matmul %170, %0, %cst_62 {dimension_numbers = #tpu.dot_dimension_numbers<[1], [0], [0], [1], [0, 0, 1, 1], [], []>} : vector<8x32xf32>, vector<32x128xf32>, vector<8x128xf32> -> vector<8x128xf32>
    %218 = arith.addf %215, %217 : vector<8x128xf32>
    %219 = arith.negf %218 : vector<8x128xf32>
    %220 = math.exp %219 : vector<8x128xf32>
    %cst_63 = arith.constant 1.000000e+00 : f32
    %221 = vector.broadcast %cst_63 : f32 to vector<8x128xf32>
    %222 = arith.addf %221, %220 : vector<8x128xf32>
    %223 = arith.divf %221, %222 : vector<8x128xf32>
    %224 = math.tanh %218 : vector<8x128xf32>
    %225 = vector.extract_strided_slice %223 {offsets = [0, 0], sizes = [8, 32], strides = [1, 1]} : vector<8x128xf32> to vector<8x32xf32>
    %226 = vector.extract_strided_slice %223 {offsets = [0, 32], sizes = [8, 32], strides = [1, 1]} : vector<8x128xf32> to vector<8x32xf32>
    %227 = vector.extract_strided_slice %223 {offsets = [0, 96], sizes = [8, 32], strides = [1, 1]} : vector<8x128xf32> to vector<8x32xf32>
    %228 = vector.extract_strided_slice %224 {offsets = [0, 64], sizes = [8, 32], strides = [1, 1]} : vector<8x128xf32> to vector<8x32xf32>
    %229 = arith.mulf %226, %168 : vector<8x32xf32>
    %230 = arith.mulf %225, %228 : vector<8x32xf32>
    %231 = arith.addf %229, %230 : vector<8x32xf32>
    %232 = math.tanh %231 : vector<8x32xf32>
    %233 = arith.mulf %227, %232 : vector<8x32xf32>
    %234 = tpu.concatenate %233, %189 in 1 : vector<8x32xf32>, vector<8x32xf32> -> vector<8x64xf32>
    %cst_64 = arith.constant dense<0.000000e+00> : vector<8x128xf32>
    %235 = tpu.matmul %234, %1, %cst_64 {dimension_numbers = #tpu.dot_dimension_numbers<[1], [0], [0], [1], [0, 0, 1, 1], [], []>} : vector<8x64xf32>, vector<64x128xf32>, vector<8x128xf32> -> vector<8x128xf32>
    %236 = vector.broadcast %4 : vector<1x128xf32> to vector<8x128xf32>
    %237 = arith.addf %235, %236 : vector<8x128xf32>
    %238 = arith.negf %237 : vector<8x128xf32>
    %239 = math.exp %238 : vector<8x128xf32>
    %cst_65 = arith.constant 1.000000e+00 : f32
    %240 = vector.broadcast %cst_65 : f32 to vector<8x128xf32>
    %241 = arith.addf %240, %239 : vector<8x128xf32>
    %242 = arith.divf %240, %241 : vector<8x128xf32>
    %243 = math.tanh %237 : vector<8x128xf32>
    %244 = vector.extract_strided_slice %242 {offsets = [0, 0], sizes = [8, 32], strides = [1, 1]} : vector<8x128xf32> to vector<8x32xf32>
    %245 = vector.extract_strided_slice %242 {offsets = [0, 32], sizes = [8, 32], strides = [1, 1]} : vector<8x128xf32> to vector<8x32xf32>
    %246 = vector.extract_strided_slice %242 {offsets = [0, 96], sizes = [8, 32], strides = [1, 1]} : vector<8x128xf32> to vector<8x32xf32>
    %247 = vector.extract_strided_slice %243 {offsets = [0, 64], sizes = [8, 32], strides = [1, 1]} : vector<8x128xf32> to vector<8x32xf32>
    %248 = arith.mulf %245, %187 : vector<8x32xf32>
    %249 = arith.mulf %244, %247 : vector<8x32xf32>
    %250 = arith.addf %248, %249 : vector<8x32xf32>
    %251 = math.tanh %250 : vector<8x32xf32>
    %252 = arith.mulf %246, %251 : vector<8x32xf32>
    %253 = tpu.concatenate %252, %208 in 1 : vector<8x32xf32>, vector<8x32xf32> -> vector<8x64xf32>
    %cst_66 = arith.constant dense<0.000000e+00> : vector<8x128xf32>
    %254 = tpu.matmul %253, %2, %cst_66 {dimension_numbers = #tpu.dot_dimension_numbers<[1], [0], [0], [1], [0, 0, 1, 1], [], []>} : vector<8x64xf32>, vector<64x128xf32>, vector<8x128xf32> -> vector<8x128xf32>
    %255 = vector.broadcast %5 : vector<1x128xf32> to vector<8x128xf32>
    %256 = arith.addf %254, %255 : vector<8x128xf32>
    %257 = arith.negf %256 : vector<8x128xf32>
    %258 = math.exp %257 : vector<8x128xf32>
    %cst_67 = arith.constant 1.000000e+00 : f32
    %259 = vector.broadcast %cst_67 : f32 to vector<8x128xf32>
    %260 = arith.addf %259, %258 : vector<8x128xf32>
    %261 = arith.divf %259, %260 : vector<8x128xf32>
    %262 = math.tanh %256 : vector<8x128xf32>
    %263 = vector.extract_strided_slice %261 {offsets = [0, 0], sizes = [8, 32], strides = [1, 1]} : vector<8x128xf32> to vector<8x32xf32>
    %264 = vector.extract_strided_slice %261 {offsets = [0, 32], sizes = [8, 32], strides = [1, 1]} : vector<8x128xf32> to vector<8x32xf32>
    %265 = vector.extract_strided_slice %261 {offsets = [0, 96], sizes = [8, 32], strides = [1, 1]} : vector<8x128xf32> to vector<8x32xf32>
    %266 = vector.extract_strided_slice %262 {offsets = [0, 64], sizes = [8, 32], strides = [1, 1]} : vector<8x128xf32> to vector<8x32xf32>
    %267 = arith.mulf %264, %206 : vector<8x32xf32>
    %268 = arith.mulf %263, %266 : vector<8x32xf32>
    %269 = arith.addf %267, %268 : vector<8x32xf32>
    %270 = math.tanh %269 : vector<8x32xf32>
    %271 = arith.mulf %265, %270 : vector<8x32xf32>
    %272 = vector.broadcast %216 : vector<8x1xf32> to vector<8x32xf32>
    %273 = arith.mulf %271, %272 : vector<8x32xf32>
    %cst_68 = arith.constant dense<0.000000e+00> : vector<8x128xf32>
    %274 = tpu.matmul %273, %6, %cst_68 {dimension_numbers = #tpu.dot_dimension_numbers<[1], [0], [0], [1], [0, 0, 1, 1], [], []>} : vector<8x32xf32>, vector<32x128xf32>, vector<8x128xf32> -> vector<8x128xf32>
    %275 = vector.broadcast %7 : vector<1x128xf32> to vector<8x128xf32>
    %276 = arith.addf %274, %275 : vector<8x128xf32>
    %c24 = arith.constant 24 : index
    %c0_69 = arith.constant 0 : index
    %277 = vector.load %arg14[%c24, %c0_69] : memref<64x128xf32, #tpu.memory_space<vmem>>, vector<8x128xf32>
    tpu.vector_store %arg14[%c24, %c0_69], %276 {strides = array<i32>} : memref<64x128xf32, #tpu.memory_space<vmem>>, vector<8x128xf32>,
    %278 = vector.extract_strided_slice %12 {offsets = [32, 0], sizes = [8, 128], strides = [1, 1]} : vector<64x128xf32> to vector<8x128xf32>
    %279 = vector.extract_strided_slice %25 {offsets = [32, 0], sizes = [8, 1], strides = [1, 1]} : vector<64x1xf32> to vector<8x1xf32>
    %cst_70 = arith.constant dense<0.000000e+00> : vector<8x128xf32>
    %280 = tpu.matmul %233, %0, %cst_70 {dimension_numbers = #tpu.dot_dimension_numbers<[1], [0], [0], [1], [0, 0, 1, 1], [], []>} : vector<8x32xf32>, vector<32x128xf32>, vector<8x128xf32> -> vector<8x128xf32>
    %281 = arith.addf %278, %280 : vector<8x128xf32>
    %282 = arith.negf %281 : vector<8x128xf32>
    %283 = math.exp %282 : vector<8x128xf32>
    %cst_71 = arith.constant 1.000000e+00 : f32
    %284 = vector.broadcast %cst_71 : f32 to vector<8x128xf32>
    %285 = arith.addf %284, %283 : vector<8x128xf32>
    %286 = arith.divf %284, %285 : vector<8x128xf32>
    %287 = math.tanh %281 : vector<8x128xf32>
    %288 = vector.extract_strided_slice %286 {offsets = [0, 0], sizes = [8, 32], strides = [1, 1]} : vector<8x128xf32> to vector<8x32xf32>
    %289 = vector.extract_strided_slice %286 {offsets = [0, 32], sizes = [8, 32], strides = [1, 1]} : vector<8x128xf32> to vector<8x32xf32>
    %290 = vector.extract_strided_slice %286 {offsets = [0, 96], sizes = [8, 32], strides = [1, 1]} : vector<8x128xf32> to vector<8x32xf32>
    %291 = vector.extract_strided_slice %287 {offsets = [0, 64], sizes = [8, 32], strides = [1, 1]} : vector<8x128xf32> to vector<8x32xf32>
    %292 = arith.mulf %289, %231 : vector<8x32xf32>
    %293 = arith.mulf %288, %291 : vector<8x32xf32>
    %294 = arith.addf %292, %293 : vector<8x32xf32>
    %295 = math.tanh %294 : vector<8x32xf32>
    %296 = arith.mulf %290, %295 : vector<8x32xf32>
    %297 = tpu.concatenate %296, %252 in 1 : vector<8x32xf32>, vector<8x32xf32> -> vector<8x64xf32>
    %cst_72 = arith.constant dense<0.000000e+00> : vector<8x128xf32>
    %298 = tpu.matmul %297, %1, %cst_72 {dimension_numbers = #tpu.dot_dimension_numbers<[1], [0], [0], [1], [0, 0, 1, 1], [], []>} : vector<8x64xf32>, vector<64x128xf32>, vector<8x128xf32> -> vector<8x128xf32>
    %299 = vector.broadcast %4 : vector<1x128xf32> to vector<8x128xf32>
    %300 = arith.addf %298, %299 : vector<8x128xf32>
    %301 = arith.negf %300 : vector<8x128xf32>
    %302 = math.exp %301 : vector<8x128xf32>
    %cst_73 = arith.constant 1.000000e+00 : f32
    %303 = vector.broadcast %cst_73 : f32 to vector<8x128xf32>
    %304 = arith.addf %303, %302 : vector<8x128xf32>
    %305 = arith.divf %303, %304 : vector<8x128xf32>
    %306 = math.tanh %300 : vector<8x128xf32>
    %307 = vector.extract_strided_slice %305 {offsets = [0, 0], sizes = [8, 32], strides = [1, 1]} : vector<8x128xf32> to vector<8x32xf32>
    %308 = vector.extract_strided_slice %305 {offsets = [0, 32], sizes = [8, 32], strides = [1, 1]} : vector<8x128xf32> to vector<8x32xf32>
    %309 = vector.extract_strided_slice %305 {offsets = [0, 96], sizes = [8, 32], strides = [1, 1]} : vector<8x128xf32> to vector<8x32xf32>
    %310 = vector.extract_strided_slice %306 {offsets = [0, 64], sizes = [8, 32], strides = [1, 1]} : vector<8x128xf32> to vector<8x32xf32>
    %311 = arith.mulf %308, %250 : vector<8x32xf32>
    %312 = arith.mulf %307, %310 : vector<8x32xf32>
    %313 = arith.addf %311, %312 : vector<8x32xf32>
    %314 = math.tanh %313 : vector<8x32xf32>
    %315 = arith.mulf %309, %314 : vector<8x32xf32>
    %316 = tpu.concatenate %315, %271 in 1 : vector<8x32xf32>, vector<8x32xf32> -> vector<8x64xf32>
    %cst_74 = arith.constant dense<0.000000e+00> : vector<8x128xf32>
    %317 = tpu.matmul %316, %2, %cst_74 {dimension_numbers = #tpu.dot_dimension_numbers<[1], [0], [0], [1], [0, 0, 1, 1], [], []>} : vector<8x64xf32>, vector<64x128xf32>, vector<8x128xf32> -> vector<8x128xf32>
    %318 = vector.broadcast %5 : vector<1x128xf32> to vector<8x128xf32>
    %319 = arith.addf %317, %318 : vector<8x128xf32>
    %320 = arith.negf %319 : vector<8x128xf32>
    %321 = math.exp %320 : vector<8x128xf32>
    %cst_75 = arith.constant 1.000000e+00 : f32
    %322 = vector.broadcast %cst_75 : f32 to vector<8x128xf32>
    %323 = arith.addf %322, %321 : vector<8x128xf32>
    %324 = arith.divf %322, %323 : vector<8x128xf32>
    %325 = math.tanh %319 : vector<8x128xf32>
    %326 = vector.extract_strided_slice %324 {offsets = [0, 0], sizes = [8, 32], strides = [1, 1]} : vector<8x128xf32> to vector<8x32xf32>
    %327 = vector.extract_strided_slice %324 {offsets = [0, 32], sizes = [8, 32], strides = [1, 1]} : vector<8x128xf32> to vector<8x32xf32>
    %328 = vector.extract_strided_slice %324 {offsets = [0, 96], sizes = [8, 32], strides = [1, 1]} : vector<8x128xf32> to vector<8x32xf32>
    %329 = vector.extract_strided_slice %325 {offsets = [0, 64], sizes = [8, 32], strides = [1, 1]} : vector<8x128xf32> to vector<8x32xf32>
    %330 = arith.mulf %327, %269 : vector<8x32xf32>
    %331 = arith.mulf %326, %329 : vector<8x32xf32>
    %332 = arith.addf %330, %331 : vector<8x32xf32>
    %333 = math.tanh %332 : vector<8x32xf32>
    %334 = arith.mulf %328, %333 : vector<8x32xf32>
    %335 = vector.broadcast %279 : vector<8x1xf32> to vector<8x32xf32>
    %336 = arith.mulf %334, %335 : vector<8x32xf32>
    %cst_76 = arith.constant dense<0.000000e+00> : vector<8x128xf32>
    %337 = tpu.matmul %336, %6, %cst_76 {dimension_numbers = #tpu.dot_dimension_numbers<[1], [0], [0], [1], [0, 0, 1, 1], [], []>} : vector<8x32xf32>, vector<32x128xf32>, vector<8x128xf32> -> vector<8x128xf32>
    %338 = vector.broadcast %7 : vector<1x128xf32> to vector<8x128xf32>
    %339 = arith.addf %337, %338 : vector<8x128xf32>
    %c32 = arith.constant 32 : index
    %c0_77 = arith.constant 0 : index
    %340 = vector.load %arg14[%c32, %c0_77] : memref<64x128xf32, #tpu.memory_space<vmem>>, vector<8x128xf32>
    tpu.vector_store %arg14[%c32, %c0_77], %339 {strides = array<i32>} : memref<64x128xf32, #tpu.memory_space<vmem>>, vector<8x128xf32>,
    %341 = vector.extract_strided_slice %12 {offsets = [40, 0], sizes = [8, 128], strides = [1, 1]} : vector<64x128xf32> to vector<8x128xf32>
    %342 = vector.extract_strided_slice %25 {offsets = [40, 0], sizes = [8, 1], strides = [1, 1]} : vector<64x1xf32> to vector<8x1xf32>
    %cst_78 = arith.constant dense<0.000000e+00> : vector<8x128xf32>
    %343 = tpu.matmul %296, %0, %cst_78 {dimension_numbers = #tpu.dot_dimension_numbers<[1], [0], [0], [1], [0, 0, 1, 1], [], []>} : vector<8x32xf32>, vector<32x128xf32>, vector<8x128xf32> -> vector<8x128xf32>
    %344 = arith.addf %341, %343 : vector<8x128xf32>
    %345 = arith.negf %344 : vector<8x128xf32>
    %346 = math.exp %345 : vector<8x128xf32>
    %cst_79 = arith.constant 1.000000e+00 : f32
    %347 = vector.broadcast %cst_79 : f32 to vector<8x128xf32>
    %348 = arith.addf %347, %346 : vector<8x128xf32>
    %349 = arith.divf %347, %348 : vector<8x128xf32>
    %350 = math.tanh %344 : vector<8x128xf32>
    %351 = vector.extract_strided_slice %349 {offsets = [0, 0], sizes = [8, 32], strides = [1, 1]} : vector<8x128xf32> to vector<8x32xf32>
    %352 = vector.extract_strided_slice %349 {offsets = [0, 32], sizes = [8, 32], strides = [1, 1]} : vector<8x128xf32> to vector<8x32xf32>
    %353 = vector.extract_strided_slice %349 {offsets = [0, 96], sizes = [8, 32], strides = [1, 1]} : vector<8x128xf32> to vector<8x32xf32>
    %354 = vector.extract_strided_slice %350 {offsets = [0, 64], sizes = [8, 32], strides = [1, 1]} : vector<8x128xf32> to vector<8x32xf32>
    %355 = arith.mulf %352, %294 : vector<8x32xf32>
    %356 = arith.mulf %351, %354 : vector<8x32xf32>
    %357 = arith.addf %355, %356 : vector<8x32xf32>
    %358 = math.tanh %357 : vector<8x32xf32>
    %359 = arith.mulf %353, %358 : vector<8x32xf32>
    %360 = tpu.concatenate %359, %315 in 1 : vector<8x32xf32>, vector<8x32xf32> -> vector<8x64xf32>
    %cst_80 = arith.constant dense<0.000000e+00> : vector<8x128xf32>
    %361 = tpu.matmul %360, %1, %cst_80 {dimension_numbers = #tpu.dot_dimension_numbers<[1], [0], [0], [1], [0, 0, 1, 1], [], []>} : vector<8x64xf32>, vector<64x128xf32>, vector<8x128xf32> -> vector<8x128xf32>
    %362 = vector.broadcast %4 : vector<1x128xf32> to vector<8x128xf32>
    %363 = arith.addf %361, %362 : vector<8x128xf32>
    %364 = arith.negf %363 : vector<8x128xf32>
    %365 = math.exp %364 : vector<8x128xf32>
    %cst_81 = arith.constant 1.000000e+00 : f32
    %366 = vector.broadcast %cst_81 : f32 to vector<8x128xf32>
    %367 = arith.addf %366, %365 : vector<8x128xf32>
    %368 = arith.divf %366, %367 : vector<8x128xf32>
    %369 = math.tanh %363 : vector<8x128xf32>
    %370 = vector.extract_strided_slice %368 {offsets = [0, 0], sizes = [8, 32], strides = [1, 1]} : vector<8x128xf32> to vector<8x32xf32>
    %371 = vector.extract_strided_slice %368 {offsets = [0, 32], sizes = [8, 32], strides = [1, 1]} : vector<8x128xf32> to vector<8x32xf32>
    %372 = vector.extract_strided_slice %368 {offsets = [0, 96], sizes = [8, 32], strides = [1, 1]} : vector<8x128xf32> to vector<8x32xf32>
    %373 = vector.extract_strided_slice %369 {offsets = [0, 64], sizes = [8, 32], strides = [1, 1]} : vector<8x128xf32> to vector<8x32xf32>
    %374 = arith.mulf %371, %313 : vector<8x32xf32>
    %375 = arith.mulf %370, %373 : vector<8x32xf32>
    %376 = arith.addf %374, %375 : vector<8x32xf32>
    %377 = math.tanh %376 : vector<8x32xf32>
    %378 = arith.mulf %372, %377 : vector<8x32xf32>
    %379 = tpu.concatenate %378, %334 in 1 : vector<8x32xf32>, vector<8x32xf32> -> vector<8x64xf32>
    %cst_82 = arith.constant dense<0.000000e+00> : vector<8x128xf32>
    %380 = tpu.matmul %379, %2, %cst_82 {dimension_numbers = #tpu.dot_dimension_numbers<[1], [0], [0], [1], [0, 0, 1, 1], [], []>} : vector<8x64xf32>, vector<64x128xf32>, vector<8x128xf32> -> vector<8x128xf32>
    %381 = vector.broadcast %5 : vector<1x128xf32> to vector<8x128xf32>
    %382 = arith.addf %380, %381 : vector<8x128xf32>
    %383 = arith.negf %382 : vector<8x128xf32>
    %384 = math.exp %383 : vector<8x128xf32>
    %cst_83 = arith.constant 1.000000e+00 : f32
    %385 = vector.broadcast %cst_83 : f32 to vector<8x128xf32>
    %386 = arith.addf %385, %384 : vector<8x128xf32>
    %387 = arith.divf %385, %386 : vector<8x128xf32>
    %388 = math.tanh %382 : vector<8x128xf32>
    %389 = vector.extract_strided_slice %387 {offsets = [0, 0], sizes = [8, 32], strides = [1, 1]} : vector<8x128xf32> to vector<8x32xf32>
    %390 = vector.extract_strided_slice %387 {offsets = [0, 32], sizes = [8, 32], strides = [1, 1]} : vector<8x128xf32> to vector<8x32xf32>
    %391 = vector.extract_strided_slice %387 {offsets = [0, 96], sizes = [8, 32], strides = [1, 1]} : vector<8x128xf32> to vector<8x32xf32>
    %392 = vector.extract_strided_slice %388 {offsets = [0, 64], sizes = [8, 32], strides = [1, 1]} : vector<8x128xf32> to vector<8x32xf32>
    %393 = arith.mulf %390, %332 : vector<8x32xf32>
    %394 = arith.mulf %389, %392 : vector<8x32xf32>
    %395 = arith.addf %393, %394 : vector<8x32xf32>
    %396 = math.tanh %395 : vector<8x32xf32>
    %397 = arith.mulf %391, %396 : vector<8x32xf32>
    %398 = vector.broadcast %342 : vector<8x1xf32> to vector<8x32xf32>
    %399 = arith.mulf %397, %398 : vector<8x32xf32>
    %cst_84 = arith.constant dense<0.000000e+00> : vector<8x128xf32>
    %400 = tpu.matmul %399, %6, %cst_84 {dimension_numbers = #tpu.dot_dimension_numbers<[1], [0], [0], [1], [0, 0, 1, 1], [], []>} : vector<8x32xf32>, vector<32x128xf32>, vector<8x128xf32> -> vector<8x128xf32>
    %401 = vector.broadcast %7 : vector<1x128xf32> to vector<8x128xf32>
    %402 = arith.addf %400, %401 : vector<8x128xf32>
    %c40 = arith.constant 40 : index
    %c0_85 = arith.constant 0 : index
    %403 = vector.load %arg14[%c40, %c0_85] : memref<64x128xf32, #tpu.memory_space<vmem>>, vector<8x128xf32>
    tpu.vector_store %arg14[%c40, %c0_85], %402 {strides = array<i32>} : memref<64x128xf32, #tpu.memory_space<vmem>>, vector<8x128xf32>,
    %404 = vector.extract_strided_slice %12 {offsets = [48, 0], sizes = [8, 128], strides = [1, 1]} : vector<64x128xf32> to vector<8x128xf32>
    %405 = vector.extract_strided_slice %25 {offsets = [48, 0], sizes = [8, 1], strides = [1, 1]} : vector<64x1xf32> to vector<8x1xf32>
    %cst_86 = arith.constant dense<0.000000e+00> : vector<8x128xf32>
    %406 = tpu.matmul %359, %0, %cst_86 {dimension_numbers = #tpu.dot_dimension_numbers<[1], [0], [0], [1], [0, 0, 1, 1], [], []>} : vector<8x32xf32>, vector<32x128xf32>, vector<8x128xf32> -> vector<8x128xf32>
    %407 = arith.addf %404, %406 : vector<8x128xf32>
    %408 = arith.negf %407 : vector<8x128xf32>
    %409 = math.exp %408 : vector<8x128xf32>
    %cst_87 = arith.constant 1.000000e+00 : f32
    %410 = vector.broadcast %cst_87 : f32 to vector<8x128xf32>
    %411 = arith.addf %410, %409 : vector<8x128xf32>
    %412 = arith.divf %410, %411 : vector<8x128xf32>
    %413 = math.tanh %407 : vector<8x128xf32>
    %414 = vector.extract_strided_slice %412 {offsets = [0, 0], sizes = [8, 32], strides = [1, 1]} : vector<8x128xf32> to vector<8x32xf32>
    %415 = vector.extract_strided_slice %412 {offsets = [0, 32], sizes = [8, 32], strides = [1, 1]} : vector<8x128xf32> to vector<8x32xf32>
    %416 = vector.extract_strided_slice %412 {offsets = [0, 96], sizes = [8, 32], strides = [1, 1]} : vector<8x128xf32> to vector<8x32xf32>
    %417 = vector.extract_strided_slice %413 {offsets = [0, 64], sizes = [8, 32], strides = [1, 1]} : vector<8x128xf32> to vector<8x32xf32>
    %418 = arith.mulf %415, %357 : vector<8x32xf32>
    %419 = arith.mulf %414, %417 : vector<8x32xf32>
    %420 = arith.addf %418, %419 : vector<8x32xf32>
    %421 = math.tanh %420 : vector<8x32xf32>
    %422 = arith.mulf %416, %421 : vector<8x32xf32>
    %423 = tpu.concatenate %422, %378 in 1 : vector<8x32xf32>, vector<8x32xf32> -> vector<8x64xf32>
    %cst_88 = arith.constant dense<0.000000e+00> : vector<8x128xf32>
    %424 = tpu.matmul %423, %1, %cst_88 {dimension_numbers = #tpu.dot_dimension_numbers<[1], [0], [0], [1], [0, 0, 1, 1], [], []>} : vector<8x64xf32>, vector<64x128xf32>, vector<8x128xf32> -> vector<8x128xf32>
    %425 = vector.broadcast %4 : vector<1x128xf32> to vector<8x128xf32>
    %426 = arith.addf %424, %425 : vector<8x128xf32>
    %427 = arith.negf %426 : vector<8x128xf32>
    %428 = math.exp %427 : vector<8x128xf32>
    %cst_89 = arith.constant 1.000000e+00 : f32
    %429 = vector.broadcast %cst_89 : f32 to vector<8x128xf32>
    %430 = arith.addf %429, %428 : vector<8x128xf32>
    %431 = arith.divf %429, %430 : vector<8x128xf32>
    %432 = math.tanh %426 : vector<8x128xf32>
    %433 = vector.extract_strided_slice %431 {offsets = [0, 0], sizes = [8, 32], strides = [1, 1]} : vector<8x128xf32> to vector<8x32xf32>
    %434 = vector.extract_strided_slice %431 {offsets = [0, 32], sizes = [8, 32], strides = [1, 1]} : vector<8x128xf32> to vector<8x32xf32>
    %435 = vector.extract_strided_slice %431 {offsets = [0, 96], sizes = [8, 32], strides = [1, 1]} : vector<8x128xf32> to vector<8x32xf32>
    %436 = vector.extract_strided_slice %432 {offsets = [0, 64], sizes = [8, 32], strides = [1, 1]} : vector<8x128xf32> to vector<8x32xf32>
    %437 = arith.mulf %434, %376 : vector<8x32xf32>
    %438 = arith.mulf %433, %436 : vector<8x32xf32>
    %439 = arith.addf %437, %438 : vector<8x32xf32>
    %440 = math.tanh %439 : vector<8x32xf32>
    %441 = arith.mulf %435, %440 : vector<8x32xf32>
    %442 = tpu.concatenate %441, %397 in 1 : vector<8x32xf32>, vector<8x32xf32> -> vector<8x64xf32>
    %cst_90 = arith.constant dense<0.000000e+00> : vector<8x128xf32>
    %443 = tpu.matmul %442, %2, %cst_90 {dimension_numbers = #tpu.dot_dimension_numbers<[1], [0], [0], [1], [0, 0, 1, 1], [], []>} : vector<8x64xf32>, vector<64x128xf32>, vector<8x128xf32> -> vector<8x128xf32>
    %444 = vector.broadcast %5 : vector<1x128xf32> to vector<8x128xf32>
    %445 = arith.addf %443, %444 : vector<8x128xf32>
    %446 = arith.negf %445 : vector<8x128xf32>
    %447 = math.exp %446 : vector<8x128xf32>
    %cst_91 = arith.constant 1.000000e+00 : f32
    %448 = vector.broadcast %cst_91 : f32 to vector<8x128xf32>
    %449 = arith.addf %448, %447 : vector<8x128xf32>
    %450 = arith.divf %448, %449 : vector<8x128xf32>
    %451 = math.tanh %445 : vector<8x128xf32>
    %452 = vector.extract_strided_slice %450 {offsets = [0, 0], sizes = [8, 32], strides = [1, 1]} : vector<8x128xf32> to vector<8x32xf32>
    %453 = vector.extract_strided_slice %450 {offsets = [0, 32], sizes = [8, 32], strides = [1, 1]} : vector<8x128xf32> to vector<8x32xf32>
    %454 = vector.extract_strided_slice %450 {offsets = [0, 96], sizes = [8, 32], strides = [1, 1]} : vector<8x128xf32> to vector<8x32xf32>
    %455 = vector.extract_strided_slice %451 {offsets = [0, 64], sizes = [8, 32], strides = [1, 1]} : vector<8x128xf32> to vector<8x32xf32>
    %456 = arith.mulf %453, %395 : vector<8x32xf32>
    %457 = arith.mulf %452, %455 : vector<8x32xf32>
    %458 = arith.addf %456, %457 : vector<8x32xf32>
    %459 = math.tanh %458 : vector<8x32xf32>
    %460 = arith.mulf %454, %459 : vector<8x32xf32>
    %461 = vector.broadcast %405 : vector<8x1xf32> to vector<8x32xf32>
    %462 = arith.mulf %460, %461 : vector<8x32xf32>
    %cst_92 = arith.constant dense<0.000000e+00> : vector<8x128xf32>
    %463 = tpu.matmul %462, %6, %cst_92 {dimension_numbers = #tpu.dot_dimension_numbers<[1], [0], [0], [1], [0, 0, 1, 1], [], []>} : vector<8x32xf32>, vector<32x128xf32>, vector<8x128xf32> -> vector<8x128xf32>
    %464 = vector.broadcast %7 : vector<1x128xf32> to vector<8x128xf32>
    %465 = arith.addf %463, %464 : vector<8x128xf32>
    %c48 = arith.constant 48 : index
    %c0_93 = arith.constant 0 : index
    %466 = vector.load %arg14[%c48, %c0_93] : memref<64x128xf32, #tpu.memory_space<vmem>>, vector<8x128xf32>
    tpu.vector_store %arg14[%c48, %c0_93], %465 {strides = array<i32>} : memref<64x128xf32, #tpu.memory_space<vmem>>, vector<8x128xf32>,
    %467 = vector.extract_strided_slice %12 {offsets = [56, 0], sizes = [8, 128], strides = [1, 1]} : vector<64x128xf32> to vector<8x128xf32>
    %468 = vector.extract_strided_slice %25 {offsets = [56, 0], sizes = [8, 1], strides = [1, 1]} : vector<64x1xf32> to vector<8x1xf32>
    %cst_94 = arith.constant dense<0.000000e+00> : vector<8x128xf32>
    %469 = tpu.matmul %422, %0, %cst_94 {dimension_numbers = #tpu.dot_dimension_numbers<[1], [0], [0], [1], [0, 0, 1, 1], [], []>} : vector<8x32xf32>, vector<32x128xf32>, vector<8x128xf32> -> vector<8x128xf32>
    %470 = arith.addf %467, %469 : vector<8x128xf32>
    %471 = arith.negf %470 : vector<8x128xf32>
    %472 = math.exp %471 : vector<8x128xf32>
    %cst_95 = arith.constant 1.000000e+00 : f32
    %473 = vector.broadcast %cst_95 : f32 to vector<8x128xf32>
    %474 = arith.addf %473, %472 : vector<8x128xf32>
    %475 = arith.divf %473, %474 : vector<8x128xf32>
    %476 = math.tanh %470 : vector<8x128xf32>
    %477 = vector.extract_strided_slice %475 {offsets = [0, 0], sizes = [8, 32], strides = [1, 1]} : vector<8x128xf32> to vector<8x32xf32>
    %478 = vector.extract_strided_slice %475 {offsets = [0, 32], sizes = [8, 32], strides = [1, 1]} : vector<8x128xf32> to vector<8x32xf32>
    %479 = vector.extract_strided_slice %475 {offsets = [0, 96], sizes = [8, 32], strides = [1, 1]} : vector<8x128xf32> to vector<8x32xf32>
    %480 = vector.extract_strided_slice %476 {offsets = [0, 64], sizes = [8, 32], strides = [1, 1]} : vector<8x128xf32> to vector<8x32xf32>
    %481 = arith.mulf %478, %420 : vector<8x32xf32>
    %482 = arith.mulf %477, %480 : vector<8x32xf32>
    %483 = arith.addf %481, %482 : vector<8x32xf32>
    %484 = math.tanh %483 : vector<8x32xf32>
    %485 = arith.mulf %479, %484 : vector<8x32xf32>
    %486 = tpu.concatenate %485, %441 in 1 : vector<8x32xf32>, vector<8x32xf32> -> vector<8x64xf32>
    %cst_96 = arith.constant dense<0.000000e+00> : vector<8x128xf32>
    %487 = tpu.matmul %486, %1, %cst_96 {dimension_numbers = #tpu.dot_dimension_numbers<[1], [0], [0], [1], [0, 0, 1, 1], [], []>} : vector<8x64xf32>, vector<64x128xf32>, vector<8x128xf32> -> vector<8x128xf32>
    %488 = vector.broadcast %4 : vector<1x128xf32> to vector<8x128xf32>
    %489 = arith.addf %487, %488 : vector<8x128xf32>
    %490 = arith.negf %489 : vector<8x128xf32>
    %491 = math.exp %490 : vector<8x128xf32>
    %cst_97 = arith.constant 1.000000e+00 : f32
    %492 = vector.broadcast %cst_97 : f32 to vector<8x128xf32>
    %493 = arith.addf %492, %491 : vector<8x128xf32>
    %494 = arith.divf %492, %493 : vector<8x128xf32>
    %495 = math.tanh %489 : vector<8x128xf32>
    %496 = vector.extract_strided_slice %494 {offsets = [0, 0], sizes = [8, 32], strides = [1, 1]} : vector<8x128xf32> to vector<8x32xf32>
    %497 = vector.extract_strided_slice %494 {offsets = [0, 32], sizes = [8, 32], strides = [1, 1]} : vector<8x128xf32> to vector<8x32xf32>
    %498 = vector.extract_strided_slice %494 {offsets = [0, 96], sizes = [8, 32], strides = [1, 1]} : vector<8x128xf32> to vector<8x32xf32>
    %499 = vector.extract_strided_slice %495 {offsets = [0, 64], sizes = [8, 32], strides = [1, 1]} : vector<8x128xf32> to vector<8x32xf32>
    %500 = arith.mulf %497, %439 : vector<8x32xf32>
    %501 = arith.mulf %496, %499 : vector<8x32xf32>
    %502 = arith.addf %500, %501 : vector<8x32xf32>
    %503 = math.tanh %502 : vector<8x32xf32>
    %504 = arith.mulf %498, %503 : vector<8x32xf32>
    %505 = tpu.concatenate %504, %460 in 1 : vector<8x32xf32>, vector<8x32xf32> -> vector<8x64xf32>
    %cst_98 = arith.constant dense<0.000000e+00> : vector<8x128xf32>
    %506 = tpu.matmul %505, %2, %cst_98 {dimension_numbers = #tpu.dot_dimension_numbers<[1], [0], [0], [1], [0, 0, 1, 1], [], []>} : vector<8x64xf32>, vector<64x128xf32>, vector<8x128xf32> -> vector<8x128xf32>
    %507 = vector.broadcast %5 : vector<1x128xf32> to vector<8x128xf32>
    %508 = arith.addf %506, %507 : vector<8x128xf32>
    %509 = arith.negf %508 : vector<8x128xf32>
    %510 = math.exp %509 : vector<8x128xf32>
    %cst_99 = arith.constant 1.000000e+00 : f32
    %511 = vector.broadcast %cst_99 : f32 to vector<8x128xf32>
    %512 = arith.addf %511, %510 : vector<8x128xf32>
    %513 = arith.divf %511, %512 : vector<8x128xf32>
    %514 = math.tanh %508 : vector<8x128xf32>
    %515 = vector.extract_strided_slice %513 {offsets = [0, 0], sizes = [8, 32], strides = [1, 1]} : vector<8x128xf32> to vector<8x32xf32>
    %516 = vector.extract_strided_slice %513 {offsets = [0, 32], sizes = [8, 32], strides = [1, 1]} : vector<8x128xf32> to vector<8x32xf32>
    %517 = vector.extract_strided_slice %513 {offsets = [0, 96], sizes = [8, 32], strides = [1, 1]} : vector<8x128xf32> to vector<8x32xf32>
    %518 = vector.extract_strided_slice %514 {offsets = [0, 64], sizes = [8, 32], strides = [1, 1]} : vector<8x128xf32> to vector<8x32xf32>
    %519 = arith.mulf %516, %458 : vector<8x32xf32>
    %520 = arith.mulf %515, %518 : vector<8x32xf32>
    %521 = arith.addf %519, %520 : vector<8x32xf32>
    %522 = math.tanh %521 : vector<8x32xf32>
    %523 = arith.mulf %517, %522 : vector<8x32xf32>
    %524 = vector.broadcast %468 : vector<8x1xf32> to vector<8x32xf32>
    %525 = arith.mulf %523, %524 : vector<8x32xf32>
    %cst_100 = arith.constant dense<0.000000e+00> : vector<8x128xf32>
    %526 = tpu.matmul %525, %6, %cst_100 {dimension_numbers = #tpu.dot_dimension_numbers<[1], [0], [0], [1], [0, 0, 1, 1], [], []>} : vector<8x32xf32>, vector<32x128xf32>, vector<8x128xf32> -> vector<8x128xf32>
    %527 = vector.broadcast %7 : vector<1x128xf32> to vector<8x128xf32>
    %528 = arith.addf %526, %527 : vector<8x128xf32>
    %c56 = arith.constant 56 : index
    %c0_101 = arith.constant 0 : index
    %529 = vector.load %arg14[%c56, %c0_101] : memref<64x128xf32, #tpu.memory_space<vmem>>, vector<8x128xf32>
    tpu.vector_store %arg14[%c56, %c0_101], %528 {strides = array<i32>} : memref<64x128xf32, #tpu.memory_space<vmem>>, vector<8x128xf32>,
    return
  }
  func.func @transform_0(%arg0: i32) -> (i32, i32) {
    %c0_i32 = arith.constant 0 : i32
    %c0_i32_0 = arith.constant 0 : i32
    %c0_i32_1 = arith.constant 0 : i32
    return %c0_i32, %c0_i32_0 : i32, i32
  }
  func.func @transform_1(%arg0: i32) -> (i32, i32, i32) {
    %c0_i32 = arith.constant 0 : i32
    %c0_i32_0 = arith.constant 0 : i32
    %c0_i32_1 = arith.constant 0 : i32
    %c0_i32_2 = arith.constant 0 : i32
    return %c0_i32, %c0_i32_0, %c0_i32_1 : i32, i32, i32
  }
  func.func @transform_2(%arg0: i32) -> (i32, i32, i32) {
    %c0_i32 = arith.constant 0 : i32
    %c0_i32_0 = arith.constant 0 : i32
    %c0_i32_1 = arith.constant 0 : i32
    %c0_i32_2 = arith.constant 0 : i32
    return %c0_i32, %c0_i32_0, %c0_i32_1 : i32, i32, i32
  }
  func.func @transform_3(%arg0: i32) -> (i32, i32) {
    %c0_i32 = arith.constant 0 : i32
    %c0_i32_0 = arith.constant 0 : i32
    %c0_i32_1 = arith.constant 0 : i32
    return %c0_i32, %c0_i32_0 : i32, i32
  }
  func.func @transform_4(%arg0: i32) -> (i32, i32) {
    %c0_i32 = arith.constant 0 : i32
    %c0_i32_0 = arith.constant 0 : i32
    %c0_i32_1 = arith.constant 0 : i32
    return %c0_i32, %c0_i32_0 : i32, i32
  }
  func.func @transform_5(%arg0: i32) -> (i32, i32) {
    %c0_i32 = arith.constant 0 : i32
    %c0_i32_0 = arith.constant 0 : i32
    %c0_i32_1 = arith.constant 0 : i32
    return %c0_i32, %c0_i32_0 : i32, i32
  }
  func.func @transform_6(%arg0: i32) -> (i32, i32) {
    %c0_i32 = arith.constant 0 : i32
    %c0_i32_0 = arith.constant 0 : i32
    %c0_i32_1 = arith.constant 0 : i32
    return %c0_i32, %c0_i32_0 : i32, i32
  }
  func.func @transform_7(%arg0: i32) -> (i32, i32) {
    %c0_i32 = arith.constant 0 : i32
    %c0_i32_0 = arith.constant 0 : i32
    %c0_i32_1 = arith.constant 0 : i32
    return %c0_i32, %c0_i32_0 : i32, i32
  }
  func.func @transform_8(%arg0: i32) -> (i32, i32) {
    %c0_i32 = arith.constant 0 : i32
    %c0_i32_0 = arith.constant 0 : i32
    %c0_i32_1 = arith.constant 0 : i32
    return %c0_i32, %c0_i32_0 : i32, i32
  }
  func.func @transform_9(%arg0: i32) -> (i32, i32) {
    %c0_i32 = arith.constant 0 : i32
    %c0_i32_0 = arith.constant 0 : i32
    %c0_i32_1 = arith.constant 0 : i32
    return %c0_i32, %c0_i32_0 : i32, i32
  }
  func.func @transform_10(%arg0: i32) -> (i32, i32) {
    %c0_i32 = arith.constant 0 : i32
    %c0_i32_0 = arith.constant 0 : i32
    %c0_i32_1 = arith.constant 0 : i32
    return %c0_i32, %c0_i32_0 : i32, i32
  }
  func.func @transform_11(%arg0: i32) -> (i32, i32) {
    %c0_i32 = arith.constant 0 : i32
    %c0_i32_0 = arith.constant 0 : i32
    %c0_i32_1 = arith.constant 0 : i32
    return %c0_i32, %c0_i32_0 : i32, i32
  }
  func.func @transform_12(%arg0: i32) -> (i32, i32) {
    %c0_i32 = arith.constant 0 : i32
    %c0_i32_0 = arith.constant 0 : i32
    %c0_i32_1 = arith.constant 0 : i32
    return %c0_i32, %c0_i32_0 : i32, i32
  }
  func.func @transform_13(%arg0: i32) -> (i32, i32) {
    %c0_i32 = arith.constant 0 : i32
    %c0_i32_0 = arith.constant 0 : i32
    %c0_i32_1 = arith.constant 0 : i32
    return %c0_i32, %c0_i32_0 : i32, i32
  }
}

</mosaic_0001>

<llo_original>
// kernel: baseline_forward.1
$region0: #{baseline_forward.1}
  #allocation0 [shape = 'u32[]', space=smem, size = 0x4, offset = 0x4, fixed_abs, tag = 'smem constant byte address 0x4 - core index']
  #allocation1 [shape = 'u32[144,128]{1,0:T(1,128)}', space=vmem, size = 0x12000, scoped, tag = 'internal scratch']
  %s0 = inlined_call_operand.vmem [shape: f32[64,128], index: 0, kind: input, shape index: {}]
  %s1 = inlined_call_operand.vmem [shape: f32[3,8,32], index: 1, kind: input, shape index: {}]
  %s2 = inlined_call_operand.vmem [shape: f32[3,8,32], index: 2, kind: input, shape index: {}]
  %s3 = inlined_call_operand.vmem [shape: f32[64,1], index: 3, kind: input, shape index: {}]
  %s4 = inlined_call_operand.vmem [shape: f32[128,128], index: 4, kind: input, shape index: {}]
  %s5 = inlined_call_operand.vmem [shape: f32[32,128], index: 5, kind: input, shape index: {}]
  %s6 = inlined_call_operand.vmem [shape: f32[64,128], index: 6, kind: input, shape index: {}]
  %s7 = inlined_call_operand.vmem [shape: f32[64,128], index: 7, kind: input, shape index: {}]
  %s8 = inlined_call_operand.vmem [shape: f32[1,128], index: 8, kind: input, shape index: {}]
  %s9 = inlined_call_operand.vmem [shape: f32[1,128], index: 9, kind: input, shape index: {}]
  %s10 = inlined_call_operand.vmem [shape: f32[1,128], index: 10, kind: input, shape index: {}]
  %s11 = inlined_call_operand.vmem [shape: f32[32,128], index: 11, kind: input, shape index: {}]
  %s12 = inlined_call_operand.vmem [shape: f32[1,128], index: 12, kind: input, shape index: {}]
  %s13 = inlined_call_operand.vmem [shape: f32[64,128], index: 13, kind: output, shape index: {}]
  %s14 = sld [smem:[#allocation0]]
  $region62: #{baseline_forward.1} parent=0
    _
  %s16 = ssub.s32 1, %s14
  %s17 = scalar_select 0, %s16, %s14
  // Predicated region
  $region2: #{baseline_forward.1} parent=0 // pred_check
    _
  $region3: #{baseline_forward.1} parent=0 // pred_check_branch
    %19 = sbr.rel (0) target = $region5
  $region4: #{baseline_forward.1} parent=0 // pred_region
    _
  $region5: #{baseline_forward.1} parent=0 // pred_fallthru
    _
  // Predicated region
  $region6: #{baseline_forward.1} parent=0 // pred_check
    _
  $region7: #{baseline_forward.1} parent=0 // pred_check_branch
    %21 = sbr.rel (0) target = $region9
  $region8: #{baseline_forward.1} parent=0 // pred_region
    _
  $region9: #{baseline_forward.1} parent=0 // pred_fallthru
    _
  // Predicated region
  $region10: #{baseline_forward.1} parent=0 // pred_check
    _
  $region11: #{baseline_forward.1} parent=0 // pred_check_branch
    %23 = sbr.rel (0) target = $region13
  $region12: #{baseline_forward.1} parent=0 // pred_region
    _
  $region13: #{baseline_forward.1} parent=0 // pred_fallthru
    _
  // Predicated region
  $region14: #{baseline_forward.1} parent=0 // pred_check
    _
  $region15: #{baseline_forward.1} parent=0 // pred_check_branch
    %25 = sbr.rel (0) target = $region17
  $region16: #{baseline_forward.1} parent=0 // pred_region
    _
  $region17: #{baseline_forward.1} parent=0 // pred_fallthru
    _
  // Predicated region
  $region18: #{baseline_forward.1} parent=0 // pred_check
    _
  $region19: #{baseline_forward.1} parent=0 // pred_check_branch
    %27 = sbr.rel (0) target = $region21
  $region20: #{baseline_forward.1} parent=0 // pred_region
    _
  $region21: #{baseline_forward.1} parent=0 // pred_fallthru
    _
  // Predicated region
  $region22: #{baseline_forward.1} parent=0 // pred_check
    _
  $region23: #{baseline_forward.1} parent=0 // pred_check_branch
    %29 = sbr.rel (0) target = $region25
  $region24: #{baseline_forward.1} parent=0 // pred_region
    _
  $region25: #{baseline_forward.1} parent=0 // pred_fallthru
    _
  // Predicated region
  $region26: #{baseline_forward.1} parent=0 // pred_check
    _
  $region27: #{baseline_forward.1} parent=0 // pred_check_branch
    %31 = sbr.rel (0) target = $region29
  $region28: #{baseline_forward.1} parent=0 // pred_region
    _
  $region29: #{baseline_forward.1} parent=0 // pred_fallthru
    _
  // Predicated region
  $region30: #{baseline_forward.1} parent=0 // pred_check
    _
  $region31: #{baseline_forward.1} parent=0 // pred_check_branch
    %33 = sbr.rel (0) target = $region33
  $region32: #{baseline_forward.1} parent=0 // pred_region
    _
  $region33: #{baseline_forward.1} parent=0 // pred_fallthru
    _
  // Predicated region
  $region34: #{baseline_forward.1} parent=0 // pred_check
    _
  $region35: #{baseline_forward.1} parent=0 // pred_check_branch
    %35 = sbr.rel (0) target = $region37
  $region36: #{baseline_forward.1} parent=0 // pred_region
    _
  $region37: #{baseline_forward.1} parent=0 // pred_fallthru
    _
  // Predicated region
  $region38: #{baseline_forward.1} parent=0 // pred_check
    _
  $region39: #{baseline_forward.1} parent=0 // pred_check_branch
    %37 = sbr.rel (0) target = $region41
  $region40: #{baseline_forward.1} parent=0 // pred_region
    _
  $region41: #{baseline_forward.1} parent=0 // pred_fallthru
    _
  // Predicated region
  $region42: #{baseline_forward.1} parent=0 // pred_check
    _
  $region43: #{baseline_forward.1} parent=0 // pred_check_branch
    %39 = sbr.rel (0) target = $region45
  $region44: #{baseline_forward.1} parent=0 // pred_region
    _
  $region45: #{baseline_forward.1} parent=0 // pred_fallthru
    _
  // Predicated region
  $region46: #{baseline_forward.1} parent=0 // pred_check
    _
  $region47: #{baseline_forward.1} parent=0 // pred_check_branch
    %41 = sbr.rel (0) target = $region49
  $region48: #{baseline_forward.1} parent=0 // pred_region
    _
  $region49: #{baseline_forward.1} parent=0 // pred_fallthru
    _
  // Predicated region
  $region50: #{baseline_forward.1} parent=0 // pred_check
    _
  $region51: #{baseline_forward.1} parent=0 // pred_check_branch
    %43 = sbr.rel (0) target = $region53
  $region52: #{baseline_forward.1} parent=0 // pred_region
    _
  $region53: #{baseline_forward.1} parent=0 // pred_fallthru
    _
  %v44 = vld [vmem:[%s5] sm:$0xff]
  %v45 = vld [vmem:[%s5 + $0x8] sm:$0xff]
  %v46 = vld [vmem:[%s5 + $0x10] sm:$0xff]
  %v47 = vld [vmem:[%s5 + $0x18] sm:$0xff]
  %v48 = vld [vmem:[%s6] sm:$0xff]
  %v49 = vld [vmem:[%s6 + $0x8] sm:$0xff]
  %v50 = vld [vmem:[%s6 + $0x10] sm:$0xff]
  %v51 = vld [vmem:[%s6 + $0x18] sm:$0xff]
  %v52 = vld [vmem:[%s6 + $0x20] sm:$0xff]
  %v53 = vld [vmem:[%s6 + $0x28] sm:$0xff]
  %v54 = vld [vmem:[%s6 + $0x30] sm:$0xff]
  %v55 = vld [vmem:[%s6 + $0x38] sm:$0xff]
  %v56 = vld [vmem:[%s7] sm:$0xff]
  %v57 = vld [vmem:[%s7 + $0x8] sm:$0xff]
  %v58 = vld [vmem:[%s7 + $0x10] sm:$0xff]
  %v59 = vld [vmem:[%s7 + $0x18] sm:$0xff]
  %v60 = vld [vmem:[%s7 + $0x20] sm:$0xff]
  %v61 = vld [vmem:[%s7 + $0x28] sm:$0xff]
  %v62 = vld [vmem:[%s7 + $0x30] sm:$0xff]
  %v63 = vld [vmem:[%s7 + $0x38] sm:$0xff]
  %v64 = vld [vmem:[%s8] sm:$0x1]
  %v65 = vld [vmem:[%s9] sm:$0x1]
  %v66 = vld [vmem:[%s10] sm:$0x1]
  %v67 = vld [vmem:[%s11] sm:$0xff]
  %v68 = vld [vmem:[%s11 + $0x8] sm:$0xff]
  %v69 = vld [vmem:[%s11 + $0x10] sm:$0xff]
  %v70 = vld [vmem:[%s11 + $0x18] sm:$0xff]
  %v71 = vld [vmem:[%s12] sm:$0x1]
  %v72 = vld [vmem:[%s0] sm:$0xff]
  %v73 = vld [vmem:[%s0 + $0x8] sm:$0xff]
  %v74 = vld [vmem:[%s0 + $0x10] sm:$0xff]
  %v75 = vld [vmem:[%s0 + $0x18] sm:$0xff]
  %v76 = vld [vmem:[%s0 + $0x20] sm:$0xff]
  %v77 = vld [vmem:[%s0 + $0x28] sm:$0xff]
  %v78 = vld [vmem:[%s0 + $0x30] sm:$0xff]
  %v79 = vld [vmem:[%s0 + $0x38] sm:$0xff]
  %v80 = vld [vmem:[%s4] sm:$0xff]
  %v81 = vld [vmem:[%s4 + $0x8] sm:$0xff]
  %v82 = vld [vmem:[%s4 + $0x10] sm:$0xff]
  %v83 = vld [vmem:[%s4 + $0x18] sm:$0xff]
  %v84 = vld [vmem:[%s4 + $0x20] sm:$0xff]
  %v85 = vld [vmem:[%s4 + $0x28] sm:$0xff]
  %v86 = vld [vmem:[%s4 + $0x30] sm:$0xff]
  %v87 = vld [vmem:[%s4 + $0x38] sm:$0xff]
  %v88 = vld [vmem:[%s4 + $0x40] sm:$0xff]
  %v89 = vld [vmem:[%s4 + $0x48] sm:$0xff]
  %v90 = vld [vmem:[%s4 + $0x50] sm:$0xff]
  %v91 = vld [vmem:[%s4 + $0x58] sm:$0xff]
  %v92 = vld [vmem:[%s4 + $0x60] sm:$0xff]
  %v93 = vld [vmem:[%s4 + $0x68] sm:$0xff]
  %v94 = vld [vmem:[%s4 + $0x70] sm:$0xff]
  %v95 = vld [vmem:[%s4 + $0x78] sm:$0xff]
  %v97 = vlaneseq
  %v98 = vshrl.u32 %v97, 7
  %v99 = vsub.s32 0, %v98
  %v100 = vrot.slane %v64, %v99
  %102 = vmatprep.subr.mxu0 0.0
  %103 = vmatpush1.msra.mxu0 %v80
  %104 = vmatprep.subr.mxu0 0.0
  %105 = vmatpush1.msra.mxu0 %v81
  %106 = vmatprep.subr.mxu0 0.0
  %107 = vmatpush1.msra.mxu0 %v82
  %108 = vmatprep.subr.mxu0 0.0
  %109 = vmatpush1.msra.mxu0 %v83
  %110 = vmatprep.subr.mxu0 0.0
  %111 = vmatpush1.msra.mxu0 %v84
  %112 = vmatprep.subr.mxu0 0.0
  %113 = vmatpush1.msra.mxu0 %v85
  %114 = vmatprep.subr.mxu0 0.0
  %115 = vmatpush1.msra.mxu0 %v86
  %116 = vmatprep.subr.mxu0 0.0
  %117 = vmatpush1.msra.mxu0 %v87
  %118 = vmatprep.subr.mxu0 0.0
  %119 = vmatpush1.msra.mxu0 %v88
  %120 = vmatprep.subr.mxu0 0.0
  %121 = vmatpush1.msra.mxu0 %v89
  %122 = vmatprep.subr.mxu0 0.0
  %123 = vmatpush1.msra.mxu0 %v90
  %124 = vmatprep.subr.mxu0 0.0
  %125 = vmatpush1.msra.mxu0 %v91
  %126 = vmatprep.subr.mxu0 0.0
  %127 = vmatpush1.msra.mxu0 %v92
  %128 = vmatprep.subr.mxu0 0.0
  %129 = vmatpush1.msra.mxu0 %v93
  %130 = vmatprep.subr.mxu0 0.0
  %131 = vmatpush1.msra.mxu0 %v94
  %132 = vmatprep.subr.mxu0 0.0
  %133 = vmatpush1.msra.mxu0 %v95
  %134 = vmatprep.subr.mxu0 0.0
  %135 = vmatpush1.msra.mxu0 0.0
  %136 = vmatprep.subr.mxu0 0.0
  %137 = vmatpush1.msra.mxu0 0.0
  %138 = vmatprep.subr.mxu0 0.0
  %139 = vmatpush1.msra.mxu0 0.0
  %140 = vmatprep.subr.mxu0 0.0
  %141 = vmatpush1.msra.mxu0 0.0
  %142 = vmatprep.subr.mxu0 0.0
  %143 = vmatpush1.msra.mxu0 0.0
  %144 = vmatprep.subr.mxu0 0.0
  %145 = vmatpush1.msra.mxu0 0.0
  %146 = vmatprep.subr.mxu0 0.0
  %147 = vmatpush1.msra.mxu0 0.0
  %148 = vmatprep.subr.mxu0 0.0
  %149 = vmatpush1.msra.mxu0 0.0
  %150 = vmatprep.subr.mxu0 0.0
  %151 = vmatpush1.msra.mxu0 0.0
  %152 = vmatprep.subr.mxu0 0.0
  %153 = vmatpush1.msra.mxu0 0.0
  %154 = vmatprep.subr.mxu0 0.0
  %155 = vmatpush1.msra.mxu0 0.0
  %156 = vmatprep.subr.mxu0 0.0
  %157 = vmatpush1.msra.mxu0 0.0
  %158 = vmatprep.subr.mxu0 0.0
  %159 = vmatpush1.msra.mxu0 0.0
  %160 = vmatprep.subr.mxu0 0.0
  %161 = vmatpush1.msra.mxu0 0.0
  %162 = vmatprep.subr.mxu0 0.0
  %163 = vmatpush1.msra.mxu0 0.0
  %164 = vmatprep.subr.mxu0 0.0
  %165 = vmatpush1.msra.mxu0 0.0
  %166 = vmatprep.mubr.f32.mxu0 0.0
  %167 = vmatmul.mubr.f32.gmra.mrb[0].mxu0 %v72
  %v168 = vpop.f32.mrb[0].mxu0
  %v169 = vadd.f32 %v100, %v168
  %v170 = vpop.f32.mrb[0].mxu0
  %171 = vmatprep.mubr.f32.mxu0 0.0
  %172 = vmatmul.mubr.f32.gmra.mrb[0].mxu0 %v73
  %v173 = vpop.f32.mrb[0].mxu0
  %v174 = vadd.f32 %v100, %v173
  %v175 = vpop.f32.mrb[0].mxu0
  %176 = vmatprep.mubr.f32.mxu0 0.0
  %177 = vmatmul.mubr.f32.gmra.mrb[0].mxu0 %v74
  %v178 = vpop.f32.mrb[0].mxu0
  %v179 = vadd.f32 %v100, %v178
  %v180 = vpop.f32.mrb[0].mxu0
  %181 = vmatprep.mubr.f32.mxu0 0.0
  %182 = vmatmul.mubr.f32.gmra.mrb[0].mxu0 %v75
  %v183 = vpop.f32.mrb[0].mxu0
  %v184 = vadd.f32 %v100, %v183
  %v185 = vpop.f32.mrb[0].mxu0
  %186 = vmatprep.mubr.f32.mxu0 0.0
  %187 = vmatmul.mubr.f32.gmra.mrb[0].mxu0 %v76
  %v188 = vpop.f32.mrb[0].mxu0
  %v189 = vadd.f32 %v100, %v188
  %v190 = vpop.f32.mrb[0].mxu0
  %191 = vmatprep.mubr.f32.mxu0 0.0
  %192 = vmatmul.mubr.f32.gmra.mrb[0].mxu0 %v77
  %v193 = vpop.f32.mrb[0].mxu0
  %v194 = vadd.f32 %v100, %v193
  %v195 = vpop.f32.mrb[0].mxu0
  %196 = vmatprep.mubr.f32.mxu0 0.0
  %197 = vmatmul.mubr.f32.gmra.mrb[0].mxu0 %v78
  %v198 = vpop.f32.mrb[0].mxu0
  %v199 = vadd.f32 %v100, %v198
  %v200 = vpop.f32.mrb[0].mxu0
  %201 = vmatprep.mubr.f32.mxu0 0.0
  %202 = vmatmul.mubr.f32.gmra.mrb[0].mxu0 %v79
  %v203 = vpop.f32.mrb[0].mxu0
  %v204 = vadd.f32 %v100, %v203
  %v205 = vpop.f32.mrb[0].mxu0
  %206 = vdwg.mxu0
  %v207 = vld [vmem:[%s1] sm:$0xff]
  %s208 = scalar_lea.vmem %s1, 8
  %v209 = vld [vmem:[%s208] sm:$0xff]
  %s210 = scalar_lea.vmem %s1, 16
  %v211 = vld [vmem:[%s210] sm:$0xff]
  %v212 = vld [vmem:[%s2] sm:$0xff]
  %s213 = scalar_lea.vmem %s2, 8
  %v214 = vld [vmem:[%s213] sm:$0xff]
  %s215 = scalar_lea.vmem %s2, 16
  %v216 = vld [vmem:[%s215] sm:$0xff]
  %v217 = vld [vmem:[%s3] sm:$0xff]
  %v218 = vld [vmem:[%s3 + $0x8] sm:$0xff]
  %v219 = vld [vmem:[%s3 + $0x10] sm:$0xff]
  %v220 = vld [vmem:[%s3 + $0x18] sm:$0xff]
  %v221 = vld [vmem:[%s3 + $0x20] sm:$0xff]
  %v222 = vld [vmem:[%s3 + $0x28] sm:$0xff]
  %v223 = vld [vmem:[%s3 + $0x30] sm:$0xff]
  %v224 = vld [vmem:[%s3 + $0x38] sm:$0xff]
  %vm225 = vcmask 261120
  %v227 = vsel %vm225, %v207, 0
  %229 = vmatprep.subr.mxu0 0.0
  %230 = vmatpush1.msra.mxu0 %v44
  %231 = vmatprep.subr.mxu0 0.0
  %232 = vmatpush1.msra.mxu0 %v45
  %233 = vmatprep.subr.mxu0 0.0
  %234 = vmatpush1.msra.mxu0 %v46
  %235 = vmatprep.subr.mxu0 0.0
  %236 = vmatpush1.msra.mxu0 %v47
  %237 = vmatprep.subr.mxu0 0.0
  %238 = vmatpush1.msra.mxu0 0.0
  %239 = vmatprep.subr.mxu0 0.0
  %240 = vmatpush1.msra.mxu0 0.0
  %241 = vmatprep.subr.mxu0 0.0
  %242 = vmatpush1.msra.mxu0 0.0
  %243 = vmatprep.subr.mxu0 0.0
  %244 = vmatpush1.msra.mxu0 0.0
  %245 = vmatprep.subr.mxu0 0.0
  %246 = vmatpush1.msra.mxu0 0.0
  %247 = vmatprep.subr.mxu0 0.0
  %248 = vmatpush1.msra.mxu0 0.0
  %249 = vmatprep.subr.mxu0 0.0
  %250 = vmatpush1.msra.mxu0 0.0
  %251 = vmatprep.subr.mxu0 0.0
  %252 = vmatpush1.msra.mxu0 0.0
  %253 = vmatprep.subr.mxu0 0.0
  %254 = vmatpush1.msra.mxu0 0.0
  %255 = vmatprep.subr.mxu0 0.0
  %256 = vmatpush1.msra.mxu0 0.0
  %257 = vmatprep.subr.mxu0 0.0
  %258 = vmatpush1.msra.mxu0 0.0
  %259 = vmatprep.subr.mxu0 0.0
  %260 = vmatpush1.msra.mxu0 0.0
  %261 = vmatprep.subr.mxu0 0.0
  %262 = vmatpush1.msra.mxu0 0.0
  %263 = vmatprep.subr.mxu0 0.0
  %264 = vmatpush1.msra.mxu0 0.0
  %265 = vmatprep.subr.mxu0 0.0
  %266 = vmatpush1.msra.mxu0 0.0
  %267 = vmatprep.subr.mxu0 0.0
  %268 = vmatpush1.msra.mxu0 0.0
  %269 = vmatprep.subr.mxu0 0.0
  %270 = vmatpush1.msra.mxu0 0.0
  %271 = vmatprep.subr.mxu0 0.0
  %272 = vmatpush1.msra.mxu0 0.0
  %273 = vmatprep.subr.mxu0 0.0
  %274 = vmatpush1.msra.mxu0 0.0
  %275 = vmatprep.subr.mxu0 0.0
  %276 = vmatpush1.msra.mxu0 0.0
  %277 = vmatprep.subr.mxu0 0.0
  %278 = vmatpush1.msra.mxu0 0.0
  %279 = vmatprep.subr.mxu0 0.0
  %280 = vmatpush1.msra.mxu0 0.0
  %281 = vmatprep.subr.mxu0 0.0
  %282 = vmatpush1.msra.mxu0 0.0
  %283 = vmatprep.subr.mxu0 0.0
  %284 = vmatpush1.msra.mxu0 0.0
  %285 = vmatprep.subr.mxu0 0.0
  %286 = vmatpush1.msra.mxu0 0.0
  %287 = vmatprep.subr.mxu0 0.0
  %288 = vmatpush1.msra.mxu0 0.0
  %289 = vmatprep.subr.mxu0 0.0
  %290 = vmatpush1.msra.mxu0 0.0
  %291 = vmatprep.subr.mxu0 0.0
  %292 = vmatpush1.msra.mxu0 0.0
  %293 = vmatprep.mubr.f32.mxu0 0.0
  %294 = vmatmul.mubr.f32.gmra.mrb[0].mxu0 %v227
  %v295 = vpop.f32.mrb[0].mxu0
  %v296 = vadd.f32 0.0, %v295
  %v297 = vpop.f32.mrb[0].mxu0
  %298 = vdwg.mxu0
  %v299 = vadd.f32 %v169, %v296
  %v300 = vxor.u32 %v299, 2147483648
  %v301 = vmul.f32 %v300, 1.442695
  %v302 = vpow.pop %v301
  %v303 = vadd.f32 %v302, 1.0
  %v304 = vrcp.pop %v303
  %v305 = vmul.f32 1.0, %v304
  %v306 = vtanh.pop %v299
  %308 = vrot.lane.b32.xlu0 %v212, 32
  %v309 = vpop.permute.xlu0 %308
  %v311 = vmul.f32 %v305, %v309
  %313 = vrot.lane.b32.xlu0 %v306, 64
  %v314 = vpop.permute.xlu0 %313
  %v316 = vmul.f32 %v305, %v314
  %318 = vrot.lane.b32.xlu0 %v316, 32
  %v319 = vpop.permute.xlu0 %318
  %v321 = vadd.f32 %v311, %v319
  %v322 = vtanh.pop %v321
  %324 = vrot.lane.b32.xlu0 %v322, 64
  %v325 = vpop.permute.xlu0 %324
  %v327 = vmul.f32 %v305, %v325
  %329 = vrot.lane.b32.xlu0 %v327, 32
  %v330 = vpop.permute.xlu0 %329
  %333 = vrot.lane.b32.xlu0 %v209, 32
  %v334 = vpop.permute.xlu0 %333
  %v336 = vsel %vm225, %v330, %v334
  %v338 = vlaneseq
  %v339 = vshrl.u32 %v338, 7
  %v340 = vsub.s32 0, %v339
  %v341 = vrot.slane %v65, %v340
  %vm343 = vcmask 523264
  %v345 = vsel %vm343, %v336, 0
  %347 = vmatprep.subr.mxu0 0.0
  %348 = vmatpush1.msra.mxu0 %v48
  %349 = vmatprep.subr.mxu0 0.0
  %350 = vmatpush1.msra.mxu0 %v49
  %351 = vmatprep.subr.mxu0 0.0
  %352 = vmatpush1.msra.mxu0 %v50
  %353 = vmatprep.subr.mxu0 0.0
  %354 = vmatpush1.msra.mxu0 %v51
  %355 = vmatprep.subr.mxu0 0.0
  %356 = vmatpush1.msra.mxu0 %v52
  %357 = vmatprep.subr.mxu0 0.0
  %358 = vmatpush1.msra.mxu0 %v53
  %359 = vmatprep.subr.mxu0 0.0
  %360 = vmatpush1.msra.mxu0 %v54
  %361 = vmatprep.subr.mxu0 0.0
  %362 = vmatpush1.msra.mxu0 %v55
  %363 = vmatprep.subr.mxu0 0.0
  %364 = vmatpush1.msra.mxu0 0.0
  %365 = vmatprep.subr.mxu0 0.0
  %366 = vmatpush1.msra.mxu0 0.0
  %367 = vmatprep.subr.mxu0 0.0
  %368 = vmatpush1.msra.mxu0 0.0
  %369 = vmatprep.subr.mxu0 0.0
  %370 = vmatpush1.msra.mxu0 0.0
  %371 = vmatprep.subr.mxu0 0.0
  %372 = vmatpush1.msra.mxu0 0.0
  %373 = vmatprep.subr.mxu0 0.0
  %374 = vmatpush1.msra.mxu0 0.0
  %375 = vmatprep.subr.mxu0 0.0
  %376 = vmatpush1.msra.mxu0 0.0
  %377 = vmatprep.subr.mxu0 0.0
  %378 = vmatpush1.msra.mxu0 0.0
  %379 = vmatprep.subr.mxu0 0.0
  %380 = vmatpush1.msra.mxu0 0.0
  %381 = vmatprep.subr.mxu0 0.0
  %382 = vmatpush1.msra.mxu0 0.0
  %383 = vmatprep.subr.mxu0 0.0
  %384 = vmatpush1.msra.mxu0 0.0
  %385 = vmatprep.subr.mxu0 0.0
  %386 = vmatpush1.msra.mxu0 0.0
  %387 = vmatprep.subr.mxu0 0.0
  %388 = vmatpush1.msra.mxu0 0.0
  %389 = vmatprep.subr.mxu0 0.0
  %390 = vmatpush1.msra.mxu0 0.0
  %391 = vmatprep.subr.mxu0 0.0
  %392 = vmatpush1.msra.mxu0 0.0
  %393 = vmatprep.subr.mxu0 0.0
  %394 = vmatpush1.msra.mxu0 0.0
  %395 = vmatprep.subr.mxu0 0.0
  %396 = vmatpush1.msra.mxu0 0.0
  %397 = vmatprep.subr.mxu0 0.0
  %398 = vmatpush1.msra.mxu0 0.0
  %399 = vmatprep.subr.mxu0 0.0
  %400 = vmatpush1.msra.mxu0 0.0
  %401 = vmatprep.subr.mxu0 0.0
  %402 = vmatpush1.msra.mxu0 0.0
  %403 = vmatprep.subr.mxu0 0.0
  %404 = vmatpush1.msra.mxu0 0.0
  %405 = vmatprep.subr.mxu0 0.0
  %406 = vmatpush1.msra.mxu0 0.0
  %407 = vmatprep.subr.mxu0 0.0
  %408 = vmatpush1.msra.mxu0 0.0
  %409 = vmatprep.subr.mxu0 0.0
  %410 = vmatpush1.msra.mxu0 0.0
  %411 = vmatprep.mubr.f32.mxu0 0.0
  %412 = vmatmul.mubr.f32.gmra.mrb[0].mxu0 %v345
  %v413 = vpop.f32.mrb[0].mxu0
  %v414 = vadd.f32 %v341, %v413
  %v415 = vpop.f32.mrb[0].mxu0
  %416 = vdwg.mxu0
  %v417 = vxor.u32 %v414, 2147483648
  %v418 = vmul.f32 %v417, 1.442695
  %v419 = vpow.pop %v418
  %v420 = vadd.f32 %v419, 1.0
  %v421 = vrcp.pop %v420
  %v422 = vmul.f32 1.0, %v421
  %v423 = vtanh.pop %v414
  %425 = vrot.lane.b32.xlu0 %v214, 32
  %v426 = vpop.permute.xlu0 %425
  %v428 = vmul.f32 %v422, %v426
  %430 = vrot.lane.b32.xlu0 %v423, 64
  %v431 = vpop.permute.xlu0 %430
  %v433 = vmul.f32 %v422, %v431
  %435 = vrot.lane.b32.xlu0 %v433, 32
  %v436 = vpop.permute.xlu0 %435
  %v438 = vadd.f32 %v428, %v436
  %v439 = vtanh.pop %v438
  %441 = vrot.lane.b32.xlu0 %v439, 64
  %v442 = vpop.permute.xlu0 %441
  %v444 = vmul.f32 %v422, %v442
  %446 = vrot.lane.b32.xlu0 %v444, 32
  %v447 = vpop.permute.xlu0 %446
  %450 = vrot.lane.b32.xlu0 %v211, 32
  %v451 = vpop.permute.xlu0 %450
  %v453 = vsel %vm225, %v447, %v451
  %v455 = vlaneseq
  %v456 = vshrl.u32 %v455, 7
  %v457 = vsub.s32 0, %v456
  %v458 = vrot.slane %v66, %v457
  %v461 = vsel %vm343, %v453, 0
  %463 = vmatprep.subr.mxu0 0.0
  %464 = vmatpush1.msra.mxu0 %v56
  %465 = vmatprep.subr.mxu0 0.0
  %466 = vmatpush1.msra.mxu0 %v57
  %467 = vmatprep.subr.mxu0 0.0
  %468 = vmatpush1.msra.mxu0 %v58
  %469 = vmatprep.subr.mxu0 0.0
  %470 = vmatpush1.msra.mxu0 %v59
  %471 = vmatprep.subr.mxu0 0.0
  %472 = vmatpush1.msra.mxu0 %v60
  %473 = vmatprep.subr.mxu0 0.0
  %474 = vmatpush1.msra.mxu0 %v61
  %475 = vmatprep.subr.mxu0 0.0
  %476 = vmatpush1.msra.mxu0 %v62
  %477 = vmatprep.subr.mxu0 0.0
  %478 = vmatpush1.msra.mxu0 %v63
  %479 = vmatprep.subr.mxu0 0.0
  %480 = vmatpush1.msra.mxu0 0.0
  %481 = vmatprep.subr.mxu0 0.0
  %482 = vmatpush1.msra.mxu0 0.0
  %483 = vmatprep.subr.mxu0 0.0
  %484 = vmatpush1.msra.mxu0 0.0
  %485 = vmatprep.subr.mxu0 0.0
  %486 = vmatpush1.msra.mxu0 0.0
  %487 = vmatprep.subr.mxu0 0.0
  %488 = vmatpush1.msra.mxu0 0.0
  %489 = vmatprep.subr.mxu0 0.0
  %490 = vmatpush1.msra.mxu0 0.0
  %491 = vmatprep.subr.mxu0 0.0
  %492 = vmatpush1.msra.mxu0 0.0
  %493 = vmatprep.subr.mxu0 0.0
  %494 = vmatpush1.msra.mxu0 0.0
  %495 = vmatprep.subr.mxu0 0.0
  %496 = vmatpush1.msra.mxu0 0.0
  %497 = vmatprep.subr.mxu0 0.0
  %498 = vmatpush1.msra.mxu0 0.0
  %499 = vmatprep.subr.mxu0 0.0
  %500 = vmatpush1.msra.mxu0 0.0
  %501 = vmatprep.subr.mxu0 0.0
  %502 = vmatpush1.msra.mxu0 0.0
  %503 = vmatprep.subr.mxu0 0.0
  %504 = vmatpush1.msra.mxu0 0.0
  %505 = vmatprep.subr.mxu0 0.0
  %506 = vmatpush1.msra.mxu0 0.0
  %507 = vmatprep.subr.mxu0 0.0
  %508 = vmatpush1.msra.mxu0 0.0
  %509 = vmatprep.subr.mxu0 0.0
  %510 = vmatpush1.msra.mxu0 0.0
  %511 = vmatprep.subr.mxu0 0.0
  %512 = vmatpush1.msra.mxu0 0.0
  %513 = vmatprep.subr.mxu0 0.0
  %514 = vmatpush1.msra.mxu0 0.0
  %515 = vmatprep.subr.mxu0 0.0
  %516 = vmatpush1.msra.mxu0 0.0
  %517 = vmatprep.subr.mxu0 0.0
  %518 = vmatpush1.msra.mxu0 0.0
  %519 = vmatprep.subr.mxu0 0.0
  %520 = vmatpush1.msra.mxu0 0.0
  %521 = vmatprep.subr.mxu0 0.0
  %522 = vmatpush1.msra.mxu0 0.0
  %523 = vmatprep.subr.mxu0 0.0
  %524 = vmatpush1.msra.mxu0 0.0
  %525 = vmatprep.subr.mxu0 0.0
  %526 = vmatpush1.msra.mxu0 0.0
  %527 = vmatprep.mubr.f32.mxu0 0.0
  %528 = vmatmul.mubr.f32.gmra.mrb[0].mxu0 %v461
  %v529 = vpop.f32.mrb[0].mxu0
  %v530 = vadd.f32 %v458, %v529
  %v531 = vpop.f32.mrb[0].mxu0
  %532 = vdwg.mxu0
  %v533 = vxor.u32 %v530, 2147483648
  %v534 = vmul.f32 %v533, 1.442695
  %v535 = vpow.pop %v534
  %v536 = vadd.f32 %v535, 1.0
  %v537 = vrcp.pop %v536
  %v538 = vmul.f32 1.0, %v537
  %v539 = vtanh.pop %v530
  %541 = vrot.lane.b32.xlu0 %v216, 32
  %v542 = vpop.permute.xlu0 %541
  %v544 = vmul.f32 %v538, %v542
  %546 = vrot.lane.b32.xlu0 %v539, 64
  %v547 = vpop.permute.xlu0 %546
  %v549 = vmul.f32 %v538, %v547
  %551 = vrot.lane.b32.xlu0 %v549, 32
  %v552 = vpop.permute.xlu0 %551
  %v554 = vadd.f32 %v544, %v552
  %v555 = vtanh.pop %v554
  %557 = vrot.lane.b32.xlu0 %v555, 64
  %v558 = vpop.permute.xlu0 %557
  %v560 = vmul.f32 %v538, %v558
  %562 = vset.pattern.permute.xlu0 0
  %563 = vperm.xlu0 %562, %v217
  %v564 = vpop.permute.xlu0 %563
  %v566 = vmul.f32 %v560, %v564
  %v568 = vlaneseq
  %v569 = vshrl.u32 %v568, 7
  %v570 = vsub.s32 0, %v569
  %v571 = vrot.slane %v71, %v570
  %574 = vrot.lane.b32.xlu0 %v566, 32
  %v575 = vpop.permute.xlu0 %574
  %v576 = vsel %vm225, %v575, 0
  %578 = vmatprep.subr.mxu0 0.0
  %579 = vmatpush1.msra.mxu0 %v67
  %580 = vmatprep.subr.mxu0 0.0
  %581 = vmatpush1.msra.mxu0 %v68
  %582 = vmatprep.subr.mxu0 0.0
  %583 = vmatpush1.msra.mxu0 %v69
  %584 = vmatprep.subr.mxu0 0.0
  %585 = vmatpush1.msra.mxu0 %v70
  %586 = vmatprep.subr.mxu0 0.0
  %587 = vmatpush1.msra.mxu0 0.0
  %588 = vmatprep.subr.mxu0 0.0
  %589 = vmatpush1.msra.mxu0 0.0
  %590 = vmatprep.subr.mxu0 0.0
  %591 = vmatpush1.msra.mxu0 0.0
  %592 = vmatprep.subr.mxu0 0.0
  %593 = vmatpush1.msra.mxu0 0.0
  %594 = vmatprep.subr.mxu0 0.0
  %595 = vmatpush1.msra.mxu0 0.0
  %596 = vmatprep.subr.mxu0 0.0
  %597 = vmatpush1.msra.mxu0 0.0
  %598 = vmatprep.subr.mxu0 0.0
  %599 = vmatpush1.msra.mxu0 0.0
  %600 = vmatprep.subr.mxu0 0.0
  %601 = vmatpush1.msra.mxu0 0.0
  %602 = vmatprep.subr.mxu0 0.0
  %603 = vmatpush1.msra.mxu0 0.0
  %604 = vmatprep.subr.mxu0 0.0
  %605 = vmatpush1.msra.mxu0 0.0
  %606 = vmatprep.subr.mxu0 0.0
  %607 = vmatpush1.msra.mxu0 0.0
  %608 = vmatprep.subr.mxu0 0.0
  %609 = vmatpush1.msra.mxu0 0.0
  %610 = vmatprep.subr.mxu0 0.0
  %611 = vmatpush1.msra.mxu0 0.0
  %612 = vmatprep.subr.mxu0 0.0
  %613 = vmatpush1.msra.mxu0 0.0
  %614 = vmatprep.subr.mxu0 0.0
  %615 = vmatpush1.msra.mxu0 0.0
  %616 = vmatprep.subr.mxu0 0.0
  %617 = vmatpush1.msra.mxu0 0.0
  %618 = vmatprep.subr.mxu0 0.0
  %619 = vmatpush1.msra.mxu0 0.0
  %620 = vmatprep.subr.mxu0 0.0
  %621 = vmatpush1.msra.mxu0 0.0
  %622 = vmatprep.subr.mxu0 0.0
  %623 = vmatpush1.msra.mxu0 0.0
  %624 = vmatprep.subr.mxu0 0.0
  %625 = vmatpush1.msra.mxu0 0.0
  %626 = vmatprep.subr.mxu0 0.0
  %627 = vmatpush1.msra.mxu0 0.0
  %628 = vmatprep.subr.mxu0 0.0
  %629 = vmatpush1.msra.mxu0 0.0
  %630 = vmatprep.subr.mxu0 0.0
  %631 = vmatpush1.msra.mxu0 0.0
  %632 = vmatprep.subr.mxu0 0.0
  %633 = vmatpush1.msra.mxu0 0.0
  %634 = vmatprep.subr.mxu0 0.0
  %635 = vmatpush1.msra.mxu0 0.0
  %636 = vmatprep.subr.mxu0 0.0
  %637 = vmatpush1.msra.mxu0 0.0
  %638 = vmatprep.subr.mxu0 0.0
  %639 = vmatpush1.msra.mxu0 0.0
  %640 = vmatprep.subr.mxu0 0.0
  %641 = vmatpush1.msra.mxu0 0.0
  %642 = vmatprep.mubr.f32.mxu0 0.0
  %643 = vmatmul.mubr.f32.gmra.mrb[0].mxu0 %v576
  %v644 = vpop.f32.mrb[0].mxu0
  %v645 = vadd.f32 %v571, %v644
  %v646 = vpop.f32.mrb[0].mxu0
  %647 = vdwg.mxu0
  %648 = vst [vmem:[%s13] sm:$0xff] %v645
  %v649 = vsel %vm225, %v330, 0
  %651 = vmatprep.subr.mxu0 0.0
  %652 = vmatpush1.msra.mxu0 %v44
  %653 = vmatprep.subr.mxu0 0.0
  %654 = vmatpush1.msra.mxu0 %v45
  %655 = vmatprep.subr.mxu0 0.0
  %656 = vmatpush1.msra.mxu0 %v46
  %657 = vmatprep.subr.mxu0 0.0
  %658 = vmatpush1.msra.mxu0 %v47
  %659 = vmatprep.subr.mxu0 0.0
  %660 = vmatpush1.msra.mxu0 0.0
  %661 = vmatprep.subr.mxu0 0.0
  %662 = vmatpush1.msra.mxu0 0.0
  %663 = vmatprep.subr.mxu0 0.0
  %664 = vmatpush1.msra.mxu0 0.0
  %665 = vmatprep.subr.mxu0 0.0
  %666 = vmatpush1.msra.mxu0 0.0
  %667 = vmatprep.subr.mxu0 0.0
  %668 = vmatpush1.msra.mxu0 0.0
  %669 = vmatprep.subr.mxu0 0.0
  %670 = vmatpush1.msra.mxu0 0.0
  %671 = vmatprep.subr.mxu0 0.0
  %672 = vmatpush1.msra.mxu0 0.0
  %673 = vmatprep.subr.mxu0 0.0
  %674 = vmatpush1.msra.mxu0 0.0
  %675 = vmatprep.subr.mxu0 0.0
  %676 = vmatpush1.msra.mxu0 0.0
  %677 = vmatprep.subr.mxu0 0.0
  %678 = vmatpush1.msra.mxu0 0.0
  %679 = vmatprep.subr.mxu0 0.0
  %680 = vmatpush1.msra.mxu0 0.0
  %681 = vmatprep.subr.mxu0 0.0
  %682 = vmatpush1.msra.mxu0 0.0
  %683 = vmatprep.subr.mxu0 0.0
  %684 = vmatpush1.msra.mxu0 0.0
  %685 = vmatprep.subr.mxu0 0.0
  %686 = vmatpush1.msra.mxu0 0.0
  %687 = vmatprep.subr.mxu0 0.0
  %688 = vmatpush1.msra.mxu0 0.0
  %689 = vmatprep.subr.mxu0 0.0
  %690 = vmatpush1.msra.mxu0 0.0
  %691 = vmatprep.subr.mxu0 0.0
  %692 = vmatpush1.msra.mxu0 0.0
  %693 = vmatprep.subr.mxu0 0.0
  %694 = vmatpush1.msra.mxu0 0.0
  %695 = vmatprep.subr.mxu0 0.0
  %696 = vmatpush1.msra.mxu0 0.0
  %697 = vmatprep.subr.mxu0 0.0
  %698 = vmatpush1.msra.mxu0 0.0
  %699 = vmatprep.subr.mxu0 0.0
  %700 = vmatpush1.msra.mxu0 0.0
  %701 = vmatprep.subr.mxu0 0.0
  %702 = vmatpush1.msra.mxu0 0.0
  %703 = vmatprep.subr.mxu0 0.0
  %704 = vmatpush1.msra.mxu0 0.0
  %705 = vmatprep.subr.mxu0 0.0
  %706 = vmatpush1.msra.mxu0 0.0
  %707 = vmatprep.subr.mxu0 0.0
  %708 = vmatpush1.msra.mxu0 0.0
  %709 = vmatprep.subr.mxu0 0.0
  %710 = vmatpush1.msra.mxu0 0.0
  %711 = vmatprep.subr.mxu0 0.0
  %712 = vmatpush1.msra.mxu0 0.0
  %713 = vmatprep.subr.mxu0 0.0
  %714 = vmatpush1.msra.mxu0 0.0
  %715 = vmatprep.mubr.f32.mxu0 0.0
  %716 = vmatmul.mubr.f32.gmra.mrb[0].mxu0 %v649
  %v717 = vpop.f32.mrb[0].mxu0
  %v718 = vadd.f32 0.0, %v717
  %v719 = vpop.f32.mrb[0].mxu0
  %720 = vdwg.mxu0
  %v721 = vadd.f32 %v174, %v718
  %v722 = vxor.u32 %v721, 2147483648
  %v723 = vmul.f32 %v722, 1.442695
  %v724 = vpow.pop %v723
  %v725 = vadd.f32 %v724, 1.0
  %v726 = vrcp.pop %v725
  %v727 = vmul.f32 1.0, %v726
  %v728 = vtanh.pop %v721
  %v729 = vmul.f32 %v727, %v321
  %731 = vrot.lane.b32.xlu0 %v728, 64
  %v732 = vpop.permute.xlu0 %731
  %v734 = vmul.f32 %v727, %v732
  %736 = vrot.lane.b32.xlu0 %v734, 32
  %v737 = vpop.permute.xlu0 %736
  %v739 = vadd.f32 %v729, %v737
  %v740 = vtanh.pop %v739
  %742 = vrot.lane.b32.xlu0 %v740, 64
  %v743 = vpop.permute.xlu0 %742
  %v745 = vmul.f32 %v727, %v743
  %747 = vrot.lane.b32.xlu0 %v745, 32
  %v748 = vpop.permute.xlu0 %747
  %750 = vrot.lane.b32.xlu0 %v444, 64
  %v751 = vpop.permute.xlu0 %750
  %v753 = vsel %vm225, %v748, %v751
  %v755 = vsel %vm343, %v753, 0
  %757 = vmatprep.subr.mxu0 0.0
  %758 = vmatpush1.msra.mxu0 %v48
  %759 = vmatprep.subr.mxu0 0.0
  %760 = vmatpush1.msra.mxu0 %v49
  %761 = vmatprep.subr.mxu0 0.0
  %762 = vmatpush1.msra.mxu0 %v50
  %763 = vmatprep.subr.mxu0 0.0
  %764 = vmatpush1.msra.mxu0 %v51
  %765 = vmatprep.subr.mxu0 0.0
  %766 = vmatpush1.msra.mxu0 %v52
  %767 = vmatprep.subr.mxu0 0.0
  %768 = vmatpush1.msra.mxu0 %v53
  %769 = vmatprep.subr.mxu0 0.0
  %770 = vmatpush1.msra.mxu0 %v54
  %771 = vmatprep.subr.mxu0 0.0
  %772 = vmatpush1.msra.mxu0 %v55
  %773 = vmatprep.subr.mxu0 0.0
  %774 = vmatpush1.msra.mxu0 0.0
  %775 = vmatprep.subr.mxu0 0.0
  %776 = vmatpush1.msra.mxu0 0.0
  %777 = vmatprep.subr.mxu0 0.0
  %778 = vmatpush1.msra.mxu0 0.0
  %779 = vmatprep.subr.mxu0 0.0
  %780 = vmatpush1.msra.mxu0 0.0
  %781 = vmatprep.subr.mxu0 0.0
  %782 = vmatpush1.msra.mxu0 0.0
  %783 = vmatprep.subr.mxu0 0.0
  %784 = vmatpush1.msra.mxu0 0.0
  %785 = vmatprep.subr.mxu0 0.0
  %786 = vmatpush1.msra.mxu0 0.0
  %787 = vmatprep.subr.mxu0 0.0
  %788 = vmatpush1.msra.mxu0 0.0
  %789 = vmatprep.subr.mxu0 0.0
  %790 = vmatpush1.msra.mxu0 0.0
  %791 = vmatprep.subr.mxu0 0.0
  %792 = vmatpush1.msra.mxu0 0.0
  %793 = vmatprep.subr.mxu0 0.0
  %794 = vmatpush1.msra.mxu0 0.0
  %795 = vmatprep.subr.mxu0 0.0
  %796 = vmatpush1.msra.mxu0 0.0
  %797 = vmatprep.subr.mxu0 0.0
  %798 = vmatpush1.msra.mxu0 0.0
  %799 = vmatprep.subr.mxu0 0.0
  %800 = vmatpush1.msra.mxu0 0.0
  %801 = vmatprep.subr.mxu0 0.0
  %802 = vmatpush1.msra.mxu0 0.0
  %803 = vmatprep.subr.mxu0 0.0
  %804 = vmatpush1.msra.mxu0 0.0
  %805 = vmatprep.subr.mxu0 0.0
  %806 = vmatpush1.msra.mxu0 0.0
  %807 = vmatprep.subr.mxu0 0.0
  %808 = vmatpush1.msra.mxu0 0.0
  %809 = vmatprep.subr.mxu0 0.0
  %810 = vmatpush1.msra.mxu0 0.0
  %811 = vmatprep.subr.mxu0 0.0
  %812 = vmatpush1.msra.mxu0 0.0
  %813 = vmatprep.subr.mxu0 0.0
  %814 = vmatpush1.msra.mxu0 0.0
  %815 = vmatprep.subr.mxu0 0.0
  %816 = vmatpush1.msra.mxu0 0.0
  %817 = vmatprep.subr.mxu0 0.0
  %818 = vmatpush1.msra.mxu0 0.0
  %819 = vmatprep.subr.mxu0 0.0
  %820 = vmatpush1.msra.mxu0 0.0
  %821 = vmatprep.mubr.f32.mxu0 0.0
  %822 = vmatmul.mubr.f32.gmra.mrb[0].mxu0 %v755
  %v823 = vpop.f32.mrb[0].mxu0
  %v824 = vadd.f32 %v341, %v823
  %v825 = vpop.f32.mrb[0].mxu0
  %826 = vdwg.mxu0
  %v827 = vxor.u32 %v824, 2147483648
  %v828 = vmul.f32 %v827, 1.442695
  %v829 = vpow.pop %v828
  %v830 = vadd.f32 %v829, 1.0
  %v831 = vrcp.pop %v830
  %v832 = vmul.f32 1.0, %v831
  %v833 = vtanh.pop %v824
  %v834 = vmul.f32 %v832, %v438
  %836 = vrot.lane.b32.xlu0 %v833, 64
  %v837 = vpop.permute.xlu0 %836
  %v839 = vmul.f32 %v832, %v837
  %841 = vrot.lane.b32.xlu0 %v839, 32
  %v842 = vpop.permute.xlu0 %841
  %v844 = vadd.f32 %v834, %v842
  %v845 = vtanh.pop %v844
  %847 = vrot.lane.b32.xlu0 %v845, 64
  %v848 = vpop.permute.xlu0 %847
  %v850 = vmul.f32 %v832, %v848
  %852 = vrot.lane.b32.xlu0 %v850, 32
  %v853 = vpop.permute.xlu0 %852
  %856 = vrot.lane.b32.xlu0 %v560, 64
  %v857 = vpop.permute.xlu0 %856
  %v859 = vsel %vm225, %v853, %v857
  %v861 = vsel %vm343, %v859, 0
  %863 = vmatprep.subr.mxu0 0.0
  %864 = vmatpush1.msra.mxu0 %v56
  %865 = vmatprep.subr.mxu0 0.0
  %866 = vmatpush1.msra.mxu0 %v57
  %867 = vmatprep.subr.mxu0 0.0
  %868 = vmatpush1.msra.mxu0 %v58
  %869 = vmatprep.subr.mxu0 0.0
  %870 = vmatpush1.msra.mxu0 %v59
  %871 = vmatprep.subr.mxu0 0.0
  %872 = vmatpush1.msra.mxu0 %v60
  %873 = vmatprep.subr.mxu0 0.0
  %874 = vmatpush1.msra.mxu0 %v61
  %875 = vmatprep.subr.mxu0 0.0
  %876 = vmatpush1.msra.mxu0 %v62
  %877 = vmatprep.subr.mxu0 0.0
  %878 = vmatpush1.msra.mxu0 %v63
  %879 = vmatprep.subr.mxu0 0.0
  %880 = vmatpush1.msra.mxu0 0.0
  %881 = vmatprep.subr.mxu0 0.0
  %882 = vmatpush1.msra.mxu0 0.0
  %883 = vmatprep.subr.mxu0 0.0
  %884 = vmatpush1.msra.mxu0 0.0
  %885 = vmatprep.subr.mxu0 0.0
  %886 = vmatpush1.msra.mxu0 0.0
  %887 = vmatprep.subr.mxu0 0.0
  %888 = vmatpush1.msra.mxu0 0.0
  %889 = vmatprep.subr.mxu0 0.0
  %890 = vmatpush1.msra.mxu0 0.0
  %891 = vmatprep.subr.mxu0 0.0
  %892 = vmatpush1.msra.mxu0 0.0
  %893 = vmatprep.subr.mxu0 0.0
  %894 = vmatpush1.msra.mxu0 0.0
  %895 = vmatprep.subr.mxu0 0.0
  %896 = vmatpush1.msra.mxu0 0.0
  %897 = vmatprep.subr.mxu0 0.0
  %898 = vmatpush1.msra.mxu0 0.0
  %899 = vmatprep.subr.mxu0 0.0
  %900 = vmatpush1.msra.mxu0 0.0
  %901 = vmatprep.subr.mxu0 0.0
  %902 = vmatpush1.msra.mxu0 0.0
  %903 = vmatprep.subr.mxu0 0.0
  %904 = vmatpush1.msra.mxu0 0.0
  %905 = vmatprep.subr.mxu0 0.0
  %906 = vmatpush1.msra.mxu0 0.0
  %907 = vmatprep.subr.mxu0 0.0
  %908 = vmatpush1.msra.mxu0 0.0
  %909 = vmatprep.subr.mxu0 0.0
  %910 = vmatpush1.msra.mxu0 0.0
  %911 = vmatprep.subr.mxu0 0.0
  %912 = vmatpush1.msra.mxu0 0.0
  %913 = vmatprep.subr.mxu0 0.0
  %914 = vmatpush1.msra.mxu0 0.0
  %915 = vmatprep.subr.mxu0 0.0
  %916 = vmatpush1.msra.mxu0 0.0
  %917 = vmatprep.subr.mxu0 0.0
  %918 = vmatpush1.msra.mxu0 0.0
  %919 = vmatprep.subr.mxu0 0.0
  %920 = vmatpush1.msra.mxu0 0.0
  %921 = vmatprep.subr.mxu0 0.0
  %922 = vmatpush1.msra.mxu0 0.0
  %923 = vmatprep.subr.mxu0 0.0
  %924 = vmatpush1.msra.mxu0 0.0
  %925 = vmatprep.subr.mxu0 0.0
  %926 = vmatpush1.msra.mxu0 0.0
  %927 = vmatprep.mubr.f32.mxu0 0.0
  %928 = vmatmul.mubr.f32.gmra.mrb[0].mxu0 %v861
  %v929 = vpop.f32.mrb[0].mxu0
  %v930 = vadd.f32 %v458, %v929
  %v931 = vpop.f32.mrb[0].mxu0
  %932 = vdwg.mxu0
  %v933 = vxor.u32 %v930, 2147483648
  %v934 = vmul.f32 %v933, 1.442695
  %v935 = vpow.pop %v934
  %v936 = vadd.f32 %v935, 1.0
  %v937 = vrcp.pop %v936
  %v938 = vmul.f32 1.0, %v937
  %v939 = vtanh.pop %v930
  %v940 = vmul.f32 %v938, %v554
  %942 = vrot.lane.b32.xlu0 %v939, 64
  %v943 = vpop.permute.xlu0 %942
  %v945 = vmul.f32 %v938, %v943
  %947 = vrot.lane.b32.xlu0 %v945, 32
  %v948 = vpop.permute.xlu0 %947
  %v950 = vadd.f32 %v940, %v948
  %v951 = vtanh.pop %v950
  %953 = vrot.lane.b32.xlu0 %v951, 64
  %v954 = vpop.permute.xlu0 %953
  %v956 = vmul.f32 %v938, %v954
  %958 = vset.pattern.permute.xlu0 0
  %959 = vperm.xlu0 %958, %v218
  %v960 = vpop.permute.xlu0 %959
  %v962 = vmul.f32 %v956, %v960
  %964 = vrot.lane.b32.xlu0 %v962, 32
  %v965 = vpop.permute.xlu0 %964
  %v966 = vsel %vm225, %v965, 0
  %968 = vmatprep.subr.mxu0 0.0
  %969 = vmatpush1.msra.mxu0 %v67
  %970 = vmatprep.subr.mxu0 0.0
  %971 = vmatpush1.msra.mxu0 %v68
  %972 = vmatprep.subr.mxu0 0.0
  %973 = vmatpush1.msra.mxu0 %v69
  %974 = vmatprep.subr.mxu0 0.0
  %975 = vmatpush1.msra.mxu0 %v70
  %976 = vmatprep.subr.mxu0 0.0
  %977 = vmatpush1.msra.mxu0 0.0
  %978 = vmatprep.subr.mxu0 0.0
  %979 = vmatpush1.msra.mxu0 0.0
  %980 = vmatprep.subr.mxu0 0.0
  %981 = vmatpush1.msra.mxu0 0.0
  %982 = vmatprep.subr.mxu0 0.0
  %983 = vmatpush1.msra.mxu0 0.0
  %984 = vmatprep.subr.mxu0 0.0
  %985 = vmatpush1.msra.mxu0 0.0
  %986 = vmatprep.subr.mxu0 0.0
  %987 = vmatpush1.msra.mxu0 0.0
  %988 = vmatprep.subr.mxu0 0.0
  %989 = vmatpush1.msra.mxu0 0.0
  %990 = vmatprep.subr.mxu0 0.0
  %991 = vmatpush1.msra.mxu0 0.0
  %992 = vmatprep.subr.mxu0 0.0
  %993 = vmatpush1.msra.mxu0 0.0
  %994 = vmatprep.subr.mxu0 0.0
  %995 = vmatpush1.msra.mxu0 0.0
  %996 = vmatprep.subr.mxu0 0.0
  %997 = vmatpush1.msra.mxu0 0.0
  %998 = vmatprep.subr.mxu0 0.0
  %999 = vmatpush1.msra.mxu0 0.0
  %1000 = vmatprep.subr.mxu0 0.0
  %1001 = vmatpush1.msra.mxu0 0.0
  %1002 = vmatprep.subr.mxu0 0.0
  %1003 = vmatpush1.msra.mxu0 0.0
  %1004 = vmatprep.subr.mxu0 0.0
  %1005 = vmatpush1.msra.mxu0 0.0
  %1006 = vmatprep.subr.mxu0 0.0
  %1007 = vmatpush1.msra.mxu0 0.0
  %1008 = vmatprep.subr.mxu0 0.0
  %1009 = vmatpush1.msra.mxu0 0.0
  %1010 = vmatprep.subr.mxu0 0.0
  %1011 = vmatpush1.msra.mxu0 0.0
  %1012 = vmatprep.subr.mxu0 0.0
  %1013 = vmatpush1.msra.mxu0 0.0
  %1014 = vmatprep.subr.mxu0 0.0
  %1015 = vmatpush1.msra.mxu0 0.0
  %1016 = vmatprep.subr.mxu0 0.0
  %1017 = vmatpush1.msra.mxu0 0.0
  %1018 = vmatprep.subr.mxu0 0.0
  %1019 = vmatpush1.msra.mxu0 0.0
  %1020 = vmatprep.subr.mxu0 0.0
  %1021 = vmatpush1.msra.mxu0 0.0
  %1022 = vmatprep.subr.mxu0 0.0
  %1023 = vmatpush1.msra.mxu0 0.0
  %1024 = vmatprep.subr.mxu0 0.0
  %1025 = vmatpush1.msra.mxu0 0.0
  %1026 = vmatprep.subr.mxu0 0.0
  %1027 = vmatpush1.msra.mxu0 0.0
  %1028 = vmatprep.subr.mxu0 0.0
  %1029 = vmatpush1.msra.mxu0 0.0
  %1030 = vmatprep.subr.mxu0 0.0
  %1031 = vmatpush1.msra.mxu0 0.0
  %1032 = vmatprep.mubr.f32.mxu0 0.0
  %1033 = vmatmul.mubr.f32.gmra.mrb[0].mxu0 %v966
  %v1034 = vpop.f32.mrb[0].mxu0
  %v1035 = vadd.f32 %v571, %v1034
  %v1036 = vpop.f32.mrb[0].mxu0
  %1037 = vdwg.mxu0
  %1038 = vst [vmem:[%s13 + $0x8] sm:$0xff] %v1035
  %v1039 = vsel %vm225, %v748, 0
  %1041 = vmatprep.subr.mxu0 0.0
  %1042 = vmatpush1.msra.mxu0 %v44
  %1043 = vmatprep.subr.mxu0 0.0
  %1044 = vmatpush1.msra.mxu0 %v45
  %1045 = vmatprep.subr.mxu0 0.0
  %1046 = vmatpush1.msra.mxu0 %v46
  %1047 = vmatprep.subr.mxu0 0.0
  %1048 = vmatpush1.msra.mxu0 %v47
  %1049 = vmatprep.subr.mxu0 0.0
  %1050 = vmatpush1.msra.mxu0 0.0
  %1051 = vmatprep.subr.mxu0 0.0
  %1052 = vmatpush1.msra.mxu0 0.0
  %1053 = vmatprep.subr.mxu0 0.0
  %1054 = vmatpush1.msra.mxu0 0.0
  %1055 = vmatprep.subr.mxu0 0.0
  %1056 = vmatpush1.msra.mxu0 0.0
  %1057 = vmatprep.subr.mxu0 0.0
  %1058 = vmatpush1.msra.mxu0 0.0
  %1059 = vmatprep.subr.mxu0 0.0
  %1060 = vmatpush1.msra.mxu0 0.0
  %1061 = vmatprep.subr.mxu0 0.0
  %1062 = vmatpush1.msra.mxu0 0.0
  %1063 = vmatprep.subr.mxu0 0.0
  %1064 = vmatpush1.msra.mxu0 0.0
  %1065 = vmatprep.subr.mxu0 0.0
  %1066 = vmatpush1.msra.mxu0 0.0
  %1067 = vmatprep.subr.mxu0 0.0
  %1068 = vmatpush1.msra.mxu0 0.0
  %1069 = vmatprep.subr.mxu0 0.0
  %1070 = vmatpush1.msra.mxu0 0.0
  %1071 = vmatprep.subr.mxu0 0.0
  %1072 = vmatpush1.msra.mxu0 0.0
  %1073 = vmatprep.subr.mxu0 0.0
  %1074 = vmatpush1.msra.mxu0 0.0
  %1075 = vmatprep.subr.mxu0 0.0
  %1076 = vmatpush1.msra.mxu0 0.0
  %1077 = vmatprep.subr.mxu0 0.0
  %1078 = vmatpush1.msra.mxu0 0.0
  %1079 = vmatprep.subr.mxu0 0.0
  %1080 = vmatpush1.msra.mxu0 0.0
  %1081 = vmatprep.subr.mxu0 0.0
  %1082 = vmatpush1.msra.mxu0 0.0
  %1083 = vmatprep.subr.mxu0 0.0
  %1084 = vmatpush1.msra.mxu0 0.0
  %1085 = vmatprep.subr.mxu0 0.0
  %1086 = vmatpush1.msra.mxu0 0.0
  %1087 = vmatprep.subr.mxu0 0.0
  %1088 = vmatpush1.msra.mxu0 0.0
  %1089 = vmatprep.subr.mxu0 0.0
  %1090 = vmatpush1.msra.mxu0 0.0
  %1091 = vmatprep.subr.mxu0 0.0
  %1092 = vmatpush1.msra.mxu0 0.0
  %1093 = vmatprep.subr.mxu0 0.0
  %1094 = vmatpush1.msra.mxu0 0.0
  %1095 = vmatprep.subr.mxu0 0.0
  %1096 = vmatpush1.msra.mxu0 0.0
  %1097 = vmatprep.subr.mxu0 0.0
  %1098 = vmatpush1.msra.mxu0 0.0
  %1099 = vmatprep.subr.mxu0 0.0
  %1100 = vmatpush1.msra.mxu0 0.0
  %1101 = vmatprep.subr.mxu0 0.0
  %1102 = vmatpush1.msra.mxu0 0.0
  %1103 = vmatprep.subr.mxu0 0.0
  %1104 = vmatpush1.msra.mxu0 0.0
  %1105 = vmatprep.mubr.f32.mxu0 0.0
  %1106 = vmatmul.mubr.f32.gmra.mrb[0].mxu0 %v1039
  %v1107 = vpop.f32.mrb[0].mxu0
  %v1108 = vadd.f32 0.0, %v1107
  %v1109 = vpop.f32.mrb[0].mxu0
  %1110 = vdwg.mxu0
  %v1111 = vadd.f32 %v179, %v1108
  %v1112 = vxor.u32 %v1111, 2147483648
  %v1113 = vmul.f32 %v1112, 1.442695
  %v1114 = vpow.pop %v1113
  %v1115 = vadd.f32 %v1114, 1.0
  %v1116 = vrcp.pop %v1115
  %v1117 = vmul.f32 1.0, %v1116
  %v1118 = vtanh.pop %v1111
  %v1119 = vmul.f32 %v1117, %v739
  %1121 = vrot.lane.b32.xlu0 %v1118, 64
  %v1122 = vpop.permute.xlu0 %1121
  %v1124 = vmul.f32 %v1117, %v1122
  %1126 = vrot.lane.b32.xlu0 %v1124, 32
  %v1127 = vpop.permute.xlu0 %1126
  %v1129 = vadd.f32 %v1119, %v1127
  %v1130 = vtanh.pop %v1129
  %1132 = vrot.lane.b32.xlu0 %v1130, 64
  %v1133 = vpop.permute.xlu0 %1132
  %v1135 = vmul.f32 %v1117, %v1133
  %1137 = vrot.lane.b32.xlu0 %v1135, 32
  %v1138 = vpop.permute.xlu0 %1137
  %1140 = vrot.lane.b32.xlu0 %v850, 64
  %v1141 = vpop.permute.xlu0 %1140
  %v1143 = vsel %vm225, %v1138, %v1141
  %v1145 = vsel %vm343, %v1143, 0
  %1147 = vmatprep.subr.mxu0 0.0
  %1148 = vmatpush1.msra.mxu0 %v48
  %1149 = vmatprep.subr.mxu0 0.0
  %1150 = vmatpush1.msra.mxu0 %v49
  %1151 = vmatprep.subr.mxu0 0.0
  %1152 = vmatpush1.msra.mxu0 %v50
  %1153 = vmatprep.subr.mxu0 0.0
  %1154 = vmatpush1.msra.mxu0 %v51
  %1155 = vmatprep.subr.mxu0 0.0
  %1156 = vmatpush1.msra.mxu0 %v52
  %1157 = vmatprep.subr.mxu0 0.0
  %1158 = vmatpush1.msra.mxu0 %v53
  %1159 = vmatprep.subr.mxu0 0.0
  %1160 = vmatpush1.msra.mxu0 %v54
  %1161 = vmatprep.subr.mxu0 0.0
  %1162 = vmatpush1.msra.mxu0 %v55
  %1163 = vmatprep.subr.mxu0 0.0
  %1164 = vmatpush1.msra.mxu0 0.0
  %1165 = vmatprep.subr.mxu0 0.0
  %1166 = vmatpush1.msra.mxu0 0.0
  %1167 = vmatprep.subr.mxu0 0.0
  %1168 = vmatpush1.msra.mxu0 0.0
  %1169 = vmatprep.subr.mxu0 0.0
  %1170 = vmatpush1.msra.mxu0 0.0
  %1171 = vmatprep.subr.mxu0 0.0
  %1172 = vmatpush1.msra.mxu0 0.0
  %1173 = vmatprep.subr.mxu0 0.0
  %1174 = vmatpush1.msra.mxu0 0.0
  %1175 = vmatprep.subr.mxu0 0.0
  %1176 = vmatpush1.msra.mxu0 0.0
  %1177 = vmatprep.subr.mxu0 0.0
  %1178 = vmatpush1.msra.mxu0 0.0
  %1179 = vmatprep.subr.mxu0 0.0
  %1180 = vmatpush1.msra.mxu0 0.0
  %1181 = vmatprep.subr.mxu0 0.0
  %1182 = vmatpush1.msra.mxu0 0.0
  %1183 = vmatprep.subr.mxu0 0.0
  %1184 = vmatpush1.msra.mxu0 0.0
  %1185 = vmatprep.subr.mxu0 0.0
  %1186 = vmatpush1.msra.mxu0 0.0
  %1187 = vmatprep.subr.mxu0 0.0
  %1188 = vmatpush1.msra.mxu0 0.0
  %1189 = vmatprep.subr.mxu0 0.0
  %1190 = vmatpush1.msra.mxu0 0.0
  %1191 = vmatprep.subr.mxu0 0.0
  %1192 = vmatpush1.msra.mxu0 0.0
  %1193 = vmatprep.subr.mxu0 0.0
  %1194 = vmatpush1.msra.mxu0 0.0
  %1195 = vmatprep.subr.mxu0 0.0
  %1196 = vmatpush1.msra.mxu0 0.0
  %1197 = vmatprep.subr.mxu0 0.0
  %1198 = vmatpush1.msra.mxu0 0.0
  %1199 = vmatprep.subr.mxu0 0.0
  %1200 = vmatpush1.msra.mxu0 0.0
  %1201 = vmatprep.subr.mxu0 0.0
  %1202 = vmatpush1.msra.mxu0 0.0
  %1203 = vmatprep.subr.mxu0 0.0
  %1204 = vmatpush1.msra.mxu0 0.0
  %1205 = vmatprep.subr.mxu0 0.0
  %1206 = vmatpush1.msra.mxu0 0.0
  %1207 = vmatprep.subr.mxu0 0.0
  %1208 = vmatpush1.msra.mxu0 0.0
  %1209 = vmatprep.subr.mxu0 0.0
  %1210 = vmatpush1.msra.mxu0 0.0
  %1211 = vmatprep.mubr.f32.mxu0 0.0
  %1212 = vmatmul.mubr.f32.gmra.mrb[0].mxu0 %v1145
  %v1213 = vpop.f32.mrb[0].mxu0
  %v1214 = vadd.f32 %v341, %v1213
  %v1215 = vpop.f32.mrb[0].mxu0
  %1216 = vdwg.mxu0
  %v1217 = vxor.u32 %v1214, 2147483648
  %v1218 = vmul.f32 %v1217, 1.442695
  %v1219 = vpow.pop %v1218
  %v1220 = vadd.f32 %v1219, 1.0
  %v1221 = vrcp.pop %v1220
  %v1222 = vmul.f32 1.0, %v1221
  %v1223 = vtanh.pop %v1214
  %v1224 = vmul.f32 %v1222, %v844
  %1226 = vrot.lane.b32.xlu0 %v1223, 64
  %v1227 = vpop.permute.xlu0 %1226
  %v1229 = vmul.f32 %v1222, %v1227
  %1231 = vrot.lane.b32.xlu0 %v1229, 32
  %v1232 = vpop.permute.xlu0 %1231
  %v1234 = vadd.f32 %v1224, %v1232
  %v1235 = vtanh.pop %v1234
  %1237 = vrot.lane.b32.xlu0 %v1235, 64
  %v1238 = vpop.permute.xlu0 %1237
  %v1240 = vmul.f32 %v1222, %v1238
  %1242 = vrot.lane.b32.xlu0 %v1240, 32
  %v1243 = vpop.permute.xlu0 %1242
  %1246 = vrot.lane.b32.xlu0 %v956, 64
  %v1247 = vpop.permute.xlu0 %1246
  %v1249 = vsel %vm225, %v1243, %v1247
  %v1251 = vsel %vm343, %v1249, 0
  %1253 = vmatprep.subr.mxu0 0.0
  %1254 = vmatpush1.msra.mxu0 %v56
  %1255 = vmatprep.subr.mxu0 0.0
  %1256 = vmatpush1.msra.mxu0 %v57
  %1257 = vmatprep.subr.mxu0 0.0
  %1258 = vmatpush1.msra.mxu0 %v58
  %1259 = vmatprep.subr.mxu0 0.0
  %1260 = vmatpush1.msra.mxu0 %v59
  %1261 = vmatprep.subr.mxu0 0.0
  %1262 = vmatpush1.msra.mxu0 %v60
  %1263 = vmatprep.subr.mxu0 0.0
  %1264 = vmatpush1.msra.mxu0 %v61
  %1265 = vmatprep.subr.mxu0 0.0
  %1266 = vmatpush1.msra.mxu0 %v62
  %1267 = vmatprep.subr.mxu0 0.0
  %1268 = vmatpush1.msra.mxu0 %v63
  %1269 = vmatprep.subr.mxu0 0.0
  %1270 = vmatpush1.msra.mxu0 0.0
  %1271 = vmatprep.subr.mxu0 0.0
  %1272 = vmatpush1.msra.mxu0 0.0
  %1273 = vmatprep.subr.mxu0 0.0
  %1274 = vmatpush1.msra.mxu0 0.0
  %1275 = vmatprep.subr.mxu0 0.0
  %1276 = vmatpush1.msra.mxu0 0.0
  %1277 = vmatprep.subr.mxu0 0.0
  %1278 = vmatpush1.msra.mxu0 0.0
  %1279 = vmatprep.subr.mxu0 0.0
  %1280 = vmatpush1.msra.mxu0 0.0
  %1281 = vmatprep.subr.mxu0 0.0
  %1282 = vmatpush1.msra.mxu0 0.0
  %1283 = vmatprep.subr.mxu0 0.0
  %1284 = vmatpush1.msra.mxu0 0.0
  %1285 = vmatprep.subr.mxu0 0.0
  %1286 = vmatpush1.msra.mxu0 0.0
  %1287 = vmatprep.subr.mxu0 0.0
  %1288 = vmatpush1.msra.mxu0 0.0
  %1289 = vmatprep.subr.mxu0 0.0
  %1290 = vmatpush1.msra.mxu0 0.0
  %1291 = vmatprep.subr.mxu0 0.0
  %1292 = vmatpush1.msra.mxu0 0.0
  %1293 = vmatprep.subr.mxu0 0.0
  %1294 = vmatpush1.msra.mxu0 0.0
  %1295 = vmatprep.subr.mxu0 0.0
  %1296 = vmatpush1.msra.mxu0 0.0
  %1297 = vmatprep.subr.mxu0 0.0
  %1298 = vmatpush1.msra.mxu0 0.0
  %1299 = vmatprep.subr.mxu0 0.0
  %1300 = vmatpush1.msra.mxu0 0.0
  %1301 = vmatprep.subr.mxu0 0.0
  %1302 = vmatpush1.msra.mxu0 0.0
  %1303 = vmatprep.subr.mxu0 0.0
  %1304 = vmatpush1.msra.mxu0 0.0
  %1305 = vmatprep.subr.mxu0 0.0
  %1306 = vmatpush1.msra.mxu0 0.0
  %1307 = vmatprep.subr.mxu0 0.0
  %1308 = vmatpush1.msra.mxu0 0.0
  %1309 = vmatprep.subr.mxu0 0.0
  %1310 = vmatpush1.msra.mxu0 0.0
  %1311 = vmatprep.subr.mxu0 0.0
  %1312 = vmatpush1.msra.mxu0 0.0
  %1313 = vmatprep.subr.mxu0 0.0
  %1314 = vmatpush1.msra.mxu0 0.0
  %1315 = vmatprep.subr.mxu0 0.0
  %1316 = vmatpush1.msra.mxu0 0.0
  %1317 = vmatprep.mubr.f32.mxu0 0.0
  %1318 = vmatmul.mubr.f32.gmra.mrb[0].mxu0 %v1251
  %v1319 = vpop.f32.mrb[0].mxu0
  %v1320 = vadd.f32 %v458, %v1319
  %v1321 = vpop.f32.mrb[0].mxu0
  %1322 = vdwg.mxu0
  %v1323 = vxor.u32 %v1320, 2147483648
  %v1324 = vmul.f32 %v1323, 1.442695
  %v1325 = vpow.pop %v1324
  %v1326 = vadd.f32 %v1325, 1.0
  %v1327 = vrcp.pop %v1326
  %v1328 = vmul.f32 1.0, %v1327
  %v1329 = vtanh.pop %v1320
  %v1330 = vmul.f32 %v1328, %v950
  %1332 = vrot.lane.b32.xlu0 %v1329, 64
  %v1333 = vpop.permute.xlu0 %1332
  %v1335 = vmul.f32 %v1328, %v1333
  %1337 = vrot.lane.b32.xlu0 %v1335, 32
  %v1338 = vpop.permute.xlu0 %1337
  %v1340 = vadd.f32 %v1330, %v1338
  %v1341 = vtanh.pop %v1340
  %1343 = vrot.lane.b32.xlu0 %v1341, 64
  %v1344 = vpop.permute.xlu0 %1343
  %v1346 = vmul.f32 %v1328, %v1344
  %1348 = vset.pattern.permute.xlu0 0
  %1349 = vperm.xlu0 %1348, %v219
  %v1350 = vpop.permute.xlu0 %1349
  %v1352 = vmul.f32 %v1346, %v1350
  %1354 = vrot.lane.b32.xlu0 %v1352, 32
  %v1355 = vpop.permute.xlu0 %1354
  %v1356 = vsel %vm225, %v1355, 0
  %1358 = vmatprep.subr.mxu0 0.0
  %1359 = vmatpush1.msra.mxu0 %v67
  %1360 = vmatprep.subr.mxu0 0.0
  %1361 = vmatpush1.msra.mxu0 %v68
  %1362 = vmatprep.subr.mxu0 0.0
  %1363 = vmatpush1.msra.mxu0 %v69
  %1364 = vmatprep.subr.mxu0 0.0
  %1365 = vmatpush1.msra.mxu0 %v70
  %1366 = vmatprep.subr.mxu0 0.0
  %1367 = vmatpush1.msra.mxu0 0.0
  %1368 = vmatprep.subr.mxu0 0.0
  %1369 = vmatpush1.msra.mxu0 0.0
  %1370 = vmatprep.subr.mxu0 0.0
  %1371 = vmatpush1.msra.mxu0 0.0
  %1372 = vmatprep.subr.mxu0 0.0
  %1373 = vmatpush1.msra.mxu0 0.0
  %1374 = vmatprep.subr.mxu0 0.0
  %1375 = vmatpush1.msra.mxu0 0.0
  %1376 = vmatprep.subr.mxu0 0.0
  %1377 = vmatpush1.msra.mxu0 0.0
  %1378 = vmatprep.subr.mxu0 0.0
  %1379 = vmatpush1.msra.mxu0 0.0
  %1380 = vmatprep.subr.mxu0 0.0
  %1381 = vmatpush1.msra.mxu0 0.0
  %1382 = vmatprep.subr.mxu0 0.0
  %1383 = vmatpush1.msra.mxu0 0.0
  %1384 = vmatprep.subr.mxu0 0.0
  %1385 = vmatpush1.msra.mxu0 0.0
  %1386 = vmatprep.subr.mxu0 0.0
  %1387 = vmatpush1.msra.mxu0 0.0
  %1388 = vmatprep.subr.mxu0 0.0
  %1389 = vmatpush1.msra.mxu0 0.0
  %1390 = vmatprep.subr.mxu0 0.0
  %1391 = vmatpush1.msra.mxu0 0.0
  %1392 = vmatprep.subr.mxu0 0.0
  %1393 = vmatpush1.msra.mxu0 0.0
  %1394 = vmatprep.subr.mxu0 0.0
  %1395 = vmatpush1.msra.mxu0 0.0
  %1396 = vmatprep.subr.mxu0 0.0
  %1397 = vmatpush1.msra.mxu0 0.0
  %1398 = vmatprep.subr.mxu0 0.0
  %1399 = vmatpush1.msra.mxu0 0.0
  %1400 = vmatprep.subr.mxu0 0.0
  %1401 = vmatpush1.msra.mxu0 0.0
  %1402 = vmatprep.subr.mxu0 0.0
  %1403 = vmatpush1.msra.mxu0 0.0
  %1404 = vmatprep.subr.mxu0 0.0
  %1405 = vmatpush1.msra.mxu0 0.0
  %1406 = vmatprep.subr.mxu0 0.0
  %1407 = vmatpush1.msra.mxu0 0.0
  %1408 = vmatprep.subr.mxu0 0.0
  %1409 = vmatpush1.msra.mxu0 0.0
  %1410 = vmatprep.subr.mxu0 0.0
  %1411 = vmatpush1.msra.mxu0 0.0
  %1412 = vmatprep.subr.mxu0 0.0
  %1413 = vmatpush1.msra.mxu0 0.0
  %1414 = vmatprep.subr.mxu0 0.0
  %1415 = vmatpush1.msra.mxu0 0.0
  %1416 = vmatprep.subr.mxu0 0.0
  %1417 = vmatpush1.msra.mxu0 0.0
  %1418 = vmatprep.subr.mxu0 0.0
  %1419 = vmatpush1.msra.mxu0 0.0
  %1420 = vmatprep.subr.mxu0 0.0
  %1421 = vmatpush1.msra.mxu0 0.0
  %1422 = vmatprep.mubr.f32.mxu0 0.0
  %1423 = vmatmul.mubr.f32.gmra.mrb[0].mxu0 %v1356
  %v1424 = vpop.f32.mrb[0].mxu0
  %v1425 = vadd.f32 %v571, %v1424
  %v1426 = vpop.f32.mrb[0].mxu0
  %1427 = vdwg.mxu0
  %1428 = vst [vmem:[%s13 + $0x10] sm:$0xff] %v1425
  %v1429 = vsel %vm225, %v1138, 0
  %1431 = vmatprep.subr.mxu0 0.0
  %1432 = vmatpush1.msra.mxu0 %v44
  %1433 = vmatprep.subr.mxu0 0.0
  %1434 = vmatpush1.msra.mxu0 %v45
  %1435 = vmatprep.subr.mxu0 0.0
  %1436 = vmatpush1.msra.mxu0 %v46
  %1437 = vmatprep.subr.mxu0 0.0
  %1438 = vmatpush1.msra.mxu0 %v47
  %1439 = vmatprep.subr.mxu0 0.0
  %1440 = vmatpush1.msra.mxu0 0.0
  %1441 = vmatprep.subr.mxu0 0.0
  %1442 = vmatpush1.msra.mxu0 0.0
  %1443 = vmatprep.subr.mxu0 0.0
  %1444 = vmatpush1.msra.mxu0 0.0
  %1445 = vmatprep.subr.mxu0 0.0
  %1446 = vmatpush1.msra.mxu0 0.0
  %1447 = vmatprep.subr.mxu0 0.0
  %1448 = vmatpush1.msra.mxu0 0.0
  %1449 = vmatprep.subr.mxu0 0.0
  %1450 = vmatpush1.msra.mxu0 0.0
  %1451 = vmatprep.subr.mxu0 0.0
  %1452 = vmatpush1.msra.mxu0 0.0
  %1453 = vmatprep.subr.mxu0 0.0
  %1454 = vmatpush1.msra.mxu0 0.0
  %1455 = vmatprep.subr.mxu0 0.0
  %1456 = vmatpush1.msra.mxu0 0.0
  %1457 = vmatprep.subr.mxu0 0.0
  %1458 = vmatpush1.msra.mxu0 0.0
  %1459 = vmatprep.subr.mxu0 0.0
  %1460 = vmatpush1.msra.mxu0 0.0
  %1461 = vmatprep.subr.mxu0 0.0
  %1462 = vmatpush1.msra.mxu0 0.0
  %1463 = vmatprep.subr.mxu0 0.0
  %1464 = vmatpush1.msra.mxu0 0.0
  %1465 = vmatprep.subr.mxu0 0.0
  %1466 = vmatpush1.msra.mxu0 0.0
  %1467 = vmatprep.subr.mxu0 0.0
  %1468 = vmatpush1.msra.mxu0 0.0
  %1469 = vmatprep.subr.mxu0 0.0
  %1470 = vmatpush1.msra.mxu0 0.0
  %1471 = vmatprep.subr.mxu0 0.0
  %1472 = vmatpush1.msra.mxu0 0.0
  %1473 = vmatprep.subr.mxu0 0.0
  %1474 = vmatpush1.msra.mxu0 0.0
  %1475 = vmatprep.subr.mxu0 0.0
  %1476 = vmatpush1.msra.mxu0 0.0
  %1477 = vmatprep.subr.mxu0 0.0
  %1478 = vmatpush1.msra.mxu0 0.0
  %1479 = vmatprep.subr.mxu0 0.0
  %1480 = vmatpush1.msra.mxu0 0.0
  %1481 = vmatprep.subr.mxu0 0.0
  %1482 = vmatpush1.msra.mxu0 0.0
  %1483 = vmatprep.subr.mxu0 0.0
  %1484 = vmatpush1.msra.mxu0 0.0
  %1485 = vmatprep.subr.mxu0 0.0
  %1486 = vmatpush1.msra.mxu0 0.0
  %1487 = vmatprep.subr.mxu0 0.0
  %1488 = vmatpush1.msra.mxu0 0.0
  %1489 = vmatprep.subr.mxu0 0.0
  %1490 = vmatpush1.msra.mxu0 0.0
  %1491 = vmatprep.subr.mxu0 0.0
  %1492 = vmatpush1.msra.mxu0 0.0
  %1493 = vmatprep.subr.mxu0 0.0
  %1494 = vmatpush1.msra.mxu0 0.0
  %1495 = vmatprep.mubr.f32.mxu0 0.0
  %1496 = vmatmul.mubr.f32.gmra.mrb[0].mxu0 %v1429
  %v1497 = vpop.f32.mrb[0].mxu0
  %v1498 = vadd.f32 0.0, %v1497
  %v1499 = vpop.f32.mrb[0].mxu0
  %1500 = vdwg.mxu0
  %v1501 = vadd.f32 %v184, %v1498
  %v1502 = vxor.u32 %v1501, 2147483648
  %v1503 = vmul.f32 %v1502, 1.442695
  %v1504 = vpow.pop %v1503
  %v1505 = vadd.f32 %v1504, 1.0
  %v1506 = vrcp.pop %v1505
  %v1507 = vmul.f32 1.0, %v1506
  %v1508 = vtanh.pop %v1501
  %v1509 = vmul.f32 %v1507, %v1129
  %1511 = vrot.lane.b32.xlu0 %v1508, 64
  %v1512 = vpop.permute.xlu0 %1511
  %v1514 = vmul.f32 %v1507, %v1512
  %1516 = vrot.lane.b32.xlu0 %v1514, 32
  %v1517 = vpop.permute.xlu0 %1516
  %v1519 = vadd.f32 %v1509, %v1517
  %v1520 = vtanh.pop %v1519
  %1522 = vrot.lane.b32.xlu0 %v1520, 64
  %v1523 = vpop.permute.xlu0 %1522
  %v1525 = vmul.f32 %v1507, %v1523
  %1527 = vrot.lane.b32.xlu0 %v1525, 32
  %v1528 = vpop.permute.xlu0 %1527
  %1530 = vrot.lane.b32.xlu0 %v1240, 64
  %v1531 = vpop.permute.xlu0 %1530
  %v1533 = vsel %vm225, %v1528, %v1531
  %v1535 = vsel %vm343, %v1533, 0
  %1537 = vmatprep.subr.mxu0 0.0
  %1538 = vmatpush1.msra.mxu0 %v48
  %1539 = vmatprep.subr.mxu0 0.0
  %1540 = vmatpush1.msra.mxu0 %v49
  %1541 = vmatprep.subr.mxu0 0.0
  %1542 = vmatpush1.msra.mxu0 %v50
  %1543 = vmatprep.subr.mxu0 0.0
  %1544 = vmatpush1.msra.mxu0 %v51
  %1545 = vmatprep.subr.mxu0 0.0
  %1546 = vmatpush1.msra.mxu0 %v52
  %1547 = vmatprep.subr.mxu0 0.0
  %1548 = vmatpush1.msra.mxu0 %v53
  %1549 = vmatprep.subr.mxu0 0.0
  %1550 = vmatpush1.msra.mxu0 %v54
  %1551 = vmatprep.subr.mxu0 0.0
  %1552 = vmatpush1.msra.mxu0 %v55
  %1553 = vmatprep.subr.mxu0 0.0
  %1554 = vmatpush1.msra.mxu0 0.0
  %1555 = vmatprep.subr.mxu0 0.0
  %1556 = vmatpush1.msra.mxu0 0.0
  %1557 = vmatprep.subr.mxu0 0.0
  %1558 = vmatpush1.msra.mxu0 0.0
  %1559 = vmatprep.subr.mxu0 0.0
  %1560 = vmatpush1.msra.mxu0 0.0
  %1561 = vmatprep.subr.mxu0 0.0
  %1562 = vmatpush1.msra.mxu0 0.0
  %1563 = vmatprep.subr.mxu0 0.0
  %1564 = vmatpush1.msra.mxu0 0.0
  %1565 = vmatprep.subr.mxu0 0.0
  %1566 = vmatpush1.msra.mxu0 0.0
  %1567 = vmatprep.subr.mxu0 0.0
  %1568 = vmatpush1.msra.mxu0 0.0
  %1569 = vmatprep.subr.mxu0 0.0
  %1570 = vmatpush1.msra.mxu0 0.0
  %1571 = vmatprep.subr.mxu0 0.0
  %1572 = vmatpush1.msra.mxu0 0.0
  %1573 = vmatprep.subr.mxu0 0.0
  %1574 = vmatpush1.msra.mxu0 0.0
  %1575 = vmatprep.subr.mxu0 0.0
  %1576 = vmatpush1.msra.mxu0 0.0
  %1577 = vmatprep.subr.mxu0 0.0
  %1578 = vmatpush1.msra.mxu0 0.0
  %1579 = vmatprep.subr.mxu0 0.0
  %1580 = vmatpush1.msra.mxu0 0.0
  %1581 = vmatprep.subr.mxu0 0.0
  %1582 = vmatpush1.msra.mxu0 0.0
  %1583 = vmatprep.subr.mxu0 0.0
  %1584 = vmatpush1.msra.mxu0 0.0
  %1585 = vmatprep.subr.mxu0 0.0
  %1586 = vmatpush1.msra.mxu0 0.0
  %1587 = vmatprep.subr.mxu0 0.0
  %1588 = vmatpush1.msra.mxu0 0.0
  %1589 = vmatprep.subr.mxu0 0.0
  %1590 = vmatpush1.msra.mxu0 0.0
  %1591 = vmatprep.subr.mxu0 0.0
  %1592 = vmatpush1.msra.mxu0 0.0
  %1593 = vmatprep.subr.mxu0 0.0
  %1594 = vmatpush1.msra.mxu0 0.0
  %1595 = vmatprep.subr.mxu0 0.0
  %1596 = vmatpush1.msra.mxu0 0.0
  %1597 = vmatprep.subr.mxu0 0.0
  %1598 = vmatpush1.msra.mxu0 0.0
  %1599 = vmatprep.subr.mxu0 0.0
  %1600 = vmatpush1.msra.mxu0 0.0
  %1601 = vmatprep.mubr.f32.mxu0 0.0
  %1602 = vmatmul.mubr.f32.gmra.mrb[0].mxu0 %v1535
  %v1603 = vpop.f32.mrb[0].mxu0
  %v1604 = vadd.f32 %v341, %v1603
  %v1605 = vpop.f32.mrb[0].mxu0
  %1606 = vdwg.mxu0
  %v1607 = vxor.u32 %v1604, 2147483648
  %v1608 = vmul.f32 %v1607, 1.442695
  %v1609 = vpow.pop %v1608
  %v1610 = vadd.f32 %v1609, 1.0
  %v1611 = vrcp.pop %v1610
  %v1612 = vmul.f32 1.0, %v1611
  %v1613 = vtanh.pop %v1604
  %v1614 = vmul.f32 %v1612, %v1234
  %1616 = vrot.lane.b32.xlu0 %v1613, 64
  %v1617 = vpop.permute.xlu0 %1616
  %v1619 = vmul.f32 %v1612, %v1617
  %1621 = vrot.lane.b32.xlu0 %v1619, 32
  %v1622 = vpop.permute.xlu0 %1621
  %v1624 = vadd.f32 %v1614, %v1622
  %v1625 = vtanh.pop %v1624
  %1627 = vrot.lane.b32.xlu0 %v1625, 64
  %v1628 = vpop.permute.xlu0 %1627
  %v1630 = vmul.f32 %v1612, %v1628
  %1632 = vrot.lane.b32.xlu0 %v1630, 32
  %v1633 = vpop.permute.xlu0 %1632
  %1636 = vrot.lane.b32.xlu0 %v1346, 64
  %v1637 = vpop.permute.xlu0 %1636
  %v1639 = vsel %vm225, %v1633, %v1637
  %v1641 = vsel %vm343, %v1639, 0
  %1643 = vmatprep.subr.mxu0 0.0
  %1644 = vmatpush1.msra.mxu0 %v56
  %1645 = vmatprep.subr.mxu0 0.0
  %1646 = vmatpush1.msra.mxu0 %v57
  %1647 = vmatprep.subr.mxu0 0.0
  %1648 = vmatpush1.msra.mxu0 %v58
  %1649 = vmatprep.subr.mxu0 0.0
  %1650 = vmatpush1.msra.mxu0 %v59
  %1651 = vmatprep.subr.mxu0 0.0
  %1652 = vmatpush1.msra.mxu0 %v60
  %1653 = vmatprep.subr.mxu0 0.0
  %1654 = vmatpush1.msra.mxu0 %v61
  %1655 = vmatprep.subr.mxu0 0.0
  %1656 = vmatpush1.msra.mxu0 %v62
  %1657 = vmatprep.subr.mxu0 0.0
  %1658 = vmatpush1.msra.mxu0 %v63
  %1659 = vmatprep.subr.mxu0 0.0
  %1660 = vmatpush1.msra.mxu0 0.0
  %1661 = vmatprep.subr.mxu0 0.0
  %1662 = vmatpush1.msra.mxu0 0.0
  %1663 = vmatprep.subr.mxu0 0.0
  %1664 = vmatpush1.msra.mxu0 0.0
  %1665 = vmatprep.subr.mxu0 0.0
  %1666 = vmatpush1.msra.mxu0 0.0
  %1667 = vmatprep.subr.mxu0 0.0
  %1668 = vmatpush1.msra.mxu0 0.0
  %1669 = vmatprep.subr.mxu0 0.0
  %1670 = vmatpush1.msra.mxu0 0.0
  %1671 = vmatprep.subr.mxu0 0.0
  %1672 = vmatpush1.msra.mxu0 0.0
  %1673 = vmatprep.subr.mxu0 0.0
  %1674 = vmatpush1.msra.mxu0 0.0
  %1675 = vmatprep.subr.mxu0 0.0
  %1676 = vmatpush1.msra.mxu0 0.0
  %1677 = vmatprep.subr.mxu0 0.0
  %1678 = vmatpush1.msra.mxu0 0.0
  %1679 = vmatprep.subr.mxu0 0.0
  %1680 = vmatpush1.msra.mxu0 0.0
  %1681 = vmatprep.subr.mxu0 0.0
  %1682 = vmatpush1.msra.mxu0 0.0
  %1683 = vmatprep.subr.mxu0 0.0
  %1684 = vmatpush1.msra.mxu0 0.0
  %1685 = vmatprep.subr.mxu0 0.0
  %1686 = vmatpush1.msra.mxu0 0.0
  %1687 = vmatprep.subr.mxu0 0.0
  %1688 = vmatpush1.msra.mxu0 0.0
  %1689 = vmatprep.subr.mxu0 0.0
  %1690 = vmatpush1.msra.mxu0 0.0
  %1691 = vmatprep.subr.mxu0 0.0
  %1692 = vmatpush1.msra.mxu0 0.0
  %1693 = vmatprep.subr.mxu0 0.0
  %1694 = vmatpush1.msra.mxu0 0.0
  %1695 = vmatprep.subr.mxu0 0.0
  %1696 = vmatpush1.msra.mxu0 0.0
  %1697 = vmatprep.subr.mxu0 0.0
  %1698 = vmatpush1.msra.mxu0 0.0
  %1699 = vmatprep.subr.mxu0 0.0
  %1700 = vmatpush1.msra.mxu0 0.0
  %1701 = vmatprep.subr.mxu0 0.0
  %1702 = vmatpush1.msra.mxu0 0.0
  %1703 = vmatprep.subr.mxu0 0.0
  %1704 = vmatpush1.msra.mxu0 0.0
  %1705 = vmatprep.subr.mxu0 0.0
  %1706 = vmatpush1.msra.mxu0 0.0
  %1707 = vmatprep.mubr.f32.mxu0 0.0
  %1708 = vmatmul.mubr.f32.gmra.mrb[0].mxu0 %v1641
  %v1709 = vpop.f32.mrb[0].mxu0
  %v1710 = vadd.f32 %v458, %v1709
  %v1711 = vpop.f32.mrb[0].mxu0
  %1712 = vdwg.mxu0
  %v1713 = vxor.u32 %v1710, 2147483648
  %v1714 = vmul.f32 %v1713, 1.442695
  %v1715 = vpow.pop %v1714
  %v1716 = vadd.f32 %v1715, 1.0
  %v1717 = vrcp.pop %v1716
  %v1718 = vmul.f32 1.0, %v1717
  %v1719 = vtanh.pop %v1710
  %v1720 = vmul.f32 %v1718, %v1340
  %1722 = vrot.lane.b32.xlu0 %v1719, 64
  %v1723 = vpop.permute.xlu0 %1722
  %v1725 = vmul.f32 %v1718, %v1723
  %1727 = vrot.lane.b32.xlu0 %v1725, 32
  %v1728 = vpop.permute.xlu0 %1727
  %v1730 = vadd.f32 %v1720, %v1728
  %v1731 = vtanh.pop %v1730
  %1733 = vrot.lane.b32.xlu0 %v1731, 64
  %v1734 = vpop.permute.xlu0 %1733
  %v1736 = vmul.f32 %v1718, %v1734
  %1738 = vset.pattern.permute.xlu0 0
  %1739 = vperm.xlu0 %1738, %v220
  %v1740 = vpop.permute.xlu0 %1739
  %v1742 = vmul.f32 %v1736, %v1740
  %1744 = vrot.lane.b32.xlu0 %v1742, 32
  %v1745 = vpop.permute.xlu0 %1744
  %v1746 = vsel %vm225, %v1745, 0
  %1748 = vmatprep.subr.mxu0 0.0
  %1749 = vmatpush1.msra.mxu0 %v67
  %1750 = vmatprep.subr.mxu0 0.0
  %1751 = vmatpush1.msra.mxu0 %v68
  %1752 = vmatprep.subr.mxu0 0.0
  %1753 = vmatpush1.msra.mxu0 %v69
  %1754 = vmatprep.subr.mxu0 0.0
  %1755 = vmatpush1.msra.mxu0 %v70
  %1756 = vmatprep.subr.mxu0 0.0
  %1757 = vmatpush1.msra.mxu0 0.0
  %1758 = vmatprep.subr.mxu0 0.0
  %1759 = vmatpush1.msra.mxu0 0.0
  %1760 = vmatprep.subr.mxu0 0.0
  %1761 = vmatpush1.msra.mxu0 0.0
  %1762 = vmatprep.subr.mxu0 0.0
  %1763 = vmatpush1.msra.mxu0 0.0
  %1764 = vmatprep.subr.mxu0 0.0
  %1765 = vmatpush1.msra.mxu0 0.0
  %1766 = vmatprep.subr.mxu0 0.0
  %1767 = vmatpush1.msra.mxu0 0.0
  %1768 = vmatprep.subr.mxu0 0.0
  %1769 = vmatpush1.msra.mxu0 0.0
  %1770 = vmatprep.subr.mxu0 0.0
  %1771 = vmatpush1.msra.mxu0 0.0
  %1772 = vmatprep.subr.mxu0 0.0
  %1773 = vmatpush1.msra.mxu0 0.0
  %1774 = vmatprep.subr.mxu0 0.0
  %1775 = vmatpush1.msra.mxu0 0.0
  %1776 = vmatprep.subr.mxu0 0.0
  %1777 = vmatpush1.msra.mxu0 0.0
  %1778 = vmatprep.subr.mxu0 0.0
  %1779 = vmatpush1.msra.mxu0 0.0
  %1780 = vmatprep.subr.mxu0 0.0
  %1781 = vmatpush1.msra.mxu0 0.0
  %1782 = vmatprep.subr.mxu0 0.0
  %1783 = vmatpush1.msra.mxu0 0.0
  %1784 = vmatprep.subr.mxu0 0.0
  %1785 = vmatpush1.msra.mxu0 0.0
  %1786 = vmatprep.subr.mxu0 0.0
  %1787 = vmatpush1.msra.mxu0 0.0
  %1788 = vmatprep.subr.mxu0 0.0
  %1789 = vmatpush1.msra.mxu0 0.0
  %1790 = vmatprep.subr.mxu0 0.0
  %1791 = vmatpush1.msra.mxu0 0.0
  %1792 = vmatprep.subr.mxu0 0.0
  %1793 = vmatpush1.msra.mxu0 0.0
  %1794 = vmatprep.subr.mxu0 0.0
  %1795 = vmatpush1.msra.mxu0 0.0
  %1796 = vmatprep.subr.mxu0 0.0
  %1797 = vmatpush1.msra.mxu0 0.0
  %1798 = vmatprep.subr.mxu0 0.0
  %1799 = vmatpush1.msra.mxu0 0.0
  %1800 = vmatprep.subr.mxu0 0.0
  %1801 = vmatpush1.msra.mxu0 0.0
  %1802 = vmatprep.subr.mxu0 0.0
  %1803 = vmatpush1.msra.mxu0 0.0
  %1804 = vmatprep.subr.mxu0 0.0
  %1805 = vmatpush1.msra.mxu0 0.0
  %1806 = vmatprep.subr.mxu0 0.0
  %1807 = vmatpush1.msra.mxu0 0.0
  %1808 = vmatprep.subr.mxu0 0.0
  %1809 = vmatpush1.msra.mxu0 0.0
  %1810 = vmatprep.subr.mxu0 0.0
  %1811 = vmatpush1.msra.mxu0 0.0
  %1812 = vmatprep.mubr.f32.mxu0 0.0
  %1813 = vmatmul.mubr.f32.gmra.mrb[0].mxu0 %v1746
  %v1814 = vpop.f32.mrb[0].mxu0
  %v1815 = vadd.f32 %v571, %v1814
  %v1816 = vpop.f32.mrb[0].mxu0
  %1817 = vdwg.mxu0
  %1818 = vst [vmem:[%s13 + $0x18] sm:$0xff] %v1815
  %v1819 = vsel %vm225, %v1528, 0
  %1821 = vmatprep.subr.mxu0 0.0
  %1822 = vmatpush1.msra.mxu0 %v44
  %1823 = vmatprep.subr.mxu0 0.0
  %1824 = vmatpush1.msra.mxu0 %v45
  %1825 = vmatprep.subr.mxu0 0.0
  %1826 = vmatpush1.msra.mxu0 %v46
  %1827 = vmatprep.subr.mxu0 0.0
  %1828 = vmatpush1.msra.mxu0 %v47
  %1829 = vmatprep.subr.mxu0 0.0
  %1830 = vmatpush1.msra.mxu0 0.0
  %1831 = vmatprep.subr.mxu0 0.0
  %1832 = vmatpush1.msra.mxu0 0.0
  %1833 = vmatprep.subr.mxu0 0.0
  %1834 = vmatpush1.msra.mxu0 0.0
  %1835 = vmatprep.subr.mxu0 0.0
  %1836 = vmatpush1.msra.mxu0 0.0
  %1837 = vmatprep.subr.mxu0 0.0
  %1838 = vmatpush1.msra.mxu0 0.0
  %1839 = vmatprep.subr.mxu0 0.0
  %1840 = vmatpush1.msra.mxu0 0.0
  %1841 = vmatprep.subr.mxu0 0.0
  %1842 = vmatpush1.msra.mxu0 0.0
  %1843 = vmatprep.subr.mxu0 0.0
  %1844 = vmatpush1.msra.mxu0 0.0
  %1845 = vmatprep.subr.mxu0 0.0
  %1846 = vmatpush1.msra.mxu0 0.0
  %1847 = vmatprep.subr.mxu0 0.0
  %1848 = vmatpush1.msra.mxu0 0.0
  %1849 = vmatprep.subr.mxu0 0.0
  %1850 = vmatpush1.msra.mxu0 0.0
  %1851 = vmatprep.subr.mxu0 0.0
  %1852 = vmatpush1.msra.mxu0 0.0
  %1853 = vmatprep.subr.mxu0 0.0
  %1854 = vmatpush1.msra.mxu0 0.0
  %1855 = vmatprep.subr.mxu0 0.0
  %1856 = vmatpush1.msra.mxu0 0.0
  %1857 = vmatprep.subr.mxu0 0.0
  %1858 = vmatpush1.msra.mxu0 0.0
  %1859 = vmatprep.subr.mxu0 0.0
  %1860 = vmatpush1.msra.mxu0 0.0
  %1861 = vmatprep.subr.mxu0 0.0
  %1862 = vmatpush1.msra.mxu0 0.0
  %1863 = vmatprep.subr.mxu0 0.0
  %1864 = vmatpush1.msra.mxu0 0.0
  %1865 = vmatprep.subr.mxu0 0.0
  %1866 = vmatpush1.msra.mxu0 0.0
  %1867 = vmatprep.subr.mxu0 0.0
  %1868 = vmatpush1.msra.mxu0 0.0
  %1869 = vmatprep.subr.mxu0 0.0
  %1870 = vmatpush1.msra.mxu0 0.0
  %1871 = vmatprep.subr.mxu0 0.0
  %1872 = vmatpush1.msra.mxu0 0.0
  %1873 = vmatprep.subr.mxu0 0.0
  %1874 = vmatpush1.msra.mxu0 0.0
  %1875 = vmatprep.subr.mxu0 0.0
  %1876 = vmatpush1.msra.mxu0 0.0
  %1877 = vmatprep.subr.mxu0 0.0
  %1878 = vmatpush1.msra.mxu0 0.0
  %1879 = vmatprep.subr.mxu0 0.0
  %1880 = vmatpush1.msra.mxu0 0.0
  %1881 = vmatprep.subr.mxu0 0.0
  %1882 = vmatpush1.msra.mxu0 0.0
  %1883 = vmatprep.subr.mxu0 0.0
  %1884 = vmatpush1.msra.mxu0 0.0
  %1885 = vmatprep.mubr.f32.mxu0 0.0
  %1886 = vmatmul.mubr.f32.gmra.mrb[0].mxu0 %v1819
  %v1887 = vpop.f32.mrb[0].mxu0
  %v1888 = vadd.f32 0.0, %v1887
  %v1889 = vpop.f32.mrb[0].mxu0
  %1890 = vdwg.mxu0
  %v1891 = vadd.f32 %v189, %v1888
  %v1892 = vxor.u32 %v1891, 2147483648
  %v1893 = vmul.f32 %v1892, 1.442695
  %v1894 = vpow.pop %v1893
  %v1895 = vadd.f32 %v1894, 1.0
  %v1896 = vrcp.pop %v1895
  %v1897 = vmul.f32 1.0, %v1896
  %v1898 = vtanh.pop %v1891
  %v1899 = vmul.f32 %v1897, %v1519
  %1901 = vrot.lane.b32.xlu0 %v1898, 64
  %v1902 = vpop.permute.xlu0 %1901
  %v1904 = vmul.f32 %v1897, %v1902
  %1906 = vrot.lane.b32.xlu0 %v1904, 32
  %v1907 = vpop.permute.xlu0 %1906
  %v1909 = vadd.f32 %v1899, %v1907
  %v1910 = vtanh.pop %v1909
  %1912 = vrot.lane.b32.xlu0 %v1910, 64
  %v1913 = vpop.permute.xlu0 %1912
  %v1915 = vmul.f32 %v1897, %v1913
  %1917 = vrot.lane.b32.xlu0 %v1915, 32
  %v1918 = vpop.permute.xlu0 %1917
  %1920 = vrot.lane.b32.xlu0 %v1630, 64
  %v1921 = vpop.permute.xlu0 %1920
  %v1923 = vsel %vm225, %v1918, %v1921
  %v1925 = vsel %vm343, %v1923, 0
  %1927 = vmatprep.subr.mxu0 0.0
  %1928 = vmatpush1.msra.mxu0 %v48
  %1929 = vmatprep.subr.mxu0 0.0
  %1930 = vmatpush1.msra.mxu0 %v49
  %1931 = vmatprep.subr.mxu0 0.0
  %1932 = vmatpush1.msra.mxu0 %v50
  %1933 = vmatprep.subr.mxu0 0.0
  %1934 = vmatpush1.msra.mxu0 %v51
  %1935 = vmatprep.subr.mxu0 0.0
  %1936 = vmatpush1.msra.mxu0 %v52
  %1937 = vmatprep.subr.mxu0 0.0
  %1938 = vmatpush1.msra.mxu0 %v53
  %1939 = vmatprep.subr.mxu0 0.0
  %1940 = vmatpush1.msra.mxu0 %v54
  %1941 = vmatprep.subr.mxu0 0.0
  %1942 = vmatpush1.msra.mxu0 %v55
  %1943 = vmatprep.subr.mxu0 0.0
  %1944 = vmatpush1.msra.mxu0 0.0
  %1945 = vmatprep.subr.mxu0 0.0
  %1946 = vmatpush1.msra.mxu0 0.0
  %1947 = vmatprep.subr.mxu0 0.0
  %1948 = vmatpush1.msra.mxu0 0.0
  %1949 = vmatprep.subr.mxu0 0.0
  %1950 = vmatpush1.msra.mxu0 0.0
  %1951 = vmatprep.subr.mxu0 0.0
  %1952 = vmatpush1.msra.mxu0 0.0
  %1953 = vmatprep.subr.mxu0 0.0
  %1954 = vmatpush1.msra.mxu0 0.0
  %1955 = vmatprep.subr.mxu0 0.0
  %1956 = vmatpush1.msra.mxu0 0.0
  %1957 = vmatprep.subr.mxu0 0.0
  %1958 = vmatpush1.msra.mxu0 0.0
  %1959 = vmatprep.subr.mxu0 0.0
  %1960 = vmatpush1.msra.mxu0 0.0
  %1961 = vmatprep.subr.mxu0 0.0
  %1962 = vmatpush1.msra.mxu0 0.0
  %1963 = vmatprep.subr.mxu0 0.0
  %1964 = vmatpush1.msra.mxu0 0.0
  %1965 = vmatprep.subr.mxu0 0.0
  %1966 = vmatpush1.msra.mxu0 0.0
  %1967 = vmatprep.subr.mxu0 0.0
  %1968 = vmatpush1.msra.mxu0 0.0
  %1969 = vmatprep.subr.mxu0 0.0
  %1970 = vmatpush1.msra.mxu0 0.0
  %1971 = vmatprep.subr.mxu0 0.0
  %1972 = vmatpush1.msra.mxu0 0.0
  %1973 = vmatprep.subr.mxu0 0.0
  %1974 = vmatpush1.msra.mxu0 0.0
  %1975 = vmatprep.subr.mxu0 0.0
  %1976 = vmatpush1.msra.mxu0 0.0
  %1977 = vmatprep.subr.mxu0 0.0
  %1978 = vmatpush1.msra.mxu0 0.0
  %1979 = vmatprep.subr.mxu0 0.0
  %1980 = vmatpush1.msra.mxu0 0.0
  %1981 = vmatprep.subr.mxu0 0.0
  %1982 = vmatpush1.msra.mxu0 0.0
  %1983 = vmatprep.subr.mxu0 0.0
  %1984 = vmatpush1.msra.mxu0 0.0
  %1985 = vmatprep.subr.mxu0 0.0
  %1986 = vmatpush1.msra.mxu0 0.0
  %1987 = vmatprep.subr.mxu0 0.0
  %1988 = vmatpush1.msra.mxu0 0.0
  %1989 = vmatprep.subr.mxu0 0.0
  %1990 = vmatpush1.msra.mxu0 0.0
  %1991 = vmatprep.mubr.f32.mxu0 0.0
  %1992 = vmatmul.mubr.f32.gmra.mrb[0].mxu0 %v1925
  %v1993 = vpop.f32.mrb[0].mxu0
  %v1994 = vadd.f32 %v341, %v1993
  %v1995 = vpop.f32.mrb[0].mxu0
  %1996 = vdwg.mxu0
  %v1997 = vxor.u32 %v1994, 2147483648
  %v1998 = vmul.f32 %v1997, 1.442695
  %v1999 = vpow.pop %v1998
  %v2000 = vadd.f32 %v1999, 1.0
  %v2001 = vrcp.pop %v2000
  %v2002 = vmul.f32 1.0, %v2001
  %v2003 = vtanh.pop %v1994
  %v2004 = vmul.f32 %v2002, %v1624
  %2006 = vrot.lane.b32.xlu0 %v2003, 64
  %v2007 = vpop.permute.xlu0 %2006
  %v2009 = vmul.f32 %v2002, %v2007
  %2011 = vrot.lane.b32.xlu0 %v2009, 32
  %v2012 = vpop.permute.xlu0 %2011
  %v2014 = vadd.f32 %v2004, %v2012
  %v2015 = vtanh.pop %v2014
  %2017 = vrot.lane.b32.xlu0 %v2015, 64
  %v2018 = vpop.permute.xlu0 %2017
  %v2020 = vmul.f32 %v2002, %v2018
  %2022 = vrot.lane.b32.xlu0 %v2020, 32
  %v2023 = vpop.permute.xlu0 %2022
  %2026 = vrot.lane.b32.xlu0 %v1736, 64
  %v2027 = vpop.permute.xlu0 %2026
  %v2029 = vsel %vm225, %v2023, %v2027
  %v2031 = vsel %vm343, %v2029, 0
  %2033 = vmatprep.subr.mxu0 0.0
  %2034 = vmatpush1.msra.mxu0 %v56
  %2035 = vmatprep.subr.mxu0 0.0
  %2036 = vmatpush1.msra.mxu0 %v57
  %2037 = vmatprep.subr.mxu0 0.0
  %2038 = vmatpush1.msra.mxu0 %v58
  %2039 = vmatprep.subr.mxu0 0.0
  %2040 = vmatpush1.msra.mxu0 %v59
  %2041 = vmatprep.subr.mxu0 0.0
  %2042 = vmatpush1.msra.mxu0 %v60
  %2043 = vmatprep.subr.mxu0 0.0
  %2044 = vmatpush1.msra.mxu0 %v61
  %2045 = vmatprep.subr.mxu0 0.0
  %2046 = vmatpush1.msra.mxu0 %v62
  %2047 = vmatprep.subr.mxu0 0.0
  %2048 = vmatpush1.msra.mxu0 %v63
  %2049 = vmatprep.subr.mxu0 0.0
  %2050 = vmatpush1.msra.mxu0 0.0
  %2051 = vmatprep.subr.mxu0 0.0
  %2052 = vmatpush1.msra.mxu0 0.0
  %2053 = vmatprep.subr.mxu0 0.0
  %2054 = vmatpush1.msra.mxu0 0.0
  %2055 = vmatprep.subr.mxu0 0.0
  %2056 = vmatpush1.msra.mxu0 0.0
  %2057 = vmatprep.subr.mxu0 0.0
  %2058 = vmatpush1.msra.mxu0 0.0
  %2059 = vmatprep.subr.mxu0 0.0
  %2060 = vmatpush1.msra.mxu0 0.0
  %2061 = vmatprep.subr.mxu0 0.0
  %2062 = vmatpush1.msra.mxu0 0.0
  %2063 = vmatprep.subr.mxu0 0.0
  %2064 = vmatpush1.msra.mxu0 0.0
  %2065 = vmatprep.subr.mxu0 0.0
  %2066 = vmatpush1.msra.mxu0 0.0
  %2067 = vmatprep.subr.mxu0 0.0
  %2068 = vmatpush1.msra.mxu0 0.0
  %2069 = vmatprep.subr.mxu0 0.0
  %2070 = vmatpush1.msra.mxu0 0.0
  %2071 = vmatprep.subr.mxu0 0.0
  %2072 = vmatpush1.msra.mxu0 0.0
  %2073 = vmatprep.subr.mxu0 0.0
  %2074 = vmatpush1.msra.mxu0 0.0
  %2075 = vmatprep.subr.mxu0 0.0
  %2076 = vmatpush1.msra.mxu0 0.0
  %2077 = vmatprep.subr.mxu0 0.0
  %2078 = vmatpush1.msra.mxu0 0.0
  %2079 = vmatprep.subr.mxu0 0.0
  %2080 = vmatpush1.msra.mxu0 0.0
  %2081 = vmatprep.subr.mxu0 0.0
  %2082 = vmatpush1.msra.mxu0 0.0
  %2083 = vmatprep.subr.mxu0 0.0
  %2084 = vmatpush1.msra.mxu0 0.0
  %2085 = vmatprep.subr.mxu0 0.0
  %2086 = vmatpush1.msra.mxu0 0.0
  %2087 = vmatprep.subr.mxu0 0.0
  %2088 = vmatpush1.msra.mxu0 0.0
  %2089 = vmatprep.subr.mxu0 0.0
  %2090 = vmatpush1.msra.mxu0 0.0
  %2091 = vmatprep.subr.mxu0 0.0
  %2092 = vmatpush1.msra.mxu0 0.0
  %2093 = vmatprep.subr.mxu0 0.0
  %2094 = vmatpush1.msra.mxu0 0.0
  %2095 = vmatprep.subr.mxu0 0.0
  %2096 = vmatpush1.msra.mxu0 0.0
  %2097 = vmatprep.mubr.f32.mxu0 0.0
  %2098 = vmatmul.mubr.f32.gmra.mrb[0].mxu0 %v2031
  %v2099 = vpop.f32.mrb[0].mxu0
  %v2100 = vadd.f32 %v458, %v2099
  %v2101 = vpop.f32.mrb[0].mxu0
  %2102 = vdwg.mxu0
  %v2103 = vxor.u32 %v2100, 2147483648
  %v2104 = vmul.f32 %v2103, 1.442695
  %v2105 = vpow.pop %v2104
  %v2106 = vadd.f32 %v2105, 1.0
  %v2107 = vrcp.pop %v2106
  %v2108 = vmul.f32 1.0, %v2107
  %v2109 = vtanh.pop %v2100
  %v2110 = vmul.f32 %v2108, %v1730
  %2112 = vrot.lane.b32.xlu0 %v2109, 64
  %v2113 = vpop.permute.xlu0 %2112
  %v2115 = vmul.f32 %v2108, %v2113
  %2117 = vrot.lane.b32.xlu0 %v2115, 32
  %v2118 = vpop.permute.xlu0 %2117
  %v2120 = vadd.f32 %v2110, %v2118
  %v2121 = vtanh.pop %v2120
  %2123 = vrot.lane.b32.xlu0 %v2121, 64
  %v2124 = vpop.permute.xlu0 %2123
  %v2126 = vmul.f32 %v2108, %v2124
  %2128 = vset.pattern.permute.xlu0 0
  %2129 = vperm.xlu0 %2128, %v221
  %v2130 = vpop.permute.xlu0 %2129
  %v2132 = vmul.f32 %v2126, %v2130
  %2134 = vrot.lane.b32.xlu0 %v2132, 32
  %v2135 = vpop.permute.xlu0 %2134
  %v2136 = vsel %vm225, %v2135, 0
  %2138 = vmatprep.subr.mxu0 0.0
  %2139 = vmatpush1.msra.mxu0 %v67
  %2140 = vmatprep.subr.mxu0 0.0
  %2141 = vmatpush1.msra.mxu0 %v68
  %2142 = vmatprep.subr.mxu0 0.0
  %2143 = vmatpush1.msra.mxu0 %v69
  %2144 = vmatprep.subr.mxu0 0.0
  %2145 = vmatpush1.msra.mxu0 %v70
  %2146 = vmatprep.subr.mxu0 0.0
  %2147 = vmatpush1.msra.mxu0 0.0
  %2148 = vmatprep.subr.mxu0 0.0
  %2149 = vmatpush1.msra.mxu0 0.0
  %2150 = vmatprep.subr.mxu0 0.0
  %2151 = vmatpush1.msra.mxu0 0.0
  %2152 = vmatprep.subr.mxu0 0.0
  %2153 = vmatpush1.msra.mxu0 0.0
  %2154 = vmatprep.subr.mxu0 0.0
  %2155 = vmatpush1.msra.mxu0 0.0
  %2156 = vmatprep.subr.mxu0 0.0
  %2157 = vmatpush1.msra.mxu0 0.0
  %2158 = vmatprep.subr.mxu0 0.0
  %2159 = vmatpush1.msra.mxu0 0.0
  %2160 = vmatprep.subr.mxu0 0.0
  %2161 = vmatpush1.msra.mxu0 0.0
  %2162 = vmatprep.subr.mxu0 0.0
  %2163 = vmatpush1.msra.mxu0 0.0
  %2164 = vmatprep.subr.mxu0 0.0
  %2165 = vmatpush1.msra.mxu0 0.0
  %2166 = vmatprep.subr.mxu0 0.0
  %2167 = vmatpush1.msra.mxu0 0.0
  %2168 = vmatprep.subr.mxu0 0.0
  %2169 = vmatpush1.msra.mxu0 0.0
  %2170 = vmatprep.subr.mxu0 0.0
  %2171 = vmatpush1.msra.mxu0 0.0
  %2172 = vmatprep.subr.mxu0 0.0
  %2173 = vmatpush1.msra.mxu0 0.0
  %2174 = vmatprep.subr.mxu0 0.0
  %2175 = vmatpush1.msra.mxu0 0.0
  %2176 = vmatprep.subr.mxu0 0.0
  %2177 = vmatpush1.msra.mxu0 0.0
  %2178 = vmatprep.subr.mxu0 0.0
  %2179 = vmatpush1.msra.mxu0 0.0
  %2180 = vmatprep.subr.mxu0 0.0
  %2181 = vmatpush1.msra.mxu0 0.0
  %2182 = vmatprep.subr.mxu0 0.0
  %2183 = vmatpush1.msra.mxu0 0.0
  %2184 = vmatprep.subr.mxu0 0.0
  %2185 = vmatpush1.msra.mxu0 0.0
  %2186 = vmatprep.subr.mxu0 0.0
  %2187 = vmatpush1.msra.mxu0 0.0
  %2188 = vmatprep.subr.mxu0 0.0
  %2189 = vmatpush1.msra.mxu0 0.0
  %2190 = vmatprep.subr.mxu0 0.0
  %2191 = vmatpush1.msra.mxu0 0.0
  %2192 = vmatprep.subr.mxu0 0.0
  %2193 = vmatpush1.msra.mxu0 0.0
  %2194 = vmatprep.subr.mxu0 0.0
  %2195 = vmatpush1.msra.mxu0 0.0
  %2196 = vmatprep.subr.mxu0 0.0
  %2197 = vmatpush1.msra.mxu0 0.0
  %2198 = vmatprep.subr.mxu0 0.0
  %2199 = vmatpush1.msra.mxu0 0.0
  %2200 = vmatprep.subr.mxu0 0.0
  %2201 = vmatpush1.msra.mxu0 0.0
  %2202 = vmatprep.mubr.f32.mxu0 0.0
  %2203 = vmatmul.mubr.f32.gmra.mrb[0].mxu0 %v2136
  %v2204 = vpop.f32.mrb[0].mxu0
  %v2205 = vadd.f32 %v571, %v2204
  %v2206 = vpop.f32.mrb[0].mxu0
  %2207 = vdwg.mxu0
  %2208 = vst [vmem:[%s13 + $0x20] sm:$0xff] %v2205
  %v2209 = vsel %vm225, %v1918, 0
  %2211 = vmatprep.subr.mxu0 0.0
  %2212 = vmatpush1.msra.mxu0 %v44
  %2213 = vmatprep.subr.mxu0 0.0
  %2214 = vmatpush1.msra.mxu0 %v45
  %2215 = vmatprep.subr.mxu0 0.0
  %2216 = vmatpush1.msra.mxu0 %v46
  %2217 = vmatprep.subr.mxu0 0.0
  %2218 = vmatpush1.msra.mxu0 %v47
  %2219 = vmatprep.subr.mxu0 0.0
  %2220 = vmatpush1.msra.mxu0 0.0
  %2221 = vmatprep.subr.mxu0 0.0
  %2222 = vmatpush1.msra.mxu0 0.0
  %2223 = vmatprep.subr.mxu0 0.0
  %2224 = vmatpush1.msra.mxu0 0.0
  %2225 = vmatprep.subr.mxu0 0.0
  %2226 = vmatpush1.msra.mxu0 0.0
  %2227 = vmatprep.subr.mxu0 0.0
  %2228 = vmatpush1.msra.mxu0 0.0
  %2229 = vmatprep.subr.mxu0 0.0
  %2230 = vmatpush1.msra.mxu0 0.0
  %2231 = vmatprep.subr.mxu0 0.0
  %2232 = vmatpush1.msra.mxu0 0.0
  %2233 = vmatprep.subr.mxu0 0.0
  %2234 = vmatpush1.msra.mxu0 0.0
  %2235 = vmatprep.subr.mxu0 0.0
  %2236 = vmatpush1.msra.mxu0 0.0
  %2237 = vmatprep.subr.mxu0 0.0
  %2238 = vmatpush1.msra.mxu0 0.0
  %2239 = vmatprep.subr.mxu0 0.0
  %2240 = vmatpush1.msra.mxu0 0.0
  %2241 = vmatprep.subr.mxu0 0.0
  %2242 = vmatpush1.msra.mxu0 0.0
  %2243 = vmatprep.subr.mxu0 0.0
  %2244 = vmatpush1.msra.mxu0 0.0
  %2245 = vmatprep.subr.mxu0 0.0
  %2246 = vmatpush1.msra.mxu0 0.0
  %2247 = vmatprep.subr.mxu0 0.0
  %2248 = vmatpush1.msra.mxu0 0.0
  %2249 = vmatprep.subr.mxu0 0.0
  %2250 = vmatpush1.msra.mxu0 0.0
  %2251 = vmatprep.subr.mxu0 0.0
  %2252 = vmatpush1.msra.mxu0 0.0
  %2253 = vmatprep.subr.mxu0 0.0
  %2254 = vmatpush1.msra.mxu0 0.0
  %2255 = vmatprep.subr.mxu0 0.0
  %2256 = vmatpush1.msra.mxu0 0.0
  %2257 = vmatprep.subr.mxu0 0.0
  %2258 = vmatpush1.msra.mxu0 0.0
  %2259 = vmatprep.subr.mxu0 0.0
  %2260 = vmatpush1.msra.mxu0 0.0
  %2261 = vmatprep.subr.mxu0 0.0
  %2262 = vmatpush1.msra.mxu0 0.0
  %2263 = vmatprep.subr.mxu0 0.0
  %2264 = vmatpush1.msra.mxu0 0.0
  %2265 = vmatprep.subr.mxu0 0.0
  %2266 = vmatpush1.msra.mxu0 0.0
  %2267 = vmatprep.subr.mxu0 0.0
  %2268 = vmatpush1.msra.mxu0 0.0
  %2269 = vmatprep.subr.mxu0 0.0
  %2270 = vmatpush1.msra.mxu0 0.0
  %2271 = vmatprep.subr.mxu0 0.0
  %2272 = vmatpush1.msra.mxu0 0.0
  %2273 = vmatprep.subr.mxu0 0.0
  %2274 = vmatpush1.msra.mxu0 0.0
  %2275 = vmatprep.mubr.f32.mxu0 0.0
  %2276 = vmatmul.mubr.f32.gmra.mrb[0].mxu0 %v2209
  %v2277 = vpop.f32.mrb[0].mxu0
  %v2278 = vadd.f32 0.0, %v2277
  %v2279 = vpop.f32.mrb[0].mxu0
  %2280 = vdwg.mxu0
  %v2281 = vadd.f32 %v194, %v2278
  %v2282 = vxor.u32 %v2281, 2147483648
  %v2283 = vmul.f32 %v2282, 1.442695
  %v2284 = vpow.pop %v2283
  %v2285 = vadd.f32 %v2284, 1.0
  %v2286 = vrcp.pop %v2285
  %v2287 = vmul.f32 1.0, %v2286
  %v2288 = vtanh.pop %v2281
  %v2289 = vmul.f32 %v2287, %v1909
  %2291 = vrot.lane.b32.xlu0 %v2288, 64
  %v2292 = vpop.permute.xlu0 %2291
  %v2294 = vmul.f32 %v2287, %v2292
  %2296 = vrot.lane.b32.xlu0 %v2294, 32
  %v2297 = vpop.permute.xlu0 %2296
  %v2299 = vadd.f32 %v2289, %v2297
  %v2300 = vtanh.pop %v2299
  %2302 = vrot.lane.b32.xlu0 %v2300, 64
  %v2303 = vpop.permute.xlu0 %2302
  %v2305 = vmul.f32 %v2287, %v2303
  %2307 = vrot.lane.b32.xlu0 %v2305, 32
  %v2308 = vpop.permute.xlu0 %2307
  %2310 = vrot.lane.b32.xlu0 %v2020, 64
  %v2311 = vpop.permute.xlu0 %2310
  %v2313 = vsel %vm225, %v2308, %v2311
  %v2315 = vsel %vm343, %v2313, 0
  %2317 = vmatprep.subr.mxu0 0.0
  %2318 = vmatpush1.msra.mxu0 %v48
  %2319 = vmatprep.subr.mxu0 0.0
  %2320 = vmatpush1.msra.mxu0 %v49
  %2321 = vmatprep.subr.mxu0 0.0
  %2322 = vmatpush1.msra.mxu0 %v50
  %2323 = vmatprep.subr.mxu0 0.0
  %2324 = vmatpush1.msra.mxu0 %v51
  %2325 = vmatprep.subr.mxu0 0.0
  %2326 = vmatpush1.msra.mxu0 %v52
  %2327 = vmatprep.subr.mxu0 0.0
  %2328 = vmatpush1.msra.mxu0 %v53
  %2329 = vmatprep.subr.mxu0 0.0
  %2330 = vmatpush1.msra.mxu0 %v54
  %2331 = vmatprep.subr.mxu0 0.0
  %2332 = vmatpush1.msra.mxu0 %v55
  %2333 = vmatprep.subr.mxu0 0.0
  %2334 = vmatpush1.msra.mxu0 0.0
  %2335 = vmatprep.subr.mxu0 0.0
  %2336 = vmatpush1.msra.mxu0 0.0
  %2337 = vmatprep.subr.mxu0 0.0
  %2338 = vmatpush1.msra.mxu0 0.0
  %2339 = vmatprep.subr.mxu0 0.0
  %2340 = vmatpush1.msra.mxu0 0.0
  %2341 = vmatprep.subr.mxu0 0.0
  %2342 = vmatpush1.msra.mxu0 0.0
  %2343 = vmatprep.subr.mxu0 0.0
  %2344 = vmatpush1.msra.mxu0 0.0
  %2345 = vmatprep.subr.mxu0 0.0
  %2346 = vmatpush1.msra.mxu0 0.0
  %2347 = vmatprep.subr.mxu0 0.0
  %2348 = vmatpush1.msra.mxu0 0.0
  %2349 = vmatprep.subr.mxu0 0.0
  %2350 = vmatpush1.msra.mxu0 0.0
  %2351 = vmatprep.subr.mxu0 0.0
  %2352 = vmatpush1.msra.mxu0 0.0
  %2353 = vmatprep.subr.mxu0 0.0
  %2354 = vmatpush1.msra.mxu0 0.0
  %2355 = vmatprep.subr.mxu0 0.0
  %2356 = vmatpush1.msra.mxu0 0.0
  %2357 = vmatprep.subr.mxu0 0.0
  %2358 = vmatpush1.msra.mxu0 0.0
  %2359 = vmatprep.subr.mxu0 0.0
  %2360 = vmatpush1.msra.mxu0 0.0
  %2361 = vmatprep.subr.mxu0 0.0
  %2362 = vmatpush1.msra.mxu0 0.0
  %2363 = vmatprep.subr.mxu0 0.0
  %2364 = vmatpush1.msra.mxu0 0.0
  %2365 = vmatprep.subr.mxu0 0.0
  %2366 = vmatpush1.msra.mxu0 0.0
  %2367 = vmatprep.subr.mxu0 0.0
  %2368 = vmatpush1.msra.mxu0 0.0
  %2369 = vmatprep.subr.mxu0 0.0
  %2370 = vmatpush1.msra.mxu0 0.0
  %2371 = vmatprep.subr.mxu0 0.0
  %2372 = vmatpush1.msra.mxu0 0.0
  %2373 = vmatprep.subr.mxu0 0.0
  %2374 = vmatpush1.msra.mxu0 0.0
  %2375 = vmatprep.subr.mxu0 0.0
  %2376 = vmatpush1.msra.mxu0 0.0
  %2377 = vmatprep.subr.mxu0 0.0
  %2378 = vmatpush1.msra.mxu0 0.0
  %2379 = vmatprep.subr.mxu0 0.0
  %2380 = vmatpush1.msra.mxu0 0.0
  %2381 = vmatprep.mubr.f32.mxu0 0.0
  %2382 = vmatmul.mubr.f32.gmra.mrb[0].mxu0 %v2315
  %v2383 = vpop.f32.mrb[0].mxu0
  %v2384 = vadd.f32 %v341, %v2383
  %v2385 = vpop.f32.mrb[0].mxu0
  %2386 = vdwg.mxu0
  %v2387 = vxor.u32 %v2384, 2147483648
  %v2388 = vmul.f32 %v2387, 1.442695
  %v2389 = vpow.pop %v2388
  %v2390 = vadd.f32 %v2389, 1.0
  %v2391 = vrcp.pop %v2390
  %v2392 = vmul.f32 1.0, %v2391
  %v2393 = vtanh.pop %v2384
  %v2394 = vmul.f32 %v2392, %v2014
  %2396 = vrot.lane.b32.xlu0 %v2393, 64
  %v2397 = vpop.permute.xlu0 %2396
  %v2399 = vmul.f32 %v2392, %v2397
  %2401 = vrot.lane.b32.xlu0 %v2399, 32
  %v2402 = vpop.permute.xlu0 %2401
  %v2404 = vadd.f32 %v2394, %v2402
  %v2405 = vtanh.pop %v2404
  %2407 = vrot.lane.b32.xlu0 %v2405, 64
  %v2408 = vpop.permute.xlu0 %2407
  %v2410 = vmul.f32 %v2392, %v2408
  %2412 = vrot.lane.b32.xlu0 %v2410, 32
  %v2413 = vpop.permute.xlu0 %2412
  %2416 = vrot.lane.b32.xlu0 %v2126, 64
  %v2417 = vpop.permute.xlu0 %2416
  %v2419 = vsel %vm225, %v2413, %v2417
  %v2421 = vsel %vm343, %v2419, 0
  %2423 = vmatprep.subr.mxu0 0.0
  %2424 = vmatpush1.msra.mxu0 %v56
  %2425 = vmatprep.subr.mxu0 0.0
  %2426 = vmatpush1.msra.mxu0 %v57
  %2427 = vmatprep.subr.mxu0 0.0
  %2428 = vmatpush1.msra.mxu0 %v58
  %2429 = vmatprep.subr.mxu0 0.0
  %2430 = vmatpush1.msra.mxu0 %v59
  %2431 = vmatprep.subr.mxu0 0.0
  %2432 = vmatpush1.msra.mxu0 %v60
  %2433 = vmatprep.subr.mxu0 0.0
  %2434 = vmatpush1.msra.mxu0 %v61
  %2435 = vmatprep.subr.mxu0 0.0
  %2436 = vmatpush1.msra.mxu0 %v62
  %2437 = vmatprep.subr.mxu0 0.0
  %2438 = vmatpush1.msra.mxu0 %v63
  %2439 = vmatprep.subr.mxu0 0.0
  %2440 = vmatpush1.msra.mxu0 0.0
  %2441 = vmatprep.subr.mxu0 0.0
  %2442 = vmatpush1.msra.mxu0 0.0
  %2443 = vmatprep.subr.mxu0 0.0
  %2444 = vmatpush1.msra.mxu0 0.0
  %2445 = vmatprep.subr.mxu0 0.0
  %2446 = vmatpush1.msra.mxu0 0.0
  %2447 = vmatprep.subr.mxu0 0.0
  %2448 = vmatpush1.msra.mxu0 0.0
  %2449 = vmatprep.subr.mxu0 0.0
  %2450 = vmatpush1.msra.mxu0 0.0
  %2451 = vmatprep.subr.mxu0 0.0
  %2452 = vmatpush1.msra.mxu0 0.0
  %2453 = vmatprep.subr.mxu0 0.0
  %2454 = vmatpush1.msra.mxu0 0.0
  %2455 = vmatprep.subr.mxu0 0.0
  %2456 = vmatpush1.msra.mxu0 0.0
  %2457 = vmatprep.subr.mxu0 0.0
  %2458 = vmatpush1.msra.mxu0 0.0
  %2459 = vmatprep.subr.mxu0 0.0
  %2460 = vmatpush1.msra.mxu0 0.0
  %2461 = vmatprep.subr.mxu0 0.0
  %2462 = vmatpush1.msra.mxu0 0.0
  %2463 = vmatprep.subr.mxu0 0.0
  %2464 = vmatpush1.msra.mxu0 0.0
  %2465 = vmatprep.subr.mxu0 0.0
  %2466 = vmatpush1.msra.mxu0 0.0
  %2467 = vmatprep.subr.mxu0 0.0
  %2468 = vmatpush1.msra.mxu0 0.0
  %2469 = vmatprep.subr.mxu0 0.0
  %2470 = vmatpush1.msra.mxu0 0.0
  %2471 = vmatprep.subr.mxu0 0.0
  %2472 = vmatpush1.msra.mxu0 0.0
  %2473 = vmatprep.subr.mxu0 0.0
  %2474 = vmatpush1.msra.mxu0 0.0
  %2475 = vmatprep.subr.mxu0 0.0
  %2476 = vmatpush1.msra.mxu0 0.0
  %2477 = vmatprep.subr.mxu0 0.0
  %2478 = vmatpush1.msra.mxu0 0.0
  %2479 = vmatprep.subr.mxu0 0.0
  %2480 = vmatpush1.msra.mxu0 0.0
  %2481 = vmatprep.subr.mxu0 0.0
  %2482 = vmatpush1.msra.mxu0 0.0
  %2483 = vmatprep.subr.mxu0 0.0
  %2484 = vmatpush1.msra.mxu0 0.0
  %2485 = vmatprep.subr.mxu0 0.0
  %2486 = vmatpush1.msra.mxu0 0.0
  %2487 = vmatprep.mubr.f32.mxu0 0.0
  %2488 = vmatmul.mubr.f32.gmra.mrb[0].mxu0 %v2421
  %v2489 = vpop.f32.mrb[0].mxu0
  %v2490 = vadd.f32 %v458, %v2489
  %v2491 = vpop.f32.mrb[0].mxu0
  %2492 = vdwg.mxu0
  %v2493 = vxor.u32 %v2490, 2147483648
  %v2494 = vmul.f32 %v2493, 1.442695
  %v2495 = vpow.pop %v2494
  %v2496 = vadd.f32 %v2495, 1.0
  %v2497 = vrcp.pop %v2496
  %v2498 = vmul.f32 1.0, %v2497
  %v2499 = vtanh.pop %v2490
  %v2500 = vmul.f32 %v2498, %v2120
  %2502 = vrot.lane.b32.xlu0 %v2499, 64
  %v2503 = vpop.permute.xlu0 %2502
  %v2505 = vmul.f32 %v2498, %v2503
  %2507 = vrot.lane.b32.xlu0 %v2505, 32
  %v2508 = vpop.permute.xlu0 %2507
  %v2510 = vadd.f32 %v2500, %v2508
  %v2511 = vtanh.pop %v2510
  %2513 = vrot.lane.b32.xlu0 %v2511, 64
  %v2514 = vpop.permute.xlu0 %2513
  %v2516 = vmul.f32 %v2498, %v2514
  %2518 = vset.pattern.permute.xlu0 0
  %2519 = vperm.xlu0 %2518, %v222
  %v2520 = vpop.permute.xlu0 %2519
  %v2522 = vmul.f32 %v2516, %v2520
  %2524 = vrot.lane.b32.xlu0 %v2522, 32
  %v2525 = vpop.permute.xlu0 %2524
  %v2526 = vsel %vm225, %v2525, 0
  %2528 = vmatprep.subr.mxu0 0.0
  %2529 = vmatpush1.msra.mxu0 %v67
  %2530 = vmatprep.subr.mxu0 0.0
  %2531 = vmatpush1.msra.mxu0 %v68
  %2532 = vmatprep.subr.mxu0 0.0
  %2533 = vmatpush1.msra.mxu0 %v69
  %2534 = vmatprep.subr.mxu0 0.0
  %2535 = vmatpush1.msra.mxu0 %v70
  %2536 = vmatprep.subr.mxu0 0.0
  %2537 = vmatpush1.msra.mxu0 0.0
  %2538 = vmatprep.subr.mxu0 0.0
  %2539 = vmatpush1.msra.mxu0 0.0
  %2540 = vmatprep.subr.mxu0 0.0
  %2541 = vmatpush1.msra.mxu0 0.0
  %2542 = vmatprep.subr.mxu0 0.0
  %2543 = vmatpush1.msra.mxu0 0.0
  %2544 = vmatprep.subr.mxu0 0.0
  %2545 = vmatpush1.msra.mxu0 0.0
  %2546 = vmatprep.subr.mxu0 0.0
  %2547 = vmatpush1.msra.mxu0 0.0
  %2548 = vmatprep.subr.mxu0 0.0
  %2549 = vmatpush1.msra.mxu0 0.0
  %2550 = vmatprep.subr.mxu0 0.0
  %2551 = vmatpush1.msra.mxu0 0.0
  %2552 = vmatprep.subr.mxu0 0.0
  %2553 = vmatpush1.msra.mxu0 0.0
  %2554 = vmatprep.subr.mxu0 0.0
  %2555 = vmatpush1.msra.mxu0 0.0
  %2556 = vmatprep.subr.mxu0 0.0
  %2557 = vmatpush1.msra.mxu0 0.0
  %2558 = vmatprep.subr.mxu0 0.0
  %2559 = vmatpush1.msra.mxu0 0.0
  %2560 = vmatprep.subr.mxu0 0.0
  %2561 = vmatpush1.msra.mxu0 0.0
  %2562 = vmatprep.subr.mxu0 0.0
  %2563 = vmatpush1.msra.mxu0 0.0
  %2564 = vmatprep.subr.mxu0 0.0
  %2565 = vmatpush1.msra.mxu0 0.0
  %2566 = vmatprep.subr.mxu0 0.0
  %2567 = vmatpush1.msra.mxu0 0.0
  %2568 = vmatprep.subr.mxu0 0.0
  %2569 = vmatpush1.msra.mxu0 0.0
  %2570 = vmatprep.subr.mxu0 0.0
  %2571 = vmatpush1.msra.mxu0 0.0
  %2572 = vmatprep.subr.mxu0 0.0
  %2573 = vmatpush1.msra.mxu0 0.0
  %2574 = vmatprep.subr.mxu0 0.0
  %2575 = vmatpush1.msra.mxu0 0.0
  %2576 = vmatprep.subr.mxu0 0.0
  %2577 = vmatpush1.msra.mxu0 0.0
  %2578 = vmatprep.subr.mxu0 0.0
  %2579 = vmatpush1.msra.mxu0 0.0
  %2580 = vmatprep.subr.mxu0 0.0
  %2581 = vmatpush1.msra.mxu0 0.0
  %2582 = vmatprep.subr.mxu0 0.0
  %2583 = vmatpush1.msra.mxu0 0.0
  %2584 = vmatprep.subr.mxu0 0.0
  %2585 = vmatpush1.msra.mxu0 0.0
  %2586 = vmatprep.subr.mxu0 0.0
  %2587 = vmatpush1.msra.mxu0 0.0
  %2588 = vmatprep.subr.mxu0 0.0
  %2589 = vmatpush1.msra.mxu0 0.0
  %2590 = vmatprep.subr.mxu0 0.0
  %2591 = vmatpush1.msra.mxu0 0.0
  %2592 = vmatprep.mubr.f32.mxu0 0.0
  %2593 = vmatmul.mubr.f32.gmra.mrb[0].mxu0 %v2526
  %v2594 = vpop.f32.mrb[0].mxu0
  %v2595 = vadd.f32 %v571, %v2594
  %v2596 = vpop.f32.mrb[0].mxu0
  %2597 = vdwg.mxu0
  %2598 = vst [vmem:[%s13 + $0x28] sm:$0xff] %v2595
  %v2599 = vsel %vm225, %v2308, 0
  %2601 = vmatprep.subr.mxu0 0.0
  %2602 = vmatpush1.msra.mxu0 %v44
  %2603 = vmatprep.subr.mxu0 0.0
  %2604 = vmatpush1.msra.mxu0 %v45
  %2605 = vmatprep.subr.mxu0 0.0
  %2606 = vmatpush1.msra.mxu0 %v46
  %2607 = vmatprep.subr.mxu0 0.0
  %2608 = vmatpush1.msra.mxu0 %v47
  %2609 = vmatprep.subr.mxu0 0.0
  %2610 = vmatpush1.msra.mxu0 0.0
  %2611 = vmatprep.subr.mxu0 0.0
  %2612 = vmatpush1.msra.mxu0 0.0
  %2613 = vmatprep.subr.mxu0 0.0
  %2614 = vmatpush1.msra.mxu0 0.0
  %2615 = vmatprep.subr.mxu0 0.0
  %2616 = vmatpush1.msra.mxu0 0.0
  %2617 = vmatprep.subr.mxu0 0.0
  %2618 = vmatpush1.msra.mxu0 0.0
  %2619 = vmatprep.subr.mxu0 0.0
  %2620 = vmatpush1.msra.mxu0 0.0
  %2621 = vmatprep.subr.mxu0 0.0
  %2622 = vmatpush1.msra.mxu0 0.0
  %2623 = vmatprep.subr.mxu0 0.0
  %2624 = vmatpush1.msra.mxu0 0.0
  %2625 = vmatprep.subr.mxu0 0.0
  %2626 = vmatpush1.msra.mxu0 0.0
  %2627 = vmatprep.subr.mxu0 0.0
  %2628 = vmatpush1.msra.mxu0 0.0
  %2629 = vmatprep.subr.mxu0 0.0
  %2630 = vmatpush1.msra.mxu0 0.0
  %2631 = vmatprep.subr.mxu0 0.0
  %2632 = vmatpush1.msra.mxu0 0.0
  %2633 = vmatprep.subr.mxu0 0.0
  %2634 = vmatpush1.msra.mxu0 0.0
  %2635 = vmatprep.subr.mxu0 0.0
  %2636 = vmatpush1.msra.mxu0 0.0
  %2637 = vmatprep.subr.mxu0 0.0
  %2638 = vmatpush1.msra.mxu0 0.0
  %2639 = vmatprep.subr.mxu0 0.0
  %2640 = vmatpush1.msra.mxu0 0.0
  %2641 = vmatprep.subr.mxu0 0.0
  %2642 = vmatpush1.msra.mxu0 0.0
  %2643 = vmatprep.subr.mxu0 0.0
  %2644 = vmatpush1.msra.mxu0 0.0
  %2645 = vmatprep.subr.mxu0 0.0
  %2646 = vmatpush1.msra.mxu0 0.0
  %2647 = vmatprep.subr.mxu0 0.0
  %2648 = vmatpush1.msra.mxu0 0.0
  %2649 = vmatprep.subr.mxu0 0.0
  %2650 = vmatpush1.msra.mxu0 0.0
  %2651 = vmatprep.subr.mxu0 0.0
  %2652 = vmatpush1.msra.mxu0 0.0
  %2653 = vmatprep.subr.mxu0 0.0
  %2654 = vmatpush1.msra.mxu0 0.0
  %2655 = vmatprep.subr.mxu0 0.0
  %2656 = vmatpush1.msra.mxu0 0.0
  %2657 = vmatprep.subr.mxu0 0.0
  %2658 = vmatpush1.msra.mxu0 0.0
  %2659 = vmatprep.subr.mxu0 0.0
  %2660 = vmatpush1.msra.mxu0 0.0
  %2661 = vmatprep.subr.mxu0 0.0
  %2662 = vmatpush1.msra.mxu0 0.0
  %2663 = vmatprep.subr.mxu0 0.0
  %2664 = vmatpush1.msra.mxu0 0.0
  %2665 = vmatprep.mubr.f32.mxu0 0.0
  %2666 = vmatmul.mubr.f32.gmra.mrb[0].mxu0 %v2599
  %v2667 = vpop.f32.mrb[0].mxu0
  %v2668 = vadd.f32 0.0, %v2667
  %v2669 = vpop.f32.mrb[0].mxu0
  %2670 = vdwg.mxu0
  %v2671 = vadd.f32 %v199, %v2668
  %v2672 = vxor.u32 %v2671, 2147483648
  %v2673 = vmul.f32 %v2672, 1.442695
  %v2674 = vpow.pop %v2673
  %v2675 = vadd.f32 %v2674, 1.0
  %v2676 = vrcp.pop %v2675
  %v2677 = vmul.f32 1.0, %v2676
  %v2678 = vtanh.pop %v2671
  %v2679 = vmul.f32 %v2677, %v2299
  %2681 = vrot.lane.b32.xlu0 %v2678, 64
  %v2682 = vpop.permute.xlu0 %2681
  %v2684 = vmul.f32 %v2677, %v2682
  %2686 = vrot.lane.b32.xlu0 %v2684, 32
  %v2687 = vpop.permute.xlu0 %2686
  %v2689 = vadd.f32 %v2679, %v2687
  %v2690 = vtanh.pop %v2689
  %2692 = vrot.lane.b32.xlu0 %v2690, 64
  %v2693 = vpop.permute.xlu0 %2692
  %v2695 = vmul.f32 %v2677, %v2693
  %2697 = vrot.lane.b32.xlu0 %v2695, 32
  %v2698 = vpop.permute.xlu0 %2697
  %2700 = vrot.lane.b32.xlu0 %v2410, 64
  %v2701 = vpop.permute.xlu0 %2700
  %v2703 = vsel %vm225, %v2698, %v2701
  %v2705 = vsel %vm343, %v2703, 0
  %2707 = vmatprep.subr.mxu0 0.0
  %2708 = vmatpush1.msra.mxu0 %v48
  %2709 = vmatprep.subr.mxu0 0.0
  %2710 = vmatpush1.msra.mxu0 %v49
  %2711 = vmatprep.subr.mxu0 0.0
  %2712 = vmatpush1.msra.mxu0 %v50
  %2713 = vmatprep.subr.mxu0 0.0
  %2714 = vmatpush1.msra.mxu0 %v51
  %2715 = vmatprep.subr.mxu0 0.0
  %2716 = vmatpush1.msra.mxu0 %v52
  %2717 = vmatprep.subr.mxu0 0.0
  %2718 = vmatpush1.msra.mxu0 %v53
  %2719 = vmatprep.subr.mxu0 0.0
  %2720 = vmatpush1.msra.mxu0 %v54
  %2721 = vmatprep.subr.mxu0 0.0
  %2722 = vmatpush1.msra.mxu0 %v55
  %2723 = vmatprep.subr.mxu0 0.0
  %2724 = vmatpush1.msra.mxu0 0.0
  %2725 = vmatprep.subr.mxu0 0.0
  %2726 = vmatpush1.msra.mxu0 0.0
  %2727 = vmatprep.subr.mxu0 0.0
  %2728 = vmatpush1.msra.mxu0 0.0
  %2729 = vmatprep.subr.mxu0 0.0
  %2730 = vmatpush1.msra.mxu0 0.0
  %2731 = vmatprep.subr.mxu0 0.0
  %2732 = vmatpush1.msra.mxu0 0.0
  %2733 = vmatprep.subr.mxu0 0.0
  %2734 = vmatpush1.msra.mxu0 0.0
  %2735 = vmatprep.subr.mxu0 0.0
  %2736 = vmatpush1.msra.mxu0 0.0
  %2737 = vmatprep.subr.mxu0 0.0
  %2738 = vmatpush1.msra.mxu0 0.0
  %2739 = vmatprep.subr.mxu0 0.0
  %2740 = vmatpush1.msra.mxu0 0.0
  %2741 = vmatprep.subr.mxu0 0.0
  %2742 = vmatpush1.msra.mxu0 0.0
  %2743 = vmatprep.subr.mxu0 0.0
  %2744 = vmatpush1.msra.mxu0 0.0
  %2745 = vmatprep.subr.mxu0 0.0
  %2746 = vmatpush1.msra.mxu0 0.0
  %2747 = vmatprep.subr.mxu0 0.0
  %2748 = vmatpush1.msra.mxu0 0.0
  %2749 = vmatprep.subr.mxu0 0.0
  %2750 = vmatpush1.msra.mxu0 0.0
  %2751 = vmatprep.subr.mxu0 0.0
  %2752 = vmatpush1.msra.mxu0 0.0
  %2753 = vmatprep.subr.mxu0 0.0
  %2754 = vmatpush1.msra.mxu0 0.0
  %2755 = vmatprep.subr.mxu0 0.0
  %2756 = vmatpush1.msra.mxu0 0.0
  %2757 = vmatprep.subr.mxu0 0.0
  %2758 = vmatpush1.msra.mxu0 0.0
  %2759 = vmatprep.subr.mxu0 0.0
  %2760 = vmatpush1.msra.mxu0 0.0
  %2761 = vmatprep.subr.mxu0 0.0
  %2762 = vmatpush1.msra.mxu0 0.0
  %2763 = vmatprep.subr.mxu0 0.0
  %2764 = vmatpush1.msra.mxu0 0.0
  %2765 = vmatprep.subr.mxu0 0.0
  %2766 = vmatpush1.msra.mxu0 0.0
  %2767 = vmatprep.subr.mxu0 0.0
  %2768 = vmatpush1.msra.mxu0 0.0
  %2769 = vmatprep.subr.mxu0 0.0
  %2770 = vmatpush1.msra.mxu0 0.0
  %2771 = vmatprep.mubr.f32.mxu0 0.0
  %2772 = vmatmul.mubr.f32.gmra.mrb[0].mxu0 %v2705
  %v2773 = vpop.f32.mrb[0].mxu0
  %v2774 = vadd.f32 %v341, %v2773
  %v2775 = vpop.f32.mrb[0].mxu0
  %2776 = vdwg.mxu0
  %v2777 = vxor.u32 %v2774, 2147483648
  %v2778 = vmul.f32 %v2777, 1.442695
  %v2779 = vpow.pop %v2778
  %v2780 = vadd.f32 %v2779, 1.0
  %v2781 = vrcp.pop %v2780
  %v2782 = vmul.f32 1.0, %v2781
  %v2783 = vtanh.pop %v2774
  %v2784 = vmul.f32 %v2782, %v2404
  %2786 = vrot.lane.b32.xlu0 %v2783, 64
  %v2787 = vpop.permute.xlu0 %2786
  %v2789 = vmul.f32 %v2782, %v2787
  %2791 = vrot.lane.b32.xlu0 %v2789, 32
  %v2792 = vpop.permute.xlu0 %2791
  %v2794 = vadd.f32 %v2784, %v2792
  %v2795 = vtanh.pop %v2794
  %2797 = vrot.lane.b32.xlu0 %v2795, 64
  %v2798 = vpop.permute.xlu0 %2797
  %v2800 = vmul.f32 %v2782, %v2798
  %2802 = vrot.lane.b32.xlu0 %v2800, 32
  %v2803 = vpop.permute.xlu0 %2802
  %2806 = vrot.lane.b32.xlu0 %v2516, 64
  %v2807 = vpop.permute.xlu0 %2806
  %v2809 = vsel %vm225, %v2803, %v2807
  %v2811 = vsel %vm343, %v2809, 0
  %2813 = vmatprep.subr.mxu0 0.0
  %2814 = vmatpush1.msra.mxu0 %v56
  %2815 = vmatprep.subr.mxu0 0.0
  %2816 = vmatpush1.msra.mxu0 %v57
  %2817 = vmatprep.subr.mxu0 0.0
  %2818 = vmatpush1.msra.mxu0 %v58
  %2819 = vmatprep.subr.mxu0 0.0
  %2820 = vmatpush1.msra.mxu0 %v59
  %2821 = vmatprep.subr.mxu0 0.0
  %2822 = vmatpush1.msra.mxu0 %v60
  %2823 = vmatprep.subr.mxu0 0.0
  %2824 = vmatpush1.msra.mxu0 %v61
  %2825 = vmatprep.subr.mxu0 0.0
  %2826 = vmatpush1.msra.mxu0 %v62
  %2827 = vmatprep.subr.mxu0 0.0
  %2828 = vmatpush1.msra.mxu0 %v63
  %2829 = vmatprep.subr.mxu0 0.0
  %2830 = vmatpush1.msra.mxu0 0.0
  %2831 = vmatprep.subr.mxu0 0.0
  %2832 = vmatpush1.msra.mxu0 0.0
  %2833 = vmatprep.subr.mxu0 0.0
  %2834 = vmatpush1.msra.mxu0 0.0
  %2835 = vmatprep.subr.mxu0 0.0
  %2836 = vmatpush1.msra.mxu0 0.0
  %2837 = vmatprep.subr.mxu0 0.0
  %2838 = vmatpush1.msra.mxu0 0.0
  %2839 = vmatprep.subr.mxu0 0.0
  %2840 = vmatpush1.msra.mxu0 0.0
  %2841 = vmatprep.subr.mxu0 0.0
  %2842 = vmatpush1.msra.mxu0 0.0
  %2843 = vmatprep.subr.mxu0 0.0
  %2844 = vmatpush1.msra.mxu0 0.0
  %2845 = vmatprep.subr.mxu0 0.0
  %2846 = vmatpush1.msra.mxu0 0.0
  %2847 = vmatprep.subr.mxu0 0.0
  %2848 = vmatpush1.msra.mxu0 0.0
  %2849 = vmatprep.subr.mxu0 0.0
  %2850 = vmatpush1.msra.mxu0 0.0
  %2851 = vmatprep.subr.mxu0 0.0
  %2852 = vmatpush1.msra.mxu0 0.0
  %2853 = vmatprep.subr.mxu0 0.0
  %2854 = vmatpush1.msra.mxu0 0.0
  %2855 = vmatprep.subr.mxu0 0.0
  %2856 = vmatpush1.msra.mxu0 0.0
  %2857 = vmatprep.subr.mxu0 0.0
  %2858 = vmatpush1.msra.mxu0 0.0
  %2859 = vmatprep.subr.mxu0 0.0
  %2860 = vmatpush1.msra.mxu0 0.0
  %2861 = vmatprep.subr.mxu0 0.0
  %2862 = vmatpush1.msra.mxu0 0.0
  %2863 = vmatprep.subr.mxu0 0.0
  %2864 = vmatpush1.msra.mxu0 0.0
  %2865 = vmatprep.subr.mxu0 0.0
  %2866 = vmatpush1.msra.mxu0 0.0
  %2867 = vmatprep.subr.mxu0 0.0
  %2868 = vmatpush1.msra.mxu0 0.0
  %2869 = vmatprep.subr.mxu0 0.0
  %2870 = vmatpush1.msra.mxu0 0.0
  %2871 = vmatprep.subr.mxu0 0.0
  %2872 = vmatpush1.msra.mxu0 0.0
  %2873 = vmatprep.subr.mxu0 0.0
  %2874 = vmatpush1.msra.mxu0 0.0
  %2875 = vmatprep.subr.mxu0 0.0
  %2876 = vmatpush1.msra.mxu0 0.0
  %2877 = vmatprep.mubr.f32.mxu0 0.0
  %2878 = vmatmul.mubr.f32.gmra.mrb[0].mxu0 %v2811
  %v2879 = vpop.f32.mrb[0].mxu0
  %v2880 = vadd.f32 %v458, %v2879
  %v2881 = vpop.f32.mrb[0].mxu0
  %2882 = vdwg.mxu0
  %v2883 = vxor.u32 %v2880, 2147483648
  %v2884 = vmul.f32 %v2883, 1.442695
  %v2885 = vpow.pop %v2884
  %v2886 = vadd.f32 %v2885, 1.0
  %v2887 = vrcp.pop %v2886
  %v2888 = vmul.f32 1.0, %v2887
  %v2889 = vtanh.pop %v2880
  %v2890 = vmul.f32 %v2888, %v2510
  %2892 = vrot.lane.b32.xlu0 %v2889, 64
  %v2893 = vpop.permute.xlu0 %2892
  %v2895 = vmul.f32 %v2888, %v2893
  %2897 = vrot.lane.b32.xlu0 %v2895, 32
  %v2898 = vpop.permute.xlu0 %2897
  %v2900 = vadd.f32 %v2890, %v2898
  %v2901 = vtanh.pop %v2900
  %2903 = vrot.lane.b32.xlu0 %v2901, 64
  %v2904 = vpop.permute.xlu0 %2903
  %v2906 = vmul.f32 %v2888, %v2904
  %2908 = vset.pattern.permute.xlu0 0
  %2909 = vperm.xlu0 %2908, %v223
  %v2910 = vpop.permute.xlu0 %2909
  %v2912 = vmul.f32 %v2906, %v2910
  %2914 = vrot.lane.b32.xlu0 %v2912, 32
  %v2915 = vpop.permute.xlu0 %2914
  %v2916 = vsel %vm225, %v2915, 0
  %2918 = vmatprep.subr.mxu0 0.0
  %2919 = vmatpush1.msra.mxu0 %v67
  %2920 = vmatprep.subr.mxu0 0.0
  %2921 = vmatpush1.msra.mxu0 %v68
  %2922 = vmatprep.subr.mxu0 0.0
  %2923 = vmatpush1.msra.mxu0 %v69
  %2924 = vmatprep.subr.mxu0 0.0
  %2925 = vmatpush1.msra.mxu0 %v70
  %2926 = vmatprep.subr.mxu0 0.0
  %2927 = vmatpush1.msra.mxu0 0.0
  %2928 = vmatprep.subr.mxu0 0.0
  %2929 = vmatpush1.msra.mxu0 0.0
  %2930 = vmatprep.subr.mxu0 0.0
  %2931 = vmatpush1.msra.mxu0 0.0
  %2932 = vmatprep.subr.mxu0 0.0
  %2933 = vmatpush1.msra.mxu0 0.0
  %2934 = vmatprep.subr.mxu0 0.0
  %2935 = vmatpush1.msra.mxu0 0.0
  %2936 = vmatprep.subr.mxu0 0.0
  %2937 = vmatpush1.msra.mxu0 0.0
  %2938 = vmatprep.subr.mxu0 0.0
  %2939 = vmatpush1.msra.mxu0 0.0
  %2940 = vmatprep.subr.mxu0 0.0
  %2941 = vmatpush1.msra.mxu0 0.0
  %2942 = vmatprep.subr.mxu0 0.0
  %2943 = vmatpush1.msra.mxu0 0.0
  %2944 = vmatprep.subr.mxu0 0.0
  %2945 = vmatpush1.msra.mxu0 0.0
  %2946 = vmatprep.subr.mxu0 0.0
  %2947 = vmatpush1.msra.mxu0 0.0
  %2948 = vmatprep.subr.mxu0 0.0
  %2949 = vmatpush1.msra.mxu0 0.0
  %2950 = vmatprep.subr.mxu0 0.0
  %2951 = vmatpush1.msra.mxu0 0.0
  %2952 = vmatprep.subr.mxu0 0.0
  %2953 = vmatpush1.msra.mxu0 0.0
  %2954 = vmatprep.subr.mxu0 0.0
  %2955 = vmatpush1.msra.mxu0 0.0
  %2956 = vmatprep.subr.mxu0 0.0
  %2957 = vmatpush1.msra.mxu0 0.0
  %2958 = vmatprep.subr.mxu0 0.0
  %2959 = vmatpush1.msra.mxu0 0.0
  %2960 = vmatprep.subr.mxu0 0.0
  %2961 = vmatpush1.msra.mxu0 0.0
  %2962 = vmatprep.subr.mxu0 0.0
  %2963 = vmatpush1.msra.mxu0 0.0
  %2964 = vmatprep.subr.mxu0 0.0
  %2965 = vmatpush1.msra.mxu0 0.0
  %2966 = vmatprep.subr.mxu0 0.0
  %2967 = vmatpush1.msra.mxu0 0.0
  %2968 = vmatprep.subr.mxu0 0.0
  %2969 = vmatpush1.msra.mxu0 0.0
  %2970 = vmatprep.subr.mxu0 0.0
  %2971 = vmatpush1.msra.mxu0 0.0
  %2972 = vmatprep.subr.mxu0 0.0
  %2973 = vmatpush1.msra.mxu0 0.0
  %2974 = vmatprep.subr.mxu0 0.0
  %2975 = vmatpush1.msra.mxu0 0.0
  %2976 = vmatprep.subr.mxu0 0.0
  %2977 = vmatpush1.msra.mxu0 0.0
  %2978 = vmatprep.subr.mxu0 0.0
  %2979 = vmatpush1.msra.mxu0 0.0
  %2980 = vmatprep.subr.mxu0 0.0
  %2981 = vmatpush1.msra.mxu0 0.0
  %2982 = vmatprep.mubr.f32.mxu0 0.0
  %2983 = vmatmul.mubr.f32.gmra.mrb[0].mxu0 %v2916
  %v2984 = vpop.f32.mrb[0].mxu0
  %v2985 = vadd.f32 %v571, %v2984
  %v2986 = vpop.f32.mrb[0].mxu0
  %2987 = vdwg.mxu0
  %2988 = vst [vmem:[%s13 + $0x30] sm:$0xff] %v2985
  %v2989 = vsel %vm225, %v2698, 0
  %2991 = vmatprep.subr.mxu0 0.0
  %2992 = vmatpush1.msra.mxu0 %v44
  %2993 = vmatprep.subr.mxu0 0.0
  %2994 = vmatpush1.msra.mxu0 %v45
  %2995 = vmatprep.subr.mxu0 0.0
  %2996 = vmatpush1.msra.mxu0 %v46
  %2997 = vmatprep.subr.mxu0 0.0
  %2998 = vmatpush1.msra.mxu0 %v47
  %2999 = vmatprep.subr.mxu0 0.0
  %3000 = vmatpush1.msra.mxu0 0.0
  %3001 = vmatprep.subr.mxu0 0.0
  %3002 = vmatpush1.msra.mxu0 0.0
  %3003 = vmatprep.subr.mxu0 0.0
  %3004 = vmatpush1.msra.mxu0 0.0
  %3005 = vmatprep.subr.mxu0 0.0
  %3006 = vmatpush1.msra.mxu0 0.0
  %3007 = vmatprep.subr.mxu0 0.0
  %3008 = vmatpush1.msra.mxu0 0.0
  %3009 = vmatprep.subr.mxu0 0.0
  %3010 = vmatpush1.msra.mxu0 0.0
  %3011 = vmatprep.subr.mxu0 0.0
  %3012 = vmatpush1.msra.mxu0 0.0
  %3013 = vmatprep.subr.mxu0 0.0
  %3014 = vmatpush1.msra.mxu0 0.0
  %3015 = vmatprep.subr.mxu0 0.0
  %3016 = vmatpush1.msra.mxu0 0.0
  %3017 = vmatprep.subr.mxu0 0.0
  %3018 = vmatpush1.msra.mxu0 0.0
  %3019 = vmatprep.subr.mxu0 0.0
  %3020 = vmatpush1.msra.mxu0 0.0
  %3021 = vmatprep.subr.mxu0 0.0
  %3022 = vmatpush1.msra.mxu0 0.0
  %3023 = vmatprep.subr.mxu0 0.0
  %3024 = vmatpush1.msra.mxu0 0.0
  %3025 = vmatprep.subr.mxu0 0.0
  %3026 = vmatpush1.msra.mxu0 0.0
  %3027 = vmatprep.subr.mxu0 0.0
  %3028 = vmatpush1.msra.mxu0 0.0
  %3029 = vmatprep.subr.mxu0 0.0
  %3030 = vmatpush1.msra.mxu0 0.0
  %3031 = vmatprep.subr.mxu0 0.0
  %3032 = vmatpush1.msra.mxu0 0.0
  %3033 = vmatprep.subr.mxu0 0.0
  %3034 = vmatpush1.msra.mxu0 0.0
  %3035 = vmatprep.subr.mxu0 0.0
  %3036 = vmatpush1.msra.mxu0 0.0
  %3037 = vmatprep.subr.mxu0 0.0
  %3038 = vmatpush1.msra.mxu0 0.0
  %3039 = vmatprep.subr.mxu0 0.0
  %3040 = vmatpush1.msra.mxu0 0.0
  %3041 = vmatprep.subr.mxu0 0.0
  %3042 = vmatpush1.msra.mxu0 0.0
  %3043 = vmatprep.subr.mxu0 0.0
  %3044 = vmatpush1.msra.mxu0 0.0
  %3045 = vmatprep.subr.mxu0 0.0
  %3046 = vmatpush1.msra.mxu0 0.0
  %3047 = vmatprep.subr.mxu0 0.0
  %3048 = vmatpush1.msra.mxu0 0.0
  %3049 = vmatprep.subr.mxu0 0.0
  %3050 = vmatpush1.msra.mxu0 0.0
  %3051 = vmatprep.subr.mxu0 0.0
  %3052 = vmatpush1.msra.mxu0 0.0
  %3053 = vmatprep.subr.mxu0 0.0
  %3054 = vmatpush1.msra.mxu0 0.0
  %3055 = vmatprep.mubr.f32.mxu0 0.0
  %3056 = vmatmul.mubr.f32.gmra.mrb[0].mxu0 %v2989
  %v3057 = vpop.f32.mrb[0].mxu0
  %v3058 = vadd.f32 0.0, %v3057
  %v3059 = vpop.f32.mrb[0].mxu0
  %3060 = vdwg.mxu0
  %v3061 = vadd.f32 %v204, %v3058
  %v3062 = vxor.u32 %v3061, 2147483648
  %v3063 = vmul.f32 %v3062, 1.442695
  %v3064 = vpow.pop %v3063
  %v3065 = vadd.f32 %v3064, 1.0
  %v3066 = vrcp.pop %v3065
  %v3067 = vmul.f32 1.0, %v3066
  %v3068 = vtanh.pop %v3061
  %v3069 = vmul.f32 %v3067, %v2689
  %3071 = vrot.lane.b32.xlu0 %v3068, 64
  %v3072 = vpop.permute.xlu0 %3071
  %v3074 = vmul.f32 %v3067, %v3072
  %3076 = vrot.lane.b32.xlu0 %v3074, 32
  %v3077 = vpop.permute.xlu0 %3076
  %v3079 = vadd.f32 %v3069, %v3077
  %v3080 = vtanh.pop %v3079
  %3082 = vrot.lane.b32.xlu0 %v3080, 64
  %v3083 = vpop.permute.xlu0 %3082
  %v3085 = vmul.f32 %v3067, %v3083
  %3087 = vrot.lane.b32.xlu0 %v3085, 32
  %v3088 = vpop.permute.xlu0 %3087
  %3090 = vrot.lane.b32.xlu0 %v2800, 64
  %v3091 = vpop.permute.xlu0 %3090
  %v3093 = vsel %vm225, %v3088, %v3091
  %v3095 = vsel %vm343, %v3093, 0
  %3097 = vmatprep.subr.mxu0 0.0
  %3098 = vmatpush1.msra.mxu0 %v48
  %3099 = vmatprep.subr.mxu0 0.0
  %3100 = vmatpush1.msra.mxu0 %v49
  %3101 = vmatprep.subr.mxu0 0.0
  %3102 = vmatpush1.msra.mxu0 %v50
  %3103 = vmatprep.subr.mxu0 0.0
  %3104 = vmatpush1.msra.mxu0 %v51
  %3105 = vmatprep.subr.mxu0 0.0
  %3106 = vmatpush1.msra.mxu0 %v52
  %3107 = vmatprep.subr.mxu0 0.0
  %3108 = vmatpush1.msra.mxu0 %v53
  %3109 = vmatprep.subr.mxu0 0.0
  %3110 = vmatpush1.msra.mxu0 %v54
  %3111 = vmatprep.subr.mxu0 0.0
  %3112 = vmatpush1.msra.mxu0 %v55
  %3113 = vmatprep.subr.mxu0 0.0
  %3114 = vmatpush1.msra.mxu0 0.0
  %3115 = vmatprep.subr.mxu0 0.0
  %3116 = vmatpush1.msra.mxu0 0.0
  %3117 = vmatprep.subr.mxu0 0.0
  %3118 = vmatpush1.msra.mxu0 0.0
  %3119 = vmatprep.subr.mxu0 0.0
  %3120 = vmatpush1.msra.mxu0 0.0
  %3121 = vmatprep.subr.mxu0 0.0
  %3122 = vmatpush1.msra.mxu0 0.0
  %3123 = vmatprep.subr.mxu0 0.0
  %3124 = vmatpush1.msra.mxu0 0.0
  %3125 = vmatprep.subr.mxu0 0.0
  %3126 = vmatpush1.msra.mxu0 0.0
  %3127 = vmatprep.subr.mxu0 0.0
  %3128 = vmatpush1.msra.mxu0 0.0
  %3129 = vmatprep.subr.mxu0 0.0
  %3130 = vmatpush1.msra.mxu0 0.0
  %3131 = vmatprep.subr.mxu0 0.0
  %3132 = vmatpush1.msra.mxu0 0.0
  %3133 = vmatprep.subr.mxu0 0.0
  %3134 = vmatpush1.msra.mxu0 0.0
  %3135 = vmatprep.subr.mxu0 0.0
  %3136 = vmatpush1.msra.mxu0 0.0
  %3137 = vmatprep.subr.mxu0 0.0
  %3138 = vmatpush1.msra.mxu0 0.0
  %3139 = vmatprep.subr.mxu0 0.0
  %3140 = vmatpush1.msra.mxu0 0.0
  %3141 = vmatprep.subr.mxu0 0.0
  %3142 = vmatpush1.msra.mxu0 0.0
  %3143 = vmatprep.subr.mxu0 0.0
  %3144 = vmatpush1.msra.mxu0 0.0
  %3145 = vmatprep.subr.mxu0 0.0
  %3146 = vmatpush1.msra.mxu0 0.0
  %3147 = vmatprep.subr.mxu0 0.0
  %3148 = vmatpush1.msra.mxu0 0.0
  %3149 = vmatprep.subr.mxu0 0.0
  %3150 = vmatpush1.msra.mxu0 0.0
  %3151 = vmatprep.subr.mxu0 0.0
  %3152 = vmatpush1.msra.mxu0 0.0
  %3153 = vmatprep.subr.mxu0 0.0
  %3154 = vmatpush1.msra.mxu0 0.0
  %3155 = vmatprep.subr.mxu0 0.0
  %3156 = vmatpush1.msra.mxu0 0.0
  %3157 = vmatprep.subr.mxu0 0.0
  %3158 = vmatpush1.msra.mxu0 0.0
  %3159 = vmatprep.subr.mxu0 0.0
  %3160 = vmatpush1.msra.mxu0 0.0
  %3161 = vmatprep.mubr.f32.mxu0 0.0
  %3162 = vmatmul.mubr.f32.gmra.mrb[0].mxu0 %v3095
  %v3163 = vpop.f32.mrb[0].mxu0
  %v3164 = vadd.f32 %v341, %v3163
  %v3165 = vpop.f32.mrb[0].mxu0
  %3166 = vdwg.mxu0
  %v3167 = vxor.u32 %v3164, 2147483648
  %v3168 = vmul.f32 %v3167, 1.442695
  %v3169 = vpow.pop %v3168
  %v3170 = vadd.f32 %v3169, 1.0
  %v3171 = vrcp.pop %v3170
  %v3172 = vmul.f32 1.0, %v3171
  %v3173 = vtanh.pop %v3164
  %v3174 = vmul.f32 %v3172, %v2794
  %3176 = vrot.lane.b32.xlu0 %v3173, 64
  %v3177 = vpop.permute.xlu0 %3176
  %v3179 = vmul.f32 %v3172, %v3177
  %3181 = vrot.lane.b32.xlu0 %v3179, 32
  %v3182 = vpop.permute.xlu0 %3181
  %v3184 = vadd.f32 %v3174, %v3182
  %v3185 = vtanh.pop %v3184
  %3187 = vrot.lane.b32.xlu0 %v3185, 64
  %v3188 = vpop.permute.xlu0 %3187
  %v3190 = vmul.f32 %v3172, %v3188
  %3192 = vrot.lane.b32.xlu0 %v3190, 32
  %v3193 = vpop.permute.xlu0 %3192
  %3196 = vrot.lane.b32.xlu0 %v2906, 64
  %v3197 = vpop.permute.xlu0 %3196
  %v3199 = vsel %vm225, %v3193, %v3197
  %v3201 = vsel %vm343, %v3199, 0
  %3203 = vmatprep.subr.mxu0 0.0
  %3204 = vmatpush1.msra.mxu0 %v56
  %3205 = vmatprep.subr.mxu0 0.0
  %3206 = vmatpush1.msra.mxu0 %v57
  %3207 = vmatprep.subr.mxu0 0.0
  %3208 = vmatpush1.msra.mxu0 %v58
  %3209 = vmatprep.subr.mxu0 0.0
  %3210 = vmatpush1.msra.mxu0 %v59
  %3211 = vmatprep.subr.mxu0 0.0
  %3212 = vmatpush1.msra.mxu0 %v60
  %3213 = vmatprep.subr.mxu0 0.0
  %3214 = vmatpush1.msra.mxu0 %v61
  %3215 = vmatprep.subr.mxu0 0.0
  %3216 = vmatpush1.msra.mxu0 %v62
  %3217 = vmatprep.subr.mxu0 0.0
  %3218 = vmatpush1.msra.mxu0 %v63
  %3219 = vmatprep.subr.mxu0 0.0
  %3220 = vmatpush1.msra.mxu0 0.0
  %3221 = vmatprep.subr.mxu0 0.0
  %3222 = vmatpush1.msra.mxu0 0.0
  %3223 = vmatprep.subr.mxu0 0.0
  %3224 = vmatpush1.msra.mxu0 0.0
  %3225 = vmatprep.subr.mxu0 0.0
  %3226 = vmatpush1.msra.mxu0 0.0
  %3227 = vmatprep.subr.mxu0 0.0
  %3228 = vmatpush1.msra.mxu0 0.0
  %3229 = vmatprep.subr.mxu0 0.0
  %3230 = vmatpush1.msra.mxu0 0.0
  %3231 = vmatprep.subr.mxu0 0.0
  %3232 = vmatpush1.msra.mxu0 0.0
  %3233 = vmatprep.subr.mxu0 0.0
  %3234 = vmatpush1.msra.mxu0 0.0
  %3235 = vmatprep.subr.mxu0 0.0
  %3236 = vmatpush1.msra.mxu0 0.0
  %3237 = vmatprep.subr.mxu0 0.0
  %3238 = vmatpush1.msra.mxu0 0.0
  %3239 = vmatprep.subr.mxu0 0.0
  %3240 = vmatpush1.msra.mxu0 0.0
  %3241 = vmatprep.subr.mxu0 0.0
  %3242 = vmatpush1.msra.mxu0 0.0
  %3243 = vmatprep.subr.mxu0 0.0
  %3244 = vmatpush1.msra.mxu0 0.0
  %3245 = vmatprep.subr.mxu0 0.0
  %3246 = vmatpush1.msra.mxu0 0.0
  %3247 = vmatprep.subr.mxu0 0.0
  %3248 = vmatpush1.msra.mxu0 0.0
  %3249 = vmatprep.subr.mxu0 0.0
  %3250 = vmatpush1.msra.mxu0 0.0
  %3251 = vmatprep.subr.mxu0 0.0
  %3252 = vmatpush1.msra.mxu0 0.0
  %3253 = vmatprep.subr.mxu0 0.0
  %3254 = vmatpush1.msra.mxu0 0.0
  %3255 = vmatprep.subr.mxu0 0.0
  %3256 = vmatpush1.msra.mxu0 0.0
  %3257 = vmatprep.subr.mxu0 0.0
  %3258 = vmatpush1.msra.mxu0 0.0
  %3259 = vmatprep.subr.mxu0 0.0
  %3260 = vmatpush1.msra.mxu0 0.0
  %3261 = vmatprep.subr.mxu0 0.0
  %3262 = vmatpush1.msra.mxu0 0.0
  %3263 = vmatprep.subr.mxu0 0.0
  %3264 = vmatpush1.msra.mxu0 0.0
  %3265 = vmatprep.subr.mxu0 0.0
  %3266 = vmatpush1.msra.mxu0 0.0
  %3267 = vmatprep.mubr.f32.mxu0 0.0
  %3268 = vmatmul.mubr.f32.gmra.mrb[0].mxu0 %v3201
  %v3269 = vpop.f32.mrb[0].mxu0
  %v3270 = vadd.f32 %v458, %v3269
  %v3271 = vpop.f32.mrb[0].mxu0
  %3272 = vdwg.mxu0
  %v3273 = vxor.u32 %v3270, 2147483648
  %v3274 = vmul.f32 %v3273, 1.442695
  %v3275 = vpow.pop %v3274
  %v3276 = vadd.f32 %v3275, 1.0
  %v3277 = vrcp.pop %v3276
  %v3278 = vmul.f32 1.0, %v3277
  %v3279 = vtanh.pop %v3270
  %v3280 = vmul.f32 %v3278, %v2900
  %3282 = vrot.lane.b32.xlu0 %v3279, 64
  %v3283 = vpop.permute.xlu0 %3282
  %v3285 = vmul.f32 %v3278, %v3283
  %3287 = vrot.lane.b32.xlu0 %v3285, 32
  %v3288 = vpop.permute.xlu0 %3287
  %v3290 = vadd.f32 %v3280, %v3288
  %v3291 = vtanh.pop %v3290
  %3293 = vrot.lane.b32.xlu0 %v3291, 64
  %v3294 = vpop.permute.xlu0 %3293
  %v3296 = vmul.f32 %v3278, %v3294
  %3298 = vset.pattern.permute.xlu0 0
  %3299 = vperm.xlu0 %3298, %v224
  %v3300 = vpop.permute.xlu0 %3299
  %v3302 = vmul.f32 %v3296, %v3300
  %3304 = vrot.lane.b32.xlu0 %v3302, 32
  %v3305 = vpop.permute.xlu0 %3304
  %v3306 = vsel %vm225, %v3305, 0
  %3308 = vmatprep.subr.mxu0 0.0
  %3309 = vmatpush1.msra.mxu0 %v67
  %3310 = vmatprep.subr.mxu0 0.0
  %3311 = vmatpush1.msra.mxu0 %v68
  %3312 = vmatprep.subr.mxu0 0.0
  %3313 = vmatpush1.msra.mxu0 %v69
  %3314 = vmatprep.subr.mxu0 0.0
  %3315 = vmatpush1.msra.mxu0 %v70
  %3316 = vmatprep.subr.mxu0 0.0
  %3317 = vmatpush1.msra.mxu0 0.0
  %3318 = vmatprep.subr.mxu0 0.0
  %3319 = vmatpush1.msra.mxu0 0.0
  %3320 = vmatprep.subr.mxu0 0.0
  %3321 = vmatpush1.msra.mxu0 0.0
  %3322 = vmatprep.subr.mxu0 0.0
  %3323 = vmatpush1.msra.mxu0 0.0
  %3324 = vmatprep.subr.mxu0 0.0
  %3325 = vmatpush1.msra.mxu0 0.0
  %3326 = vmatprep.subr.mxu0 0.0
  %3327 = vmatpush1.msra.mxu0 0.0
  %3328 = vmatprep.subr.mxu0 0.0
  %3329 = vmatpush1.msra.mxu0 0.0
  %3330 = vmatprep.subr.mxu0 0.0
  %3331 = vmatpush1.msra.mxu0 0.0
  %3332 = vmatprep.subr.mxu0 0.0
  %3333 = vmatpush1.msra.mxu0 0.0
  %3334 = vmatprep.subr.mxu0 0.0
  %3335 = vmatpush1.msra.mxu0 0.0
  %3336 = vmatprep.subr.mxu0 0.0
  %3337 = vmatpush1.msra.mxu0 0.0
  %3338 = vmatprep.subr.mxu0 0.0
  %3339 = vmatpush1.msra.mxu0 0.0
  %3340 = vmatprep.subr.mxu0 0.0
  %3341 = vmatpush1.msra.mxu0 0.0
  %3342 = vmatprep.subr.mxu0 0.0
  %3343 = vmatpush1.msra.mxu0 0.0
  %3344 = vmatprep.subr.mxu0 0.0
  %3345 = vmatpush1.msra.mxu0 0.0
  %3346 = vmatprep.subr.mxu0 0.0
  %3347 = vmatpush1.msra.mxu0 0.0
  %3348 = vmatprep.subr.mxu0 0.0
  %3349 = vmatpush1.msra.mxu0 0.0
  %3350 = vmatprep.subr.mxu0 0.0
  %3351 = vmatpush1.msra.mxu0 0.0
  %3352 = vmatprep.subr.mxu0 0.0
  %3353 = vmatpush1.msra.mxu0 0.0
  %3354 = vmatprep.subr.mxu0 0.0
  %3355 = vmatpush1.msra.mxu0 0.0
  %3356 = vmatprep.subr.mxu0 0.0
  %3357 = vmatpush1.msra.mxu0 0.0
  %3358 = vmatprep.subr.mxu0 0.0
  %3359 = vmatpush1.msra.mxu0 0.0
  %3360 = vmatprep.subr.mxu0 0.0
  %3361 = vmatpush1.msra.mxu0 0.0
  %3362 = vmatprep.subr.mxu0 0.0
  %3363 = vmatpush1.msra.mxu0 0.0
  %3364 = vmatprep.subr.mxu0 0.0
  %3365 = vmatpush1.msra.mxu0 0.0
  %3366 = vmatprep.subr.mxu0 0.0
  %3367 = vmatpush1.msra.mxu0 0.0
  %3368 = vmatprep.subr.mxu0 0.0
  %3369 = vmatpush1.msra.mxu0 0.0
  %3370 = vmatprep.subr.mxu0 0.0
  %3371 = vmatpush1.msra.mxu0 0.0
  %3372 = vmatprep.mubr.f32.mxu0 0.0
  %3373 = vmatmul.mubr.f32.gmra.mrb[0].mxu0 %v3306
  %v3374 = vpop.f32.mrb[0].mxu0
  %v3375 = vadd.f32 %v571, %v3374
  %v3376 = vpop.f32.mrb[0].mxu0
  %3377 = vdwg.mxu0
  %3378 = vst [vmem:[%s13 + $0x38] sm:$0xff] %v3375
  // Predicated region
  $region54: #{baseline_forward.1} parent=0 // pred_check
    _
  $region55: #{baseline_forward.1} parent=0 // pred_check_branch
    %3380 = sbr.rel (0) target = $region57
  $region56: #{baseline_forward.1} parent=0 // pred_region
    _
  $region57: #{baseline_forward.1} parent=0 // pred_fallthru
    _
  // Predicated region
  $region58: #{baseline_forward.1} parent=0 // pred_check
    _
  $region59: #{baseline_forward.1} parent=0 // pred_check_branch
    %3382 = sbr.rel (0) target = $region61
  $region60: #{baseline_forward.1} parent=0 // pred_region
    _
  $region61: #{baseline_forward.1} parent=0 // pred_fallthru
    _

</llo_original>
